<compile_context>
chip_gen: v5e
topology: v5e:2x2
jax: 0.10.0
libtpu: 0.0.40
codegen_flags: <defaults>
</compile_context>

<pallas_src>
import functools

import jax
import jax.numpy as jnp
from jax.experimental import pallas as pl
from jax.experimental.pallas import tpu as pltpu


MXU_DTYPE = jnp.bfloat16   # MXU operand dtype everywhere (f32 accumulation).

# (cin, cout, kernel, stride) for conv1..conv5 -- fixed by the architecture.
_CONVS = [(3, 24, 5, 2), (24, 36, 5, 2), (36, 48, 5, 2),
          (48, 64, 3, 1), (64, 64, 3, 1)]


# ---------------------------------------------------------------------------
# Pallas kernels
# ---------------------------------------------------------------------------
def _matmul_bias_relu_kernel(x_ref, w_ref, b_ref, o_ref):
    # One (tm, K) @ (K, Cout) row tile: bf16 MXU matmul with f32 accumulation,
    # f32 bias + ReLU on the VPU, store in o_ref.dtype.
    acc = jnp.dot(x_ref[...], w_ref[...], preferred_element_type=jnp.float32)
    o_ref[...] = jnp.maximum(acc + b_ref[...], 0.0).astype(o_ref.dtype)


def _head_kernel(x_ref, w4_ref, b4_ref, w5_ref, b5_ref,
                 l1w_ref, l1b_ref, l2w_ref, l2b_ref,
                 l3w_ref, l3b_ref, l4w_ref, l4b_ref, o_ref,
                 *, h4s, w4s, h5s, w5s, k5):
    """conv4 -> relu -> conv5 -> relu -> flatten -> lin1..lin4 (+tanh).

    x_ref: (tb, H4*W4, 3*3*C3) conv4 im2col patches (bf16).  Every step is a
    plain 2-D matmul on integer-indexed slabs of VMEM-resident blocks: no
    in-kernel reshapes, transposes or lane concatenations, so it lowers
    robustly while keeping every intermediate out of HBM.
    """
    f32 = jnp.float32
    cdt = x_ref.dtype

    # conv4: one small matmul per output position; results stay in vregs/VMEM.
    w4 = w4_ref[...]
    b4 = b4_ref[...]
    h4 = []
    for p in range(h4s * w4s):
        a = jnp.dot(x_ref[:, p, :], w4, preferred_element_type=f32) + b4
        h4.append(jnp.maximum(a, 0.0).astype(cdt))

    # conv5 as per-tap (C4 x C5) matmuls, chained directly into lin1: the
    # PyTorch NCHW flatten(1) is folded into per-conv5-position (C5, 100)
    # weight blocks prepared at init, so no flatten/transpose is materialized.
    b5 = b5_ref[...]
    acc1 = l1b_ref[...]                                     # broadcasts up
    for q in range(h5s * w5s):
        oh, ow = q // w5s, q % w5s
        a5 = b5
        for ki in range(k5):
            for kj in range(k5):
                p = (oh + ki) * w4s + (ow + kj)
                a5 = a5 + jnp.dot(h4[p], w5_ref[ki * k5 + kj],
                                  preferred_element_type=f32)
        h5 = jnp.maximum(a5, 0.0).astype(cdt)
        acc1 = acc1 + jnp.dot(h5, l1w_ref[q], preferred_element_type=f32)

    h = jnp.maximum(acc1, 0.0).astype(cdt)
    h = jnp.maximum(jnp.dot(h, l2w_ref[...], preferred_element_type=f32)
                    + l2b_ref[...], 0.0).astype(cdt)
    h = jnp.maximum(jnp.dot(h, l3w_ref[...], preferred_element_type=f32)
                    + l3b_ref[...], 0.0).astype(cdt)
    out = jnp.tanh(jnp.dot(h, l4w_ref[...], preferred_element_type=f32)
                   + l4b_ref[...])
    o_ref[...] = out.astype(o_ref.dtype)


# ---------------------------------------------------------------------------
# Pallas wrappers
# ---------------------------------------------------------------------------
def _pick_tile_m(m, max_tm, mult):
    """Row tile: multiple of `mult` (16 for bf16 sublane packing), capped, and
    giving >= 2 grid steps whenever m > mult so the ("parallel",) grid can be
    sharded across v7x's two TensorCores."""
    if m <= mult:
        return m
    half = -(-m // 2)                    # ceil(m / 2)
    tm = -(-half // mult) * mult         # round up to a multiple of `mult`
    return min(tm, max_tm)


def matmul_bias_relu(x, w, b_row):
    """Row-tiled (M, K) @ (K, N) + bias -> ReLU.  Weights stay VMEM-resident
    across grid steps; row tiles are sharded across TensorCores on v7x."""
    m, k = x.shape
    n = w.shape[1]
    tm = _pick_tile_m(m, max_tm=512, mult=16)
    grid_m = pl.cdiv(m, tm)

    itm = x.dtype.itemsize
    block_bytes = (2 * (tm * k + tm * n) * itm            # double-buffered x/out
                   + k * n * w.dtype.itemsize + 4 * n)     # resident w / bias
    vmem_limit = int(min(96 << 20, max(4 << 20, 2 * block_bytes + (2 << 20))))

    return pl.pallas_call(
        _matmul_bias_relu_kernel,
        out_shape=jax.ShapeDtypeStruct((m, n), x.dtype),
        grid=(grid_m,),
        in_specs=[
            pl.BlockSpec((tm, k), lambda i: (i, 0)),
            pl.BlockSpec((k, n), lambda i: (0, 0)),    # weight resident over i
            pl.BlockSpec((1, n), lambda i: (0, 0)),
        ],
        out_specs=pl.BlockSpec((tm, n), lambda i: (i, 0)),
        compiler_params=pltpu.CompilerParams(
            dimension_semantics=("parallel",),
            vmem_limit_bytes=vmem_limit),
    )(x, w, b_row)


def fused_head(x, hp, spatial, k5=3):
    """conv4 + conv5 + lin1..lin4 in one pallas_call, tiled over the batch."""
    n, p4, k4 = x.shape
    h4s, w4s, h5s, w5s = spatial
    assert p4 == h4s * w4s

    tb = _pick_tile_m(n, max_tm=128, mult=8)
    grid = (pl.cdiv(n, tb),)

    operands = (x, hp["w4"], hp["b4"], hp["w5"], hp["b5"],
                hp["l1w"], hp["l1b"], hp["l2w"], hp["l2b"],
                hp["l3w"], hp["l3b"], hp["l4w"], hp["l4b"])

    def _resident(arr):
        nd = arr.ndim
        return pl.BlockSpec(arr.shape, lambda i, _nd=nd: (0,) * _nd)

    in_specs = ([pl.BlockSpec((tb, p4, k4), lambda i: (i, 0, 0))]
                + [_resident(op) for op in operands[1:]])

    weight_bytes = sum(int(op.size) * op.dtype.itemsize for op in operands[1:])
    block_bytes = 2 * (tb * p4 * k4 * x.dtype.itemsize + tb * 4)
    vmem_limit = int(min(96 << 20,
                         max(4 << 20, 2 * weight_bytes + block_bytes + (2 << 20))))

    kern = functools.partial(_head_kernel, h4s=h4s, w4s=w4s,
                             h5s=h5s, w5s=w5s, k5=k5)
    return pl.pallas_call(
        kern,
        out_shape=jax.ShapeDtypeStruct((n, 1), jnp.float32),
        grid=grid,
        in_specs=in_specs,
        out_specs=pl.BlockSpec((tb, 1), lambda i: (i, 0)),
        compiler_params=pltpu.CompilerParams(
            dimension_semantics=("parallel",),
            vmem_limit_bytes=vmem_limit),
    )(*operands)


# ---------------------------------------------------------------------------
# XLA glue: im2col strided slices, BN fold, weight relayouts (no heavy compute)
# ---------------------------------------------------------------------------
def _im2col(x_nhwc, k, stride):
    # (N,H,W,C) -> (N,Ho,Wo,K*K*C) patches; feature order (ki, kj, c) matches
    # the matmul-form conv weights.  Kept as cheap XLA strided-slice glue
    # (allow_input_fusion / in-kernel taps intentionally skipped, see header).
    n, h, w, c = x_nhwc.shape
    ho = (h - k) // stride + 1
    wo = (w - k) // stride + 1
    cols = [x_nhwc[:, ki:ki + stride * ho:stride, kj:kj + stride * wo:stride, :]
            for ki in range(k) for kj in range(k)]
    return jnp.concatenate(cols, axis=-1), ho, wo


def conv2d_relu(x_nhwc, wm, b_row, k, stride):
    # VALID-padding conv as an im2col matmul with fused bias + ReLU in Pallas.
    n, _, _, cin = x_nhwc.shape
    patches, ho, wo = _im2col(x_nhwc.astype(MXU_DTYPE), k, stride)
    pm = patches.reshape(n * ho * wo, k * k * cin)
    out = matmul_bias_relu(pm, wm, b_row)
    return out.reshape(n, ho, wo, wm.shape[1])


def _conv_w_to_matmul(w_oikk):
    cout, cin, k, _ = w_oikk.shape
    return jnp.transpose(w_oikk, (2, 3, 1, 0)).reshape(k * k * cin, cout)


def _fold_bn_into_conv1(x_nhwc, w_oikk, b, gamma, beta, eps=1e-3):
    # BatchNorm2d(track_running_stats=False) normalizes with the current batch
    # statistics (biased variance).  BN is a per-channel affine and conv1 is
    # linear, so it folds exactly into conv1's weight/bias; only the 3-channel
    # mean/var reduction runs outside Pallas.
    x32 = x_nhwc.astype(jnp.float32)
    mean = jnp.mean(x32, axis=(0, 1, 2))
    var = jnp.mean(jnp.square(x32 - mean), axis=(0, 1, 2))
    scale = gamma * jax.lax.rsqrt(var + eps)                     # (Cin,)
    shift = beta - mean * scale                                  # (Cin,)
    w_eff = w_oikk * scale[None, :, None, None]
    b_eff = b + jnp.einsum("ocij,c->o", w_oikk, shift)
    return w_eff, b_eff


# ---------------------------------------------------------------------------
# Parameters (deterministic xavier-uniform, zero biases) + one-time prep
# ---------------------------------------------------------------------------
def _conv_out(n, k, s):
    return (n - k) // s + 1


def _spatial_dims(input_shape):
    h, w = input_shape
    dims = []
    for _, _, k, s in _CONVS:
        h, w = _conv_out(h, k, s), _conv_out(w, k, s)
        assert h >= 1 and w >= 1, "input too small for the DAVE2v1 conv stack"
        dims.append((h, w))
    return dims


def _xavier(key, shape, fan_in, fan_out):
    limit = jnp.sqrt(6.0 / (fan_in + fan_out))
    return jax.random.uniform(key, shape, jnp.float32, -limit, limit)


def init_params(key, input_shape=(64, 64)):
    """Raw parameters in PyTorch layouts."""
    dims = _spatial_dims(input_shape)
    flat = _CONVS[-1][1] * dims[-1][0] * dims[-1][1]
    lins = [(flat, 100), (100, 50), (50, 10), (10, 1)]
    keys = jax.random.split(key, len(_CONVS) + len(lins))

    params = {"bn_gamma": jnp.ones((3,), jnp.float32),
              "bn_beta": jnp.zeros((3,), jnp.float32)}
    for i, (cin, cout, k, _) in enumerate(_CONVS):
        params[f"conv{i + 1}_w"] = _xavier(keys[i], (cout, cin, k, k),
                                           cin * k * k, cout * k * k)
        params[f"conv{i + 1}_b"] = jnp.zeros((cout,), jnp.float32)
    for i, (fin, fout) in enumerate(lins):
        params[f"lin{i + 1}_w"] = _xavier(keys[len(_CONVS) + i], (fin, fout),
                                          fin, fout)             # (in, out)
        params[f"lin{i + 1}_b"] = jnp.zeros((fout,), jnp.float32)
    return params


def prepare_params(params, input_shape=(64, 64)):
    """One-time (hoisted) relayout/cast of every batch-independent weight.

    conv2/conv3 -> (K*K*Cin, Cout) bf16 matmul weights; conv4/conv5/lin1..lin4
    packed for the fused head (conv5 as per-tap (C4,C5) blocks, lin1 regrouped
    from NCHW-flatten row order into per-conv5-position blocks); biases as
    (1, n) f32 rows.  conv1 stays raw: its BN fold depends on batch statistics.
    """
    dims = _spatial_dims(input_shape)
    h5s, w5s = dims[-1]
    p5 = h5s * w5s

    prep = {"bn_gamma": params["bn_gamma"], "bn_beta": params["bn_beta"],
            "conv1_w": params["conv1_w"], "conv1_b": params["conv1_b"]}
    for i in (2, 3):
        prep[f"conv{i}_wm"] = _conv_w_to_matmul(
            params[f"conv{i}_w"]).astype(MXU_DTYPE)
        prep[f"conv{i}_b"] = params[f"conv{i}_b"].reshape(1, -1)

    c5o, c4i, k5, _ = params["conv5_w"].shape
    nf1 = params["lin1_w"].shape[1]
    prep["head"] = {
        "w4": _conv_w_to_matmul(params["conv4_w"]).astype(MXU_DTYPE),
        "b4": params["conv4_b"].reshape(1, -1),
        "w5": jnp.transpose(params["conv5_w"], (2, 3, 1, 0))
                 .reshape(k5 * k5, c4i, c5o).astype(MXU_DTYPE),
        "b5": params["conv5_b"].reshape(1, -1),
        # lin1 rows are NCHW-flat (c * P5 + q) -> regroup to (P5, C5, 100).
        "l1w": jnp.transpose(params["lin1_w"].reshape(c5o, p5, nf1),
                             (1, 0, 2)).astype(MXU_DTYPE),
        "l1b": params["lin1_b"].reshape(1, -1),
        "l2w": params["lin2_w"].astype(MXU_DTYPE),
        "l2b": params["lin2_b"].reshape(1, -1),
        "l3w": params["lin3_w"].astype(MXU_DTYPE),
        "l3b": params["lin3_b"].reshape(1, -1),
        "l4w": params["lin4_w"].astype(MXU_DTYPE),
        "l4b": params["lin4_b"].reshape(1, -1),
    }
    return prep


# ---------------------------------------------------------------------------
# Forward pass
# ---------------------------------------------------------------------------
def dave2v1_forward(params, x_nchw):
    n = x_nchw.shape[0]
    x = jnp.transpose(x_nchw, (0, 2, 3, 1))                     # NCHW -> NHWC

    # BN(batch statistics) folded exactly into conv1 (eps=1e-3 as in the spec).
    w1, b1 = _fold_bn_into_conv1(x, params["conv1_w"], params["conv1_b"],
                                 params["bn_gamma"], params["bn_beta"],
                                 eps=1e-3)
    w1m = _conv_w_to_matmul(w1).astype(MXU_DTYPE)

    h = conv2d_relu(x, w1m, b1.reshape(1, -1), k=5, stride=2)
    h = conv2d_relu(h, params["conv2_wm"], params["conv2_b"], k=5, stride=2)
    h = conv2d_relu(h, params["conv3_wm"], params["conv3_b"], k=5, stride=2)

    # conv4 patches (a few KB per image) feed the fused conv4+conv5+lin1..lin4
    # head; conv4/conv5 activations, the conv5 im2col and the NCHW flatten
    # never leave VMEM.
    patches, h4s, w4s = _im2col(h, 3, 1)
    head_in = patches.reshape(n, h4s * w4s, patches.shape[-1])
    h5s, w5s = h4s - 2, w4s - 2
    assert params["head"]["l1w"].shape[0] == h5s * w5s, (
        "prepare_params() input_shape does not match the image size")
    return fused_head(head_in, params["head"], (h4s, w4s, h5s, w5s), k5=3)


if __name__ == "__main__":
    INPUT_SHAPE = (64, 64)   # small but valid for the 5-conv stack (min ~61)
    BATCH = 2

    key = jax.random.PRNGKey(0)
    pkey, xkey = jax.random.split(key)
    params = prepare_params(init_params(pkey, INPUT_SHAPE), INPUT_SHAPE)
    x = jax.random.normal(xkey, (BATCH, 3) + INPUT_SHAPE, jnp.float32)  # NCHW

    out = jax.jit(dave2v1_forward)(params, x)
    out = jax.block_until_ready(out)

    assert out.shape == (BATCH, 1), out.shape
    assert out.dtype == jnp.float32
    assert bool(jnp.all(jnp.isfinite(out)))
    assert bool(jnp.all(jnp.abs(out) <= 1.0))    # tanh range
    print("KERNEL_OK")
</pallas_src>

<mosaic_0001>
module attributes {stable_mosaic.version = 11 : i64} {
  func.func @_matmul_bias_relu_kernel(%arg0: i32, %arg1: memref<512x75xbf16, #tpu.memory_space<vmem>>, %arg2: memref<75x24xbf16, #tpu.memory_space<vmem>>, %arg3: memref<1x24xf32, #tpu.memory_space<vmem>>, %arg4: memref<512x24xbf16, #tpu.memory_space<vmem>>) attributes {dimension_semantics = [#tpu.dimension_semantics<parallel>], iteration_bounds = array<i64: 4>, scalar_prefetch = 0 : i64, scratch_operands = 0 : i64, tpu.core_type = #tpu.core_type<tc>, window_params = [{transform_indices = @transform_0, window_bounds = array<i64: 512, 75>}, {pipeline_mode = #tpu.pipeline_mode<synchronous>, transform_indices = @transform_1, window_bounds = array<i64: 75, 24>}, {pipeline_mode = #tpu.pipeline_mode<synchronous>, transform_indices = @transform_2, window_bounds = array<i64: 1, 24>}, {transform_indices = @transform_3, window_bounds = array<i64: 512, 24>}]} {
    %c0 = arith.constant 0 : index
    %c0_0 = arith.constant 0 : index
    %0 = vector.load %arg1[%c0, %c0_0] : memref<512x75xbf16, #tpu.memory_space<vmem>>, vector<512x75xbf16>
    %c0_1 = arith.constant 0 : index
    %c0_2 = arith.constant 0 : index
    %1 = vector.load %arg2[%c0_1, %c0_2] : memref<75x24xbf16, #tpu.memory_space<vmem>>, vector<75x24xbf16>
    %cst = arith.constant dense<0.000000e+00> : vector<512x24xf32>
    %2 = tpu.matmul %0, %1, %cst {dimension_numbers = #tpu.dot_dimension_numbers<[1], [0], [0], [1], [0, 0, 1, 1], [], []>} : vector<512x75xbf16>, vector<75x24xbf16>, vector<512x24xf32> -> vector<512x24xf32>
    %c0_3 = arith.constant 0 : index
    %c0_4 = arith.constant 0 : index
    %3 = vector.load %arg3[%c0_3, %c0_4] : memref<1x24xf32, #tpu.memory_space<vmem>>, vector<1x24xf32>
    %4 = vector.broadcast %3 : vector<1x24xf32> to vector<512x24xf32>
    %5 = arith.addf %2, %4 : vector<512x24xf32>
    %cst_5 = arith.constant 0.000000e+00 : f32
    %6 = vector.broadcast %cst_5 : f32 to vector<512x24xf32>
    %7 = arith.maximumf %5, %6 : vector<512x24xf32>
    %8 = arith.truncf %7 : vector<512x24xf32> to vector<512x24xbf16>
    %c0_6 = arith.constant 0 : index
    %c0_7 = arith.constant 0 : index
    %9 = vector.load %arg4[%c0_6, %c0_7] : memref<512x24xbf16, #tpu.memory_space<vmem>>, vector<512x24xbf16>
    tpu.vector_store %arg4[%c0_6, %c0_7], %8 {strides = array<i32>} : memref<512x24xbf16, #tpu.memory_space<vmem>>, vector<512x24xbf16>,
    return
  }
  func.func @transform_0(%arg0: i32) -> (i32, i32) {
    %c0_i32 = arith.constant 0 : i32
    %c0_i32_0 = arith.constant 0 : i32
    return %arg0, %c0_i32 : i32, i32
  }
  func.func @transform_1(%arg0: i32) -> (i32, i32) {
    %c0_i32 = arith.constant 0 : i32
    %c0_i32_0 = arith.constant 0 : i32
    %c0_i32_1 = arith.constant 0 : i32
    return %c0_i32, %c0_i32_0 : i32, i32
  }
  func.func @transform_2(%arg0: i32) -> (i32, i32) {
    %c0_i32 = arith.constant 0 : i32
    %c0_i32_0 = arith.constant 0 : i32
    %c0_i32_1 = arith.constant 0 : i32
    return %c0_i32, %c0_i32_0 : i32, i32
  }
  func.func @transform_3(%arg0: i32) -> (i32, i32) {
    %c0_i32 = arith.constant 0 : i32
    %c0_i32_0 = arith.constant 0 : i32
    return %arg0, %c0_i32 : i32, i32
  }
}

module attributes {stable_mosaic.version = 11 : i64} {
  func.func @_matmul_bias_relu_kernel(%arg0: i32, %arg1: memref<176x600xbf16, #tpu.memory_space<vmem>>, %arg2: memref<600x36xbf16, #tpu.memory_space<vmem>>, %arg3: memref<1x36xf32, #tpu.memory_space<vmem>>, %arg4: memref<176x36xbf16, #tpu.memory_space<vmem>>) attributes {dimension_semantics = [#tpu.dimension_semantics<parallel>], iteration_bounds = array<i64: 2>, scalar_prefetch = 0 : i64, scratch_operands = 0 : i64, tpu.core_type = #tpu.core_type<tc>, window_params = [{transform_indices = @transform_0, window_bounds = array<i64: 176, 600>}, {pipeline_mode = #tpu.pipeline_mode<synchronous>, transform_indices = @transform_1, window_bounds = array<i64: 600, 36>}, {pipeline_mode = #tpu.pipeline_mode<synchronous>, transform_indices = @transform_2, window_bounds = array<i64: 1, 36>}, {transform_indices = @transform_3, window_bounds = array<i64: 176, 36>}]} {
    %c0 = arith.constant 0 : index
    %c0_0 = arith.constant 0 : index
    %0 = vector.load %arg1[%c0, %c0_0] : memref<176x600xbf16, #tpu.memory_space<vmem>>, vector<176x600xbf16>
    %c0_1 = arith.constant 0 : index
    %c0_2 = arith.constant 0 : index
    %1 = vector.load %arg2[%c0_1, %c0_2] : memref<600x36xbf16, #tpu.memory_space<vmem>>, vector<600x36xbf16>
    %cst = arith.constant dense<0.000000e+00> : vector<176x36xf32>
    %2 = tpu.matmul %0, %1, %cst {dimension_numbers = #tpu.dot_dimension_numbers<[1], [0], [0], [1], [0, 0, 1, 1], [], []>} : vector<176x600xbf16>, vector<600x36xbf16>, vector<176x36xf32> -> vector<176x36xf32>
    %c0_3 = arith.constant 0 : index
    %c0_4 = arith.constant 0 : index
    %3 = vector.load %arg3[%c0_3, %c0_4] : memref<1x36xf32, #tpu.memory_space<vmem>>, vector<1x36xf32>
    %4 = vector.broadcast %3 : vector<1x36xf32> to vector<176x36xf32>
    %5 = arith.addf %2, %4 : vector<176x36xf32>
    %cst_5 = arith.constant 0.000000e+00 : f32
    %6 = vector.broadcast %cst_5 : f32 to vector<176x36xf32>
    %7 = arith.maximumf %5, %6 : vector<176x36xf32>
    %8 = arith.truncf %7 : vector<176x36xf32> to vector<176x36xbf16>
    %c0_6 = arith.constant 0 : index
    %c0_7 = arith.constant 0 : index
    %9 = vector.load %arg4[%c0_6, %c0_7] : memref<176x36xbf16, #tpu.memory_space<vmem>>, vector<176x36xbf16>
    tpu.vector_store %arg4[%c0_6, %c0_7], %8 {strides = array<i32>} : memref<176x36xbf16, #tpu.memory_space<vmem>>, vector<176x36xbf16>,
    return
  }
  func.func @transform_0(%arg0: i32) -> (i32, i32) {
    %c0_i32 = arith.constant 0 : i32
    %c0_i32_0 = arith.constant 0 : i32
    return %arg0, %c0_i32 : i32, i32
  }
  func.func @transform_1(%arg0: i32) -> (i32, i32) {
    %c0_i32 = arith.constant 0 : i32
    %c0_i32_0 = arith.constant 0 : i32
    %c0_i32_1 = arith.constant 0 : i32
    return %c0_i32, %c0_i32_0 : i32, i32
  }
  func.func @transform_2(%arg0: i32) -> (i32, i32) {
    %c0_i32 = arith.constant 0 : i32
    %c0_i32_0 = arith.constant 0 : i32
    %c0_i32_1 = arith.constant 0 : i32
    return %c0_i32, %c0_i32_0 : i32, i32
  }
  func.func @transform_3(%arg0: i32) -> (i32, i32) {
    %c0_i32 = arith.constant 0 : i32
    %c0_i32_0 = arith.constant 0 : i32
    return %arg0, %c0_i32 : i32, i32
  }
}

module attributes {stable_mosaic.version = 11 : i64} {
  func.func @_matmul_bias_relu_kernel(%arg0: i32, %arg1: memref<32x900xbf16, #tpu.memory_space<vmem>>, %arg2: memref<900x48xbf16, #tpu.memory_space<vmem>>, %arg3: memref<1x48xf32, #tpu.memory_space<vmem>>, %arg4: memref<32x48xbf16, #tpu.memory_space<vmem>>) attributes {dimension_semantics = [#tpu.dimension_semantics<parallel>], iteration_bounds = array<i64: 2>, scalar_prefetch = 0 : i64, scratch_operands = 0 : i64, tpu.core_type = #tpu.core_type<tc>, window_params = [{transform_indices = @transform_0, window_bounds = array<i64: 32, 900>}, {pipeline_mode = #tpu.pipeline_mode<synchronous>, transform_indices = @transform_1, window_bounds = array<i64: 900, 48>}, {pipeline_mode = #tpu.pipeline_mode<synchronous>, transform_indices = @transform_2, window_bounds = array<i64: 1, 48>}, {transform_indices = @transform_3, window_bounds = array<i64: 32, 48>}]} {
    %c0 = arith.constant 0 : index
    %c0_0 = arith.constant 0 : index
    %0 = vector.load %arg1[%c0, %c0_0] : memref<32x900xbf16, #tpu.memory_space<vmem>>, vector<32x900xbf16>
    %c0_1 = arith.constant 0 : index
    %c0_2 = arith.constant 0 : index
    %1 = vector.load %arg2[%c0_1, %c0_2] : memref<900x48xbf16, #tpu.memory_space<vmem>>, vector<900x48xbf16>
    %cst = arith.constant dense<0.000000e+00> : vector<32x48xf32>
    %2 = tpu.matmul %0, %1, %cst {dimension_numbers = #tpu.dot_dimension_numbers<[1], [0], [0], [1], [0, 0, 1, 1], [], []>} : vector<32x900xbf16>, vector<900x48xbf16>, vector<32x48xf32> -> vector<32x48xf32>
    %c0_3 = arith.constant 0 : index
    %c0_4 = arith.constant 0 : index
    %3 = vector.load %arg3[%c0_3, %c0_4] : memref<1x48xf32, #tpu.memory_space<vmem>>, vector<1x48xf32>
    %4 = vector.broadcast %3 : vector<1x48xf32> to vector<32x48xf32>
    %5 = arith.addf %2, %4 : vector<32x48xf32>
    %cst_5 = arith.constant 0.000000e+00 : f32
    %6 = vector.broadcast %cst_5 : f32 to vector<32x48xf32>
    %7 = arith.maximumf %5, %6 : vector<32x48xf32>
    %8 = arith.truncf %7 : vector<32x48xf32> to vector<32x48xbf16>
    %c0_6 = arith.constant 0 : index
    %c0_7 = arith.constant 0 : index
    %9 = vector.load %arg4[%c0_6, %c0_7] : memref<32x48xbf16, #tpu.memory_space<vmem>>, vector<32x48xbf16>
    tpu.vector_store %arg4[%c0_6, %c0_7], %8 {strides = array<i32>} : memref<32x48xbf16, #tpu.memory_space<vmem>>, vector<32x48xbf16>,
    return
  }
  func.func @transform_0(%arg0: i32) -> (i32, i32) {
    %c0_i32 = arith.constant 0 : i32
    %c0_i32_0 = arith.constant 0 : i32
    return %arg0, %c0_i32 : i32, i32
  }
  func.func @transform_1(%arg0: i32) -> (i32, i32) {
    %c0_i32 = arith.constant 0 : i32
    %c0_i32_0 = arith.constant 0 : i32
    %c0_i32_1 = arith.constant 0 : i32
    return %c0_i32, %c0_i32_0 : i32, i32
  }
  func.func @transform_2(%arg0: i32) -> (i32, i32) {
    %c0_i32 = arith.constant 0 : i32
    %c0_i32_0 = arith.constant 0 : i32
    %c0_i32_1 = arith.constant 0 : i32
    return %c0_i32, %c0_i32_0 : i32, i32
  }
  func.func @transform_3(%arg0: i32) -> (i32, i32) {
    %c0_i32 = arith.constant 0 : i32
    %c0_i32_0 = arith.constant 0 : i32
    return %arg0, %c0_i32 : i32, i32
  }
}

module attributes {stable_mosaic.version = 11 : i64} {
  func.func @_head_kernel(%arg0: i32, %arg1: memref<2x9x432xbf16, #tpu.memory_space<vmem>>, %arg2: memref<432x64xbf16, #tpu.memory_space<vmem>>, %arg3: memref<1x64xf32, #tpu.memory_space<vmem>>, %arg4: memref<9x64x64xbf16, #tpu.memory_space<vmem>>, %arg5: memref<1x64xf32, #tpu.memory_space<vmem>>, %arg6: memref<1x64x100xbf16, #tpu.memory_space<vmem>>, %arg7: memref<1x100xf32, #tpu.memory_space<vmem>>, %arg8: memref<100x50xbf16, #tpu.memory_space<vmem>>, %arg9: memref<1x50xf32, #tpu.memory_space<vmem>>, %arg10: memref<50x10xbf16, #tpu.memory_space<vmem>>, %arg11: memref<1x10xf32, #tpu.memory_space<vmem>>, %arg12: memref<10x1xbf16, #tpu.memory_space<vmem>>, %arg13: memref<1x1xf32, #tpu.memory_space<vmem>>, %arg14: memref<2x1xf32, #tpu.memory_space<vmem>>) attributes {dimension_semantics = [#tpu.dimension_semantics<parallel>], iteration_bounds = array<i64: 1>, scalar_prefetch = 0 : i64, scratch_operands = 0 : i64, tpu.core_type = #tpu.core_type<tc>, window_params = [{transform_indices = @transform_0, window_bounds = array<i64: 2, 9, 432>}, {pipeline_mode = #tpu.pipeline_mode<synchronous>, transform_indices = @transform_1, window_bounds = array<i64: 432, 64>}, {pipeline_mode = #tpu.pipeline_mode<synchronous>, transform_indices = @transform_2, window_bounds = array<i64: 1, 64>}, {pipeline_mode = #tpu.pipeline_mode<synchronous>, transform_indices = @transform_3, window_bounds = array<i64: 9, 64, 64>}, {pipeline_mode = #tpu.pipeline_mode<synchronous>, transform_indices = @transform_4, window_bounds = array<i64: 1, 64>}, {pipeline_mode = #tpu.pipeline_mode<synchronous>, transform_indices = @transform_5, window_bounds = array<i64: 1, 64, 100>}, {pipeline_mode = #tpu.pipeline_mode<synchronous>, transform_indices = @transform_6, window_bounds = array<i64: 1, 100>}, {pipeline_mode = #tpu.pipeline_mode<synchronous>, transform_indices = @transform_7, window_bounds = array<i64: 100, 50>}, {pipeline_mode = #tpu.pipeline_mode<synchronous>, transform_indices = @transform_8, window_bounds = array<i64: 1, 50>}, {pipeline_mode = #tpu.pipeline_mode<synchronous>, transform_indices = @transform_9, window_bounds = array<i64: 50, 10>}, {pipeline_mode = #tpu.pipeline_mode<synchronous>, transform_indices = @transform_10, window_bounds = array<i64: 1, 10>}, {pipeline_mode = #tpu.pipeline_mode<synchronous>, transform_indices = @transform_11, window_bounds = array<i64: 10, 1>}, {pipeline_mode = #tpu.pipeline_mode<synchronous>, transform_indices = @transform_12, window_bounds = array<i64: 1, 1>}, {transform_indices = @transform_13, window_bounds = array<i64: 2, 1>}]} {
    %c0 = arith.constant 0 : index
    %c0_0 = arith.constant 0 : index
    %0 = vector.load %arg2[%c0, %c0_0] : memref<432x64xbf16, #tpu.memory_space<vmem>>, vector<432x64xbf16>
    %c0_1 = arith.constant 0 : index
    %c0_2 = arith.constant 0 : index
    %1 = vector.load %arg3[%c0_1, %c0_2] : memref<1x64xf32, #tpu.memory_space<vmem>>, vector<1x64xf32>
    %c0_3 = arith.constant 0 : index
    %c0_4 = arith.constant 0 : index
    %c0_5 = arith.constant 0 : index
    %2 = vector.load %arg1[%c0_3, %c0_4, %c0_5] : memref<2x9x432xbf16, #tpu.memory_space<vmem>>, vector<2x1x432xbf16>
    %3 = vector.shape_cast %2 : vector<2x1x432xbf16> to vector<2x432xbf16>
    %cst = arith.constant dense<0.000000e+00> : vector<2x64xf32>
    %4 = tpu.matmul %3, %0, %cst {dimension_numbers = #tpu.dot_dimension_numbers<[1], [0], [0], [1], [0, 0, 1, 1], [], []>} : vector<2x432xbf16>, vector<432x64xbf16>, vector<2x64xf32> -> vector<2x64xf32>
    %5 = vector.broadcast %1 : vector<1x64xf32> to vector<2x64xf32>
    %6 = arith.addf %4, %5 : vector<2x64xf32>
    %cst_6 = arith.constant 0.000000e+00 : f32
    %7 = vector.broadcast %cst_6 : f32 to vector<2x64xf32>
    %8 = arith.maximumf %6, %7 : vector<2x64xf32>
    %9 = arith.truncf %8 : vector<2x64xf32> to vector<2x64xbf16>
    %c0_7 = arith.constant 0 : index
    %c1 = arith.constant 1 : index
    %c0_8 = arith.constant 0 : index
    %10 = vector.load %arg1[%c0_7, %c1, %c0_8] : memref<2x9x432xbf16, #tpu.memory_space<vmem>>, vector<2x1x432xbf16>
    %11 = vector.shape_cast %10 : vector<2x1x432xbf16> to vector<2x432xbf16>
    %cst_9 = arith.constant dense<0.000000e+00> : vector<2x64xf32>
    %12 = tpu.matmul %11, %0, %cst_9 {dimension_numbers = #tpu.dot_dimension_numbers<[1], [0], [0], [1], [0, 0, 1, 1], [], []>} : vector<2x432xbf16>, vector<432x64xbf16>, vector<2x64xf32> -> vector<2x64xf32>
    %13 = vector.broadcast %1 : vector<1x64xf32> to vector<2x64xf32>
    %14 = arith.addf %12, %13 : vector<2x64xf32>
    %cst_10 = arith.constant 0.000000e+00 : f32
    %15 = vector.broadcast %cst_10 : f32 to vector<2x64xf32>
    %16 = arith.maximumf %14, %15 : vector<2x64xf32>
    %17 = arith.truncf %16 : vector<2x64xf32> to vector<2x64xbf16>
    %c0_11 = arith.constant 0 : index
    %c2 = arith.constant 2 : index
    %c0_12 = arith.constant 0 : index
    %18 = vector.load %arg1[%c0_11, %c2, %c0_12] : memref<2x9x432xbf16, #tpu.memory_space<vmem>>, vector<2x1x432xbf16>
    %19 = vector.shape_cast %18 : vector<2x1x432xbf16> to vector<2x432xbf16>
    %cst_13 = arith.constant dense<0.000000e+00> : vector<2x64xf32>
    %20 = tpu.matmul %19, %0, %cst_13 {dimension_numbers = #tpu.dot_dimension_numbers<[1], [0], [0], [1], [0, 0, 1, 1], [], []>} : vector<2x432xbf16>, vector<432x64xbf16>, vector<2x64xf32> -> vector<2x64xf32>
    %21 = vector.broadcast %1 : vector<1x64xf32> to vector<2x64xf32>
    %22 = arith.addf %20, %21 : vector<2x64xf32>
    %cst_14 = arith.constant 0.000000e+00 : f32
    %23 = vector.broadcast %cst_14 : f32 to vector<2x64xf32>
    %24 = arith.maximumf %22, %23 : vector<2x64xf32>
    %25 = arith.truncf %24 : vector<2x64xf32> to vector<2x64xbf16>
    %c0_15 = arith.constant 0 : index
    %c3 = arith.constant 3 : index
    %c0_16 = arith.constant 0 : index
    %26 = vector.load %arg1[%c0_15, %c3, %c0_16] : memref<2x9x432xbf16, #tpu.memory_space<vmem>>, vector<2x1x432xbf16>
    %27 = vector.shape_cast %26 : vector<2x1x432xbf16> to vector<2x432xbf16>
    %cst_17 = arith.constant dense<0.000000e+00> : vector<2x64xf32>
    %28 = tpu.matmul %27, %0, %cst_17 {dimension_numbers = #tpu.dot_dimension_numbers<[1], [0], [0], [1], [0, 0, 1, 1], [], []>} : vector<2x432xbf16>, vector<432x64xbf16>, vector<2x64xf32> -> vector<2x64xf32>
    %29 = vector.broadcast %1 : vector<1x64xf32> to vector<2x64xf32>
    %30 = arith.addf %28, %29 : vector<2x64xf32>
    %cst_18 = arith.constant 0.000000e+00 : f32
    %31 = vector.broadcast %cst_18 : f32 to vector<2x64xf32>
    %32 = arith.maximumf %30, %31 : vector<2x64xf32>
    %33 = arith.truncf %32 : vector<2x64xf32> to vector<2x64xbf16>
    %c0_19 = arith.constant 0 : index
    %c4 = arith.constant 4 : index
    %c0_20 = arith.constant 0 : index
    %34 = vector.load %arg1[%c0_19, %c4, %c0_20] : memref<2x9x432xbf16, #tpu.memory_space<vmem>>, vector<2x1x432xbf16>
    %35 = vector.shape_cast %34 : vector<2x1x432xbf16> to vector<2x432xbf16>
    %cst_21 = arith.constant dense<0.000000e+00> : vector<2x64xf32>
    %36 = tpu.matmul %35, %0, %cst_21 {dimension_numbers = #tpu.dot_dimension_numbers<[1], [0], [0], [1], [0, 0, 1, 1], [], []>} : vector<2x432xbf16>, vector<432x64xbf16>, vector<2x64xf32> -> vector<2x64xf32>
    %37 = vector.broadcast %1 : vector<1x64xf32> to vector<2x64xf32>
    %38 = arith.addf %36, %37 : vector<2x64xf32>
    %cst_22 = arith.constant 0.000000e+00 : f32
    %39 = vector.broadcast %cst_22 : f32 to vector<2x64xf32>
    %40 = arith.maximumf %38, %39 : vector<2x64xf32>
    %41 = arith.truncf %40 : vector<2x64xf32> to vector<2x64xbf16>
    %c0_23 = arith.constant 0 : index
    %c5 = arith.constant 5 : index
    %c0_24 = arith.constant 0 : index
    %42 = vector.load %arg1[%c0_23, %c5, %c0_24] : memref<2x9x432xbf16, #tpu.memory_space<vmem>>, vector<2x1x432xbf16>
    %43 = vector.shape_cast %42 : vector<2x1x432xbf16> to vector<2x432xbf16>
    %cst_25 = arith.constant dense<0.000000e+00> : vector<2x64xf32>
    %44 = tpu.matmul %43, %0, %cst_25 {dimension_numbers = #tpu.dot_dimension_numbers<[1], [0], [0], [1], [0, 0, 1, 1], [], []>} : vector<2x432xbf16>, vector<432x64xbf16>, vector<2x64xf32> -> vector<2x64xf32>
    %45 = vector.broadcast %1 : vector<1x64xf32> to vector<2x64xf32>
    %46 = arith.addf %44, %45 : vector<2x64xf32>
    %cst_26 = arith.constant 0.000000e+00 : f32
    %47 = vector.broadcast %cst_26 : f32 to vector<2x64xf32>
    %48 = arith.maximumf %46, %47 : vector<2x64xf32>
    %49 = arith.truncf %48 : vector<2x64xf32> to vector<2x64xbf16>
    %c0_27 = arith.constant 0 : index
    %c6 = arith.constant 6 : index
    %c0_28 = arith.constant 0 : index
    %50 = vector.load %arg1[%c0_27, %c6, %c0_28] : memref<2x9x432xbf16, #tpu.memory_space<vmem>>, vector<2x1x432xbf16>
    %51 = vector.shape_cast %50 : vector<2x1x432xbf16> to vector<2x432xbf16>
    %cst_29 = arith.constant dense<0.000000e+00> : vector<2x64xf32>
    %52 = tpu.matmul %51, %0, %cst_29 {dimension_numbers = #tpu.dot_dimension_numbers<[1], [0], [0], [1], [0, 0, 1, 1], [], []>} : vector<2x432xbf16>, vector<432x64xbf16>, vector<2x64xf32> -> vector<2x64xf32>
    %53 = vector.broadcast %1 : vector<1x64xf32> to vector<2x64xf32>
    %54 = arith.addf %52, %53 : vector<2x64xf32>
    %cst_30 = arith.constant 0.000000e+00 : f32
    %55 = vector.broadcast %cst_30 : f32 to vector<2x64xf32>
    %56 = arith.maximumf %54, %55 : vector<2x64xf32>
    %57 = arith.truncf %56 : vector<2x64xf32> to vector<2x64xbf16>
    %c0_31 = arith.constant 0 : index
    %c7 = arith.constant 7 : index
    %c0_32 = arith.constant 0 : index
    %58 = vector.load %arg1[%c0_31, %c7, %c0_32] : memref<2x9x432xbf16, #tpu.memory_space<vmem>>, vector<2x1x432xbf16>
    %59 = vector.shape_cast %58 : vector<2x1x432xbf16> to vector<2x432xbf16>
    %cst_33 = arith.constant dense<0.000000e+00> : vector<2x64xf32>
    %60 = tpu.matmul %59, %0, %cst_33 {dimension_numbers = #tpu.dot_dimension_numbers<[1], [0], [0], [1], [0, 0, 1, 1], [], []>} : vector<2x432xbf16>, vector<432x64xbf16>, vector<2x64xf32> -> vector<2x64xf32>
    %61 = vector.broadcast %1 : vector<1x64xf32> to vector<2x64xf32>
    %62 = arith.addf %60, %61 : vector<2x64xf32>
    %cst_34 = arith.constant 0.000000e+00 : f32
    %63 = vector.broadcast %cst_34 : f32 to vector<2x64xf32>
    %64 = arith.maximumf %62, %63 : vector<2x64xf32>
    %65 = arith.truncf %64 : vector<2x64xf32> to vector<2x64xbf16>
    %c0_35 = arith.constant 0 : index
    %c8 = arith.constant 8 : index
    %c0_36 = arith.constant 0 : index
    %66 = vector.load %arg1[%c0_35, %c8, %c0_36] : memref<2x9x432xbf16, #tpu.memory_space<vmem>>, vector<2x1x432xbf16>
    %67 = vector.shape_cast %66 : vector<2x1x432xbf16> to vector<2x432xbf16>
    %cst_37 = arith.constant dense<0.000000e+00> : vector<2x64xf32>
    %68 = tpu.matmul %67, %0, %cst_37 {dimension_numbers = #tpu.dot_dimension_numbers<[1], [0], [0], [1], [0, 0, 1, 1], [], []>} : vector<2x432xbf16>, vector<432x64xbf16>, vector<2x64xf32> -> vector<2x64xf32>
    %69 = vector.broadcast %1 : vector<1x64xf32> to vector<2x64xf32>
    %70 = arith.addf %68, %69 : vector<2x64xf32>
    %cst_38 = arith.constant 0.000000e+00 : f32
    %71 = vector.broadcast %cst_38 : f32 to vector<2x64xf32>
    %72 = arith.maximumf %70, %71 : vector<2x64xf32>
    %73 = arith.truncf %72 : vector<2x64xf32> to vector<2x64xbf16>
    %c0_39 = arith.constant 0 : index
    %c0_40 = arith.constant 0 : index
    %74 = vector.load %arg5[%c0_39, %c0_40] : memref<1x64xf32, #tpu.memory_space<vmem>>, vector<1x64xf32>
    %c0_41 = arith.constant 0 : index
    %c0_42 = arith.constant 0 : index
    %75 = vector.load %arg7[%c0_41, %c0_42] : memref<1x100xf32, #tpu.memory_space<vmem>>, vector<1x100xf32>
    %c0_43 = arith.constant 0 : index
    %c0_44 = arith.constant 0 : index
    %c0_45 = arith.constant 0 : index
    %76 = vector.load %arg4[%c0_43, %c0_44, %c0_45] : memref<9x64x64xbf16, #tpu.memory_space<vmem>>, vector<1x64x64xbf16>
    %77 = vector.shape_cast %76 : vector<1x64x64xbf16> to vector<64x64xbf16>
    %cst_46 = arith.constant dense<0.000000e+00> : vector<2x64xf32>
    %78 = tpu.matmul %9, %77, %cst_46 {dimension_numbers = #tpu.dot_dimension_numbers<[1], [0], [0], [1], [0, 0, 1, 1], [], []>} : vector<2x64xbf16>, vector<64x64xbf16>, vector<2x64xf32> -> vector<2x64xf32>
    %79 = vector.broadcast %74 : vector<1x64xf32> to vector<2x64xf32>
    %80 = arith.addf %79, %78 : vector<2x64xf32>
    %c1_47 = arith.constant 1 : index
    %c0_48 = arith.constant 0 : index
    %c0_49 = arith.constant 0 : index
    %81 = vector.load %arg4[%c1_47, %c0_48, %c0_49] : memref<9x64x64xbf16, #tpu.memory_space<vmem>>, vector<1x64x64xbf16>
    %82 = vector.shape_cast %81 : vector<1x64x64xbf16> to vector<64x64xbf16>
    %cst_50 = arith.constant dense<0.000000e+00> : vector<2x64xf32>
    %83 = tpu.matmul %17, %82, %cst_50 {dimension_numbers = #tpu.dot_dimension_numbers<[1], [0], [0], [1], [0, 0, 1, 1], [], []>} : vector<2x64xbf16>, vector<64x64xbf16>, vector<2x64xf32> -> vector<2x64xf32>
    %84 = arith.addf %80, %83 : vector<2x64xf32>
    %c2_51 = arith.constant 2 : index
    %c0_52 = arith.constant 0 : index
    %c0_53 = arith.constant 0 : index
    %85 = vector.load %arg4[%c2_51, %c0_52, %c0_53] : memref<9x64x64xbf16, #tpu.memory_space<vmem>>, vector<1x64x64xbf16>
    %86 = vector.shape_cast %85 : vector<1x64x64xbf16> to vector<64x64xbf16>
    %cst_54 = arith.constant dense<0.000000e+00> : vector<2x64xf32>
    %87 = tpu.matmul %25, %86, %cst_54 {dimension_numbers = #tpu.dot_dimension_numbers<[1], [0], [0], [1], [0, 0, 1, 1], [], []>} : vector<2x64xbf16>, vector<64x64xbf16>, vector<2x64xf32> -> vector<2x64xf32>
    %88 = arith.addf %84, %87 : vector<2x64xf32>
    %c3_55 = arith.constant 3 : index
    %c0_56 = arith.constant 0 : index
    %c0_57 = arith.constant 0 : index
    %89 = vector.load %arg4[%c3_55, %c0_56, %c0_57] : memref<9x64x64xbf16, #tpu.memory_space<vmem>>, vector<1x64x64xbf16>
    %90 = vector.shape_cast %89 : vector<1x64x64xbf16> to vector<64x64xbf16>
    %cst_58 = arith.constant dense<0.000000e+00> : vector<2x64xf32>
    %91 = tpu.matmul %33, %90, %cst_58 {dimension_numbers = #tpu.dot_dimension_numbers<[1], [0], [0], [1], [0, 0, 1, 1], [], []>} : vector<2x64xbf16>, vector<64x64xbf16>, vector<2x64xf32> -> vector<2x64xf32>
    %92 = arith.addf %88, %91 : vector<2x64xf32>
    %c4_59 = arith.constant 4 : index
    %c0_60 = arith.constant 0 : index
    %c0_61 = arith.constant 0 : index
    %93 = vector.load %arg4[%c4_59, %c0_60, %c0_61] : memref<9x64x64xbf16, #tpu.memory_space<vmem>>, vector<1x64x64xbf16>
    %94 = vector.shape_cast %93 : vector<1x64x64xbf16> to vector<64x64xbf16>
    %cst_62 = arith.constant dense<0.000000e+00> : vector<2x64xf32>
    %95 = tpu.matmul %41, %94, %cst_62 {dimension_numbers = #tpu.dot_dimension_numbers<[1], [0], [0], [1], [0, 0, 1, 1], [], []>} : vector<2x64xbf16>, vector<64x64xbf16>, vector<2x64xf32> -> vector<2x64xf32>
    %96 = arith.addf %92, %95 : vector<2x64xf32>
    %c5_63 = arith.constant 5 : index
    %c0_64 = arith.constant 0 : index
    %c0_65 = arith.constant 0 : index
    %97 = vector.load %arg4[%c5_63, %c0_64, %c0_65] : memref<9x64x64xbf16, #tpu.memory_space<vmem>>, vector<1x64x64xbf16>
    %98 = vector.shape_cast %97 : vector<1x64x64xbf16> to vector<64x64xbf16>
    %cst_66 = arith.constant dense<0.000000e+00> : vector<2x64xf32>
    %99 = tpu.matmul %49, %98, %cst_66 {dimension_numbers = #tpu.dot_dimension_numbers<[1], [0], [0], [1], [0, 0, 1, 1], [], []>} : vector<2x64xbf16>, vector<64x64xbf16>, vector<2x64xf32> -> vector<2x64xf32>
    %100 = arith.addf %96, %99 : vector<2x64xf32>
    %c6_67 = arith.constant 6 : index
    %c0_68 = arith.constant 0 : index
    %c0_69 = arith.constant 0 : index
    %101 = vector.load %arg4[%c6_67, %c0_68, %c0_69] : memref<9x64x64xbf16, #tpu.memory_space<vmem>>, vector<1x64x64xbf16>
    %102 = vector.shape_cast %101 : vector<1x64x64xbf16> to vector<64x64xbf16>
    %cst_70 = arith.constant dense<0.000000e+00> : vector<2x64xf32>
    %103 = tpu.matmul %57, %102, %cst_70 {dimension_numbers = #tpu.dot_dimension_numbers<[1], [0], [0], [1], [0, 0, 1, 1], [], []>} : vector<2x64xbf16>, vector<64x64xbf16>, vector<2x64xf32> -> vector<2x64xf32>
    %104 = arith.addf %100, %103 : vector<2x64xf32>
    %c7_71 = arith.constant 7 : index
    %c0_72 = arith.constant 0 : index
    %c0_73 = arith.constant 0 : index
    %105 = vector.load %arg4[%c7_71, %c0_72, %c0_73] : memref<9x64x64xbf16, #tpu.memory_space<vmem>>, vector<1x64x64xbf16>
    %106 = vector.shape_cast %105 : vector<1x64x64xbf16> to vector<64x64xbf16>
    %cst_74 = arith.constant dense<0.000000e+00> : vector<2x64xf32>
    %107 = tpu.matmul %65, %106, %cst_74 {dimension_numbers = #tpu.dot_dimension_numbers<[1], [0], [0], [1], [0, 0, 1, 1], [], []>} : vector<2x64xbf16>, vector<64x64xbf16>, vector<2x64xf32> -> vector<2x64xf32>
    %108 = arith.addf %104, %107 : vector<2x64xf32>
    %c8_75 = arith.constant 8 : index
    %c0_76 = arith.constant 0 : index
    %c0_77 = arith.constant 0 : index
    %109 = vector.load %arg4[%c8_75, %c0_76, %c0_77] : memref<9x64x64xbf16, #tpu.memory_space<vmem>>, vector<1x64x64xbf16>
    %110 = vector.shape_cast %109 : vector<1x64x64xbf16> to vector<64x64xbf16>
    %cst_78 = arith.constant dense<0.000000e+00> : vector<2x64xf32>
    %111 = tpu.matmul %73, %110, %cst_78 {dimension_numbers = #tpu.dot_dimension_numbers<[1], [0], [0], [1], [0, 0, 1, 1], [], []>} : vector<2x64xbf16>, vector<64x64xbf16>, vector<2x64xf32> -> vector<2x64xf32>
    %112 = arith.addf %108, %111 : vector<2x64xf32>
    %cst_79 = arith.constant 0.000000e+00 : f32
    %113 = vector.broadcast %cst_79 : f32 to vector<2x64xf32>
    %114 = arith.maximumf %112, %113 : vector<2x64xf32>
    %115 = arith.truncf %114 : vector<2x64xf32> to vector<2x64xbf16>
    %c0_80 = arith.constant 0 : index
    %c0_81 = arith.constant 0 : index
    %c0_82 = arith.constant 0 : index
    %116 = vector.load %arg6[%c0_80, %c0_81, %c0_82] : memref<1x64x100xbf16, #tpu.memory_space<vmem>>, vector<1x64x100xbf16>
    %117 = vector.shape_cast %116 : vector<1x64x100xbf16> to vector<64x100xbf16>
    %cst_83 = arith.constant dense<0.000000e+00> : vector<2x100xf32>
    %118 = tpu.matmul %115, %117, %cst_83 {dimension_numbers = #tpu.dot_dimension_numbers<[1], [0], [0], [1], [0, 0, 1, 1], [], []>} : vector<2x64xbf16>, vector<64x100xbf16>, vector<2x100xf32> -> vector<2x100xf32>
    %119 = vector.broadcast %75 : vector<1x100xf32> to vector<2x100xf32>
    %120 = arith.addf %119, %118 : vector<2x100xf32>
    %cst_84 = arith.constant 0.000000e+00 : f32
    %121 = vector.broadcast %cst_84 : f32 to vector<2x100xf32>
    %122 = arith.maximumf %120, %121 : vector<2x100xf32>
    %123 = arith.truncf %122 : vector<2x100xf32> to vector<2x100xbf16>
    %c0_85 = arith.constant 0 : index
    %c0_86 = arith.constant 0 : index
    %124 = vector.load %arg8[%c0_85, %c0_86] : memref<100x50xbf16, #tpu.memory_space<vmem>>, vector<100x50xbf16>
    %cst_87 = arith.constant dense<0.000000e+00> : vector<2x50xf32>
    %125 = tpu.matmul %123, %124, %cst_87 {dimension_numbers = #tpu.dot_dimension_numbers<[1], [0], [0], [1], [0, 0, 1, 1], [], []>} : vector<2x100xbf16>, vector<100x50xbf16>, vector<2x50xf32> -> vector<2x50xf32>
    %c0_88 = arith.constant 0 : index
    %c0_89 = arith.constant 0 : index
    %126 = vector.load %arg9[%c0_88, %c0_89] : memref<1x50xf32, #tpu.memory_space<vmem>>, vector<1x50xf32>
    %127 = vector.broadcast %126 : vector<1x50xf32> to vector<2x50xf32>
    %128 = arith.addf %125, %127 : vector<2x50xf32>
    %cst_90 = arith.constant 0.000000e+00 : f32
    %129 = vector.broadcast %cst_90 : f32 to vector<2x50xf32>
    %130 = arith.maximumf %128, %129 : vector<2x50xf32>
    %131 = arith.truncf %130 : vector<2x50xf32> to vector<2x50xbf16>
    %c0_91 = arith.constant 0 : index
    %c0_92 = arith.constant 0 : index
    %132 = vector.load %arg10[%c0_91, %c0_92] : memref<50x10xbf16, #tpu.memory_space<vmem>>, vector<50x10xbf16>
    %cst_93 = arith.constant dense<0.000000e+00> : vector<2x10xf32>
    %133 = tpu.matmul %131, %132, %cst_93 {dimension_numbers = #tpu.dot_dimension_numbers<[1], [0], [0], [1], [0, 0, 1, 1], [], []>} : vector<2x50xbf16>, vector<50x10xbf16>, vector<2x10xf32> -> vector<2x10xf32>
    %c0_94 = arith.constant 0 : index
    %c0_95 = arith.constant 0 : index
    %134 = vector.load %arg11[%c0_94, %c0_95] : memref<1x10xf32, #tpu.memory_space<vmem>>, vector<1x10xf32>
    %135 = vector.broadcast %134 : vector<1x10xf32> to vector<2x10xf32>
    %136 = arith.addf %133, %135 : vector<2x10xf32>
    %cst_96 = arith.constant 0.000000e+00 : f32
    %137 = vector.broadcast %cst_96 : f32 to vector<2x10xf32>
    %138 = arith.maximumf %136, %137 : vector<2x10xf32>
    %139 = arith.truncf %138 : vector<2x10xf32> to vector<2x10xbf16>
    %c0_97 = arith.constant 0 : index
    %c0_98 = arith.constant 0 : index
    %140 = vector.load %arg12[%c0_97, %c0_98] : memref<10x1xbf16, #tpu.memory_space<vmem>>, vector<10x1xbf16>
    %cst_99 = arith.constant dense<0.000000e+00> : vector<2x1xf32>
    %141 = tpu.matmul %139, %140, %cst_99 {dimension_numbers = #tpu.dot_dimension_numbers<[1], [0], [0], [1], [0, 0, 1, 1], [], []>} : vector<2x10xbf16>, vector<10x1xbf16>, vector<2x1xf32> -> vector<2x1xf32>
    %c0_100 = arith.constant 0 : index
    %c0_101 = arith.constant 0 : index
    %142 = vector.load %arg13[%c0_100, %c0_101] : memref<1x1xf32, #tpu.memory_space<vmem>>, vector<1x1xf32>
    %143 = vector.broadcast %142 : vector<1x1xf32> to vector<2x1xf32>
    %144 = arith.addf %141, %143 : vector<2x1xf32>
    %145 = math.tanh %144 : vector<2x1xf32>
    %c0_102 = arith.constant 0 : index
    %c0_103 = arith.constant 0 : index
    %146 = vector.load %arg14[%c0_102, %c0_103] : memref<2x1xf32, #tpu.memory_space<vmem>>, vector<2x1xf32>
    tpu.vector_store %arg14[%c0_102, %c0_103], %145 {strides = array<i32>} : memref<2x1xf32, #tpu.memory_space<vmem>>, vector<2x1xf32>,
    return
  }
  func.func @transform_0(%arg0: i32) -> (i32, i32, i32) {
    %c0_i32 = arith.constant 0 : i32
    %c0_i32_0 = arith.constant 0 : i32
    %c0_i32_1 = arith.constant 0 : i32
    return %arg0, %c0_i32, %c0_i32_0 : i32, i32, i32
  }
  func.func @transform_1(%arg0: i32) -> (i32, i32) {
    %c0_i32 = arith.constant 0 : i32
    %c0_i32_0 = arith.constant 0 : i32
    %c0_i32_1 = arith.constant 0 : i32
    return %c0_i32, %c0_i32_0 : i32, i32
  }
  func.func @transform_2(%arg0: i32) -> (i32, i32) {
    %c0_i32 = arith.constant 0 : i32
    %c0_i32_0 = arith.constant 0 : i32
    %c0_i32_1 = arith.constant 0 : i32
    return %c0_i32, %c0_i32_0 : i32, i32
  }
  func.func @transform_3(%arg0: i32) -> (i32, i32, i32) {
    %c0_i32 = arith.constant 0 : i32
    %c0_i32_0 = arith.constant 0 : i32
    %c0_i32_1 = arith.constant 0 : i32
    %c0_i32_2 = arith.constant 0 : i32
    return %c0_i32, %c0_i32_0, %c0_i32_1 : i32, i32, i32
  }
  func.func @transform_4(%arg0: i32) -> (i32, i32) {
    %c0_i32 = arith.constant 0 : i32
    %c0_i32_0 = arith.constant 0 : i32
    %c0_i32_1 = arith.constant 0 : i32
    return %c0_i32, %c0_i32_0 : i32, i32
  }
  func.func @transform_5(%arg0: i32) -> (i32, i32, i32) {
    %c0_i32 = arith.constant 0 : i32
    %c0_i32_0 = arith.constant 0 : i32
    %c0_i32_1 = arith.constant 0 : i32
    %c0_i32_2 = arith.constant 0 : i32
    return %c0_i32, %c0_i32_0, %c0_i32_1 : i32, i32, i32
  }
  func.func @transform_6(%arg0: i32) -> (i32, i32) {
    %c0_i32 = arith.constant 0 : i32
    %c0_i32_0 = arith.constant 0 : i32
    %c0_i32_1 = arith.constant 0 : i32
    return %c0_i32, %c0_i32_0 : i32, i32
  }
  func.func @transform_7(%arg0: i32) -> (i32, i32) {
    %c0_i32 = arith.constant 0 : i32
    %c0_i32_0 = arith.constant 0 : i32
    %c0_i32_1 = arith.constant 0 : i32
    return %c0_i32, %c0_i32_0 : i32, i32
  }
  func.func @transform_8(%arg0: i32) -> (i32, i32) {
    %c0_i32 = arith.constant 0 : i32
    %c0_i32_0 = arith.constant 0 : i32
    %c0_i32_1 = arith.constant 0 : i32
    return %c0_i32, %c0_i32_0 : i32, i32
  }
  func.func @transform_9(%arg0: i32) -> (i32, i32) {
    %c0_i32 = arith.constant 0 : i32
    %c0_i32_0 = arith.constant 0 : i32
    %c0_i32_1 = arith.constant 0 : i32
    return %c0_i32, %c0_i32_0 : i32, i32
  }
  func.func @transform_10(%arg0: i32) -> (i32, i32) {
    %c0_i32 = arith.constant 0 : i32
    %c0_i32_0 = arith.constant 0 : i32
    %c0_i32_1 = arith.constant 0 : i32
    return %c0_i32, %c0_i32_0 : i32, i32
  }
  func.func @transform_11(%arg0: i32) -> (i32, i32) {
    %c0_i32 = arith.constant 0 : i32
    %c0_i32_0 = arith.constant 0 : i32
    %c0_i32_1 = arith.constant 0 : i32
    return %c0_i32, %c0_i32_0 : i32, i32
  }
  func.func @transform_12(%arg0: i32) -> (i32, i32) {
    %c0_i32 = arith.constant 0 : i32
    %c0_i32_0 = arith.constant 0 : i32
    %c0_i32_1 = arith.constant 0 : i32
    return %c0_i32, %c0_i32_0 : i32, i32
  }
  func.func @transform_13(%arg0: i32) -> (i32, i32) {
    %c0_i32 = arith.constant 0 : i32
    %c0_i32_0 = arith.constant 0 : i32
    return %arg0, %c0_i32 : i32, i32
  }
}

</mosaic_0001>

<llo_original>
// kernel: dave2v1_forward.4
$region0: #{dave2v1_forward.4}
  #allocation0 [shape = 'u32[]', space=smem, size = 0x4, offset = 0x4, fixed_abs, tag = 'smem constant byte address 0x4 - core index']
  #allocation1 [shape = 'u32[72,128]{1,0:T(1,128)}', space=vmem, size = 0x9000, scoped, tag = 'internal scratch']
  %s0 = inlined_call_operand.vmem [shape: bf16[1800,75], index: 0, kind: input, shape index: {}]
  %s1 = inlined_call_operand.vmem [shape: bf16[75,24], index: 1, kind: input, shape index: {}]
  %s2 = inlined_call_operand.vmem [shape: f32[1,24], index: 2, kind: input, shape index: {}]
  %s3 = inlined_call_operand.vmem [shape: bf16[1800,24], index: 3, kind: output, shape index: {}]
  %s4 = sld [smem:[#allocation0]]
  $region89: #{dave2v1_forward.4} parent=0
    _
  %s6 = ssub.s32 1, %s4
  %s7 = scalar_select 0, %s6, %s4
  $region1: #{dave2v1_forward.4} parent=0
    #allocation2 [shape = 'u8[262144]{0}', space=vmem, size = 0x40000, scoped, tag = 'output window, operand 0']
    loop: start=0, step=1, limit=6
    $region2: #{dave2v1_forward.4} parent=1 // loop_pre_header
      _
    $region3: #{dave2v1_forward.4} parent=1 // loop_header
      %s9 = sphi 0, %s13
      %p10 = scmp.ge.s32.totalorder %s9, 6
      %s19 = sphi 0, %s21
      %s22 = sphi 0, %s19
      %s23 = sphi 0, %s22
      %s39 = sphi 0, %s23
      %s43 = sphi 0, %s43
      %s45 = sphi 0, %s43
      %s46 = sphi 0, %s45
      %s60 = sphi 0, %s46
      %s64 = sphi 0, %s64
      %s66 = sphi 0, %s64
      %s67 = sphi 0, %s66
      %s81 = sphi 0, %s67
      %s87 = sphi 0, %s89
      %s90 = sphi 0, %s87
      %s91 = sphi 0, %s90
      %s107 = sphi 0, %s91
    $region4: #{dave2v1_forward.4} parent=1 // loop_header_branch
      %12 = sbr.rel (%p10) target = $region8
    $region5: #{dave2v1_forward.4} parent=1 // loop_body
      %s14 = ssub.s32 %s9, 1
      %s15 = ssub.s32 %s9, 2
      %s16 = sadd.s32 %s9, 1
      %s17 = ssub.s32 %s9, %s16
      %p18 = scmp.eq.s32.totalorder %s17, 0
      %s20 = sadd.s32 %s19, 1
      %s21 = scalar_select %p18, %s19, %s20
      %p24 = pneg %p18
      %p25 = scmp.eq.s32.totalorder %s9, 3
      %p26 = por %p24, %p25
      %p27 = scmp.ne.s32.totalorder %s19, %s22
      %p28 = scmp.eq.s32.totalorder %s9, 0
      %p29 = por %p27, %p28
      %p30 = scmp.ne.s32.totalorder %s19, %s22
      %p31 = scmp.eq.s32.totalorder %s14, 3
      %p32 = por %p30, %p31
      %p33 = scmp.ne.s32.totalorder %s22, %s23
      %p34 = scmp.eq.s32.totalorder %s14, 0
      %p35 = por %p33, %p34
      %p36 = scmp.ne.s32.totalorder %s22, %s23
      %p37 = scmp.eq.s32.totalorder %s15, 3
      %p38 = por %p36, %p37
      %p40 = scmp.ne.s32.totalorder %s23, %s39
      %p41 = scmp.eq.s32.totalorder %s15, 0
      %p42 = por %p40, %p41
      %s44 = sadd.s32 %s43, 1
      %p47 = scmp.eq.s32.totalorder %s9, 3
      %p48 = scmp.ne.s32.totalorder %s43, %s45
      %p49 = scmp.eq.s32.totalorder %s9, 0
      %p50 = por %p48, %p49
      %p51 = scmp.ne.s32.totalorder %s43, %s45
      %p52 = scmp.eq.s32.totalorder %s14, 3
      %p53 = por %p51, %p52
      %p54 = scmp.ne.s32.totalorder %s45, %s46
      %p55 = scmp.eq.s32.totalorder %s14, 0
      %p56 = por %p54, %p55
      %p57 = scmp.ne.s32.totalorder %s45, %s46
      %p58 = scmp.eq.s32.totalorder %s15, 3
      %p59 = por %p57, %p58
      %p61 = scmp.ne.s32.totalorder %s46, %s60
      %p62 = scmp.eq.s32.totalorder %s15, 0
      %p63 = por %p61, %p62
      %s65 = sadd.s32 %s64, 1
      %p68 = scmp.eq.s32.totalorder %s9, 3
      %p69 = scmp.ne.s32.totalorder %s64, %s66
      %p70 = scmp.eq.s32.totalorder %s9, 0
      %p71 = por %p69, %p70
      %p72 = scmp.ne.s32.totalorder %s64, %s66
      %p73 = scmp.eq.s32.totalorder %s14, 3
      %p74 = por %p72, %p73
      %p75 = scmp.ne.s32.totalorder %s66, %s67
      %p76 = scmp.eq.s32.totalorder %s14, 0
      %p77 = por %p75, %p76
      %p78 = scmp.ne.s32.totalorder %s66, %s67
      %p79 = scmp.eq.s32.totalorder %s15, 3
      %p80 = por %p78, %p79
      %p82 = scmp.ne.s32.totalorder %s67, %s81
      %p83 = scmp.eq.s32.totalorder %s15, 0
      %p84 = por %p82, %p83
      %s85 = ssub.s32 %s9, %s16
      %p86 = scmp.eq.s32.totalorder %s85, 0
      %s88 = sadd.s32 %s87, 1
      %s89 = scalar_select %p86, %s87, %s88
      %p92 = pneg %p86
      %p93 = scmp.eq.s32.totalorder %s9, 3
      %p94 = por %p92, %p93
      %p95 = scmp.ne.s32.totalorder %s87, %s90
      %p96 = scmp.eq.s32.totalorder %s9, 0
      %p97 = por %p95, %p96
      %p98 = scmp.ne.s32.totalorder %s87, %s90
      %p99 = scmp.eq.s32.totalorder %s14, 3
      %p100 = por %p98, %p99
      %p101 = scmp.ne.s32.totalorder %s90, %s91
      %p102 = scmp.eq.s32.totalorder %s14, 0
      %p103 = por %p101, %p102
      %p104 = scmp.ne.s32.totalorder %s90, %s91
      %p105 = scmp.eq.s32.totalorder %s15, 3
      %p106 = por %p104, %p105
      %p108 = scmp.ne.s32.totalorder %s91, %s107
      %p109 = scmp.eq.s32.totalorder %s15, 0
      %p110 = por %p108, %p109
      %p111 = scmp.le.s32.totalorder 1, %s9
      %p112 = scmp.lt.s32.totalorder %s9, 5
      %p113 = pnand %p111, %p112
      %p114 = pneg %p113
      // Predicated region
      $region9: #{dave2v1_forward.4} parent=5 // pred_check
        _
      $region10: #{dave2v1_forward.4} parent=5 // pred_check_branch
        %116 = sbr.rel (%p113) target = $region12
      $region11: #{dave2v1_forward.4} parent=5 // pred_region
        %s117 = ssub.s32 %s9, 1
        // Predicated region
        $region13: #{dave2v1_forward.4} parent=11 // pred_check
          %p118 = pneg %p56
        $region14: #{dave2v1_forward.4} parent=11 // pred_check_branch
          %120 = sbr.rel (%p118) target = $region16
        $region15: #{dave2v1_forward.4} parent=11 // pred_region
          _
        $region16: #{dave2v1_forward.4} parent=11 // pred_fallthru
          _
        // Predicated region
        $region17: #{dave2v1_forward.4} parent=11 // pred_check
          %p121 = pneg %p77
        $region18: #{dave2v1_forward.4} parent=11 // pred_check_branch
          %123 = sbr.rel (%p121) target = $region20
        $region19: #{dave2v1_forward.4} parent=11 // pred_region
          _
        $region20: #{dave2v1_forward.4} parent=11 // pred_fallthru
          _
      $region12: #{dave2v1_forward.4} parent=5 // pred_fallthru
        _
      %p124 = scmp.lt.s32.totalorder %s9, 4
      // Predicated region
      $region21: #{dave2v1_forward.4} parent=5 // pred_check
        %p125 = pneg %p124
      $region22: #{dave2v1_forward.4} parent=5 // pred_check_branch
        %127 = sbr.rel (%p125) target = $region24
      $region23: #{dave2v1_forward.4} parent=5 // pred_region
        // Predicated region
        $region25: #{dave2v1_forward.4} parent=23 // pred_check
          %p128 = pneg %p29
        $region26: #{dave2v1_forward.4} parent=23 // pred_check_branch
          %130 = sbr.rel (%p128) target = $region28
        $region27: #{dave2v1_forward.4} parent=23 // pred_region
          %s131 = smul.u32 64, %s9
          %s132 = ssub.s32 225, %s131
          %p133 = scmp.lt.s32.totalorder %s132, 64
          %s134 = scalar_select %p133, %s132, 64
          %s135 = smul.u32 4, %s134
          %p136 = scmp.lt.s32.totalorder %s131, 224
          %s137 = scalar_select %p136, %s131, 224
          %s138 = smul.addr %s137, 4
          %s139 = scalar_lea.vmem %s0, %s138
          %s140 = smul.u32 64, %s9
          %s141 = ssub.s32 225, %s140
          %p142 = scmp.lt.s32.totalorder %s141, 64
          %s143 = scalar_select %p142, %s141, 64
          %s144 = smul.u32 4, %s143
        $region28: #{dave2v1_forward.4} parent=23 // pred_fallthru
          _
      $region24: #{dave2v1_forward.4} parent=5 // pred_fallthru
        _
      %p145 = scmp.le.s32.totalorder 1, %s9
      %p146 = scmp.lt.s32.totalorder %s9, 5
      %p147 = pnand %p145, %p146
      %p148 = pneg %p147
      // Predicated region
      $region29: #{dave2v1_forward.4} parent=5 // pred_check
        _
      $region30: #{dave2v1_forward.4} parent=5 // pred_check_branch
        %150 = sbr.rel (%p147) target = $region32
      $region31: #{dave2v1_forward.4} parent=5 // pred_region
        %s151 = ssub.s32 %s9, 1
        %s152 = smul.u32 64, %s14
        %s153 = ssub.s32 225, %s152
        %p154 = scmp.lt.s32.totalorder %s153, 64
        %s155 = scalar_select %p154, %s153, 64
        %s156 = smul.u32 4, %s155
        %p157 = scmp.lt.s32.totalorder %s152, 224
        %s158 = scalar_select %p157, %s152, 224
        %s159 = smul.addr %s158, 4
        %s160 = scalar_lea.vmem %s0, %s159
        %p161 = pneg %p35
        %p162 = pneg %p32
        %p163 = pneg %p56
        %p164 = pneg %p53
        %p165 = pneg %p77
        %p166 = pneg %p74
        %p167 = pneg %p103
        %p168 = pneg %p100
        %s169 = sand.u32 %s90, 1
        %s170 = sand.u32 %s90, 1
        %s171 = smul.addr %s170, 256
        %s172 = scalar_lea.vmem [#allocation2], %s171
        %s173 = smul.u32 64, %s14
        %s174 = ssub.s32 225, %s173
        %p175 = scmp.lt.s32.totalorder %s174, 64
        %s176 = scalar_select %p175, %s174, 64
        %s177 = smul.u32 4, %s176
        %p178 = scmp.lt.s32.totalorder %s173, 224
        %s179 = scalar_select %p178, %s173, 224
        %s180 = smul.addr %s179, 4
        %s181 = scalar_lea.vmem %s0, %s180
        %s182 = smul.u32 64, %s14
        %s183 = ssub.s32 225, %s182
        %p184 = scmp.lt.s32.totalorder %s183, 64
        %s185 = scalar_select %p184, %s183, 64
        %s186 = smul.u32 4, %s185
        %s187 = smul.u32 64, %s14
        %s188 = ssub.s32 225, %s187
        %p189 = scmp.lt.s32.totalorder %s188, 64
        %s190 = scalar_select %p189, %s188, 64
        %s191 = smul.u32 4, %s190
        %v193 = vld [vmem:[%s181] sm:$0xf]
        %v194 = vld [vmem:[%s181 + $0x4] sm:$0xf]
        %v195 = vld [vmem:[%s181 + $0x8] sm:$0xf]
        %v196 = vld [vmem:[%s181 + $0xc] sm:$0xf]
        %v197 = vld [vmem:[%s181 + $0x10] sm:$0xf]
        %v198 = vld [vmem:[%s181 + $0x14] sm:$0xf]
        %v199 = vld [vmem:[%s181 + $0x18] sm:$0xf]
        %v200 = vld [vmem:[%s181 + $0x1c] sm:$0xf]
        %v201 = vld [vmem:[%s181 + $0x20] sm:$0xf]
        %v202 = vld [vmem:[%s181 + $0x24] sm:$0xf]
        %v203 = vld [vmem:[%s181 + $0x28] sm:$0xf]
        %v204 = vld [vmem:[%s181 + $0x2c] sm:$0xf]
        %v205 = vld [vmem:[%s181 + $0x30] sm:$0xf]
        %v206 = vld [vmem:[%s181 + $0x34] sm:$0xf]
        %v207 = vld [vmem:[%s181 + $0x38] sm:$0xf]
        %v208 = vld [vmem:[%s181 + $0x3c] sm:$0xf]
        %v209 = vld [vmem:[%s181 + $0x40] sm:$0xf]
        %v210 = vld [vmem:[%s181 + $0x44] sm:$0xf]
        %v211 = vld [vmem:[%s181 + $0x48] sm:$0xf]
        %v212 = vld [vmem:[%s181 + $0x4c] sm:$0xf]
        %v213 = vld [vmem:[%s181 + $0x50] sm:$0xf]
        %v214 = vld [vmem:[%s181 + $0x54] sm:$0xf]
        %v215 = vld [vmem:[%s181 + $0x58] sm:$0xf]
        %v216 = vld [vmem:[%s181 + $0x5c] sm:$0xf]
        %v217 = vld [vmem:[%s181 + $0x60] sm:$0xf]
        %v218 = vld [vmem:[%s181 + $0x64] sm:$0xf]
        %v219 = vld [vmem:[%s181 + $0x68] sm:$0xf]
        %v220 = vld [vmem:[%s181 + $0x6c] sm:$0xf]
        %v221 = vld [vmem:[%s181 + $0x70] sm:$0xf]
        %v222 = vld [vmem:[%s181 + $0x74] sm:$0xf]
        %v223 = vld [vmem:[%s181 + $0x78] sm:$0xf]
        %v224 = vld [vmem:[%s181 + $0x7c] sm:$0xf]
        %v225 = vld [vmem:[%s181 + $0x80] sm:$0xf]
        %v226 = vld [vmem:[%s181 + $0x84] sm:$0xf]
        %v227 = vld [vmem:[%s181 + $0x88] sm:$0xf]
        %v228 = vld [vmem:[%s181 + $0x8c] sm:$0xf]
        %v229 = vld [vmem:[%s181 + $0x90] sm:$0xf]
        %v230 = vld [vmem:[%s181 + $0x94] sm:$0xf]
        %v231 = vld [vmem:[%s181 + $0x98] sm:$0xf]
        %v232 = vld [vmem:[%s181 + $0x9c] sm:$0xf]
        %v233 = vld [vmem:[%s181 + $0xa0] sm:$0xf]
        %v234 = vld [vmem:[%s181 + $0xa4] sm:$0xf]
        %v235 = vld [vmem:[%s181 + $0xa8] sm:$0xf]
        %v236 = vld [vmem:[%s181 + $0xac] sm:$0xf]
        %v237 = vld [vmem:[%s181 + $0xb0] sm:$0xf]
        %v238 = vld [vmem:[%s181 + $0xb4] sm:$0xf]
        %v239 = vld [vmem:[%s181 + $0xb8] sm:$0xf]
        %v240 = vld [vmem:[%s181 + $0xbc] sm:$0xf]
        %v241 = vld [vmem:[%s181 + $0xc0] sm:$0xf]
        %v242 = vld [vmem:[%s181 + $0xc4] sm:$0xf]
        %v243 = vld [vmem:[%s181 + $0xc8] sm:$0xf]
        %v244 = vld [vmem:[%s181 + $0xcc] sm:$0xf]
        %v245 = vld [vmem:[%s181 + $0xd0] sm:$0xf]
        %v246 = vld [vmem:[%s181 + $0xd4] sm:$0xf]
        %v247 = vld [vmem:[%s181 + $0xd8] sm:$0xf]
        %v248 = vld [vmem:[%s181 + $0xdc] sm:$0xf]
        %v249 = vld [vmem:[%s181 + $0xe0] sm:$0xf]
        %v250 = vld [vmem:[%s181 + $0xe4] sm:$0xf]
        %v251 = vld [vmem:[%s181 + $0xe8] sm:$0xf]
        %v252 = vld [vmem:[%s181 + $0xec] sm:$0xf]
        %v253 = vld [vmem:[%s181 + $0xf0] sm:$0xf]
        %v254 = vld [vmem:[%s181 + $0xf4] sm:$0xf]
        %v255 = vld [vmem:[%s181 + $0xf8] sm:$0xf]
        %v256 = vld [vmem:[%s181 + $0xfc] sm:$0xf]
        %v257 = vld [vmem:[%s1] sm:$0xf]
        %v258 = vld [vmem:[%s1 + $0x4] sm:$0xf]
        %v259 = vld [vmem:[%s1 + $0x8] sm:$0xf]
        %v260 = vld [vmem:[%s1 + $0xc] sm:$0xf]
        %v261 = vld [vmem:[%s1 + $0x10] sm:$0xf]
        %v262 = vld [vmem:[%s1 + $0x14] sm:$0xf]
        %v263 = vld [vmem:[%s1 + $0x18] sm:$0xf]
        %v264 = vld [vmem:[%s1 + $0x1c] sm:$0xf]
        %v265 = vld [vmem:[%s1 + $0x20] sm:$0xf]
        %v266 = vld [vmem:[%s1 + $0x24] sm:$0x3]
        %v267 = vld [vmem:[%s2] sm:$0x1]
        %v269 = vperm.slane %v267, 0
        %v335 = vunpack.c.l.b16 %v193
        %v336 = vunpack.c.l.b16 %v194
        %v337 = vunpack.c.l.b16 %v195
        %v338 = vunpack.c.l.b16 %v196
        %v339 = vunpack.c.l.b16 %v197
        %v340 = vunpack.c.l.b16 %v198
        %v341 = vunpack.c.l.b16 %v199
        %v342 = vunpack.c.l.b16 %v200
        %v343 = vunpack.c.l.b16 %v201
        %v344 = vunpack.c.l.b16 %v202
        %v345 = vunpack.c.l.b16 %v203
        %v346 = vunpack.c.l.b16 %v204
        %v347 = vunpack.c.l.b16 %v205
        %v348 = vunpack.c.l.b16 %v206
        %v349 = vunpack.c.l.b16 %v207
        %v350 = vunpack.c.l.b16 %v208
        %v351 = vunpack.c.l.b16 %v209
        %v352 = vunpack.c.l.b16 %v210
        %v353 = vunpack.c.l.b16 %v211
        %v354 = vunpack.c.l.b16 %v212
        %v355 = vunpack.c.l.b16 %v213
        %v356 = vunpack.c.l.b16 %v214
        %v357 = vunpack.c.l.b16 %v215
        %v358 = vunpack.c.l.b16 %v216
        %v359 = vunpack.c.l.b16 %v217
        %v360 = vunpack.c.l.b16 %v218
        %v361 = vunpack.c.l.b16 %v219
        %v362 = vunpack.c.l.b16 %v220
        %v363 = vunpack.c.l.b16 %v221
        %v364 = vunpack.c.l.b16 %v222
        %v365 = vunpack.c.l.b16 %v223
        %v366 = vunpack.c.l.b16 %v224
        %v367 = vunpack.c.l.b16 %v225
        %v368 = vunpack.c.l.b16 %v226
        %v369 = vunpack.c.l.b16 %v227
        %v370 = vunpack.c.l.b16 %v228
        %v371 = vunpack.c.l.b16 %v229
        %v372 = vunpack.c.l.b16 %v230
        %v373 = vunpack.c.l.b16 %v231
        %v374 = vunpack.c.l.b16 %v232
        %v375 = vunpack.c.l.b16 %v233
        %v376 = vunpack.c.l.b16 %v234
        %v377 = vunpack.c.l.b16 %v235
        %v378 = vunpack.c.l.b16 %v236
        %v379 = vunpack.c.l.b16 %v237
        %v380 = vunpack.c.l.b16 %v238
        %v381 = vunpack.c.l.b16 %v239
        %v382 = vunpack.c.l.b16 %v240
        %v383 = vunpack.c.l.b16 %v241
        %v384 = vunpack.c.l.b16 %v242
        %v385 = vunpack.c.l.b16 %v243
        %v386 = vunpack.c.l.b16 %v244
        %v387 = vunpack.c.l.b16 %v245
        %v388 = vunpack.c.l.b16 %v246
        %v389 = vunpack.c.l.b16 %v247
        %v390 = vunpack.c.l.b16 %v248
        %v391 = vunpack.c.l.b16 %v249
        %v392 = vunpack.c.l.b16 %v250
        %v393 = vunpack.c.l.b16 %v251
        %v394 = vunpack.c.l.b16 %v252
        %v395 = vunpack.c.l.b16 %v253
        %v396 = vunpack.c.l.b16 %v254
        %v397 = vunpack.c.l.b16 %v255
        %v398 = vunpack.c.l.b16 %v256
        %v399 = vpack.c.b16 %v336, %v335
        %v400 = vpack.c.b16 %v338, %v337
        %v401 = vpack.c.b16 %v340, %v339
        %v402 = vpack.c.b16 %v342, %v341
        %v403 = vpack.c.b16 %v344, %v343
        %v404 = vpack.c.b16 %v346, %v345
        %v405 = vpack.c.b16 %v348, %v347
        %v406 = vpack.c.b16 %v350, %v349
        %v407 = vpack.c.b16 %v352, %v351
        %v408 = vpack.c.b16 %v354, %v353
        %v409 = vpack.c.b16 %v356, %v355
        %v410 = vpack.c.b16 %v358, %v357
        %v411 = vpack.c.b16 %v360, %v359
        %v412 = vpack.c.b16 %v362, %v361
        %v413 = vpack.c.b16 %v364, %v363
        %v414 = vpack.c.b16 %v366, %v365
        %v415 = vpack.c.b16 %v368, %v367
        %v416 = vpack.c.b16 %v370, %v369
        %v417 = vpack.c.b16 %v372, %v371
        %v418 = vpack.c.b16 %v374, %v373
        %v419 = vpack.c.b16 %v376, %v375
        %v420 = vpack.c.b16 %v378, %v377
        %v421 = vpack.c.b16 %v380, %v379
        %v422 = vpack.c.b16 %v382, %v381
        %v423 = vpack.c.b16 %v384, %v383
        %v424 = vpack.c.b16 %v386, %v385
        %v425 = vpack.c.b16 %v388, %v387
        %v426 = vpack.c.b16 %v390, %v389
        %v427 = vpack.c.b16 %v392, %v391
        %v428 = vpack.c.b16 %v394, %v393
        %v429 = vpack.c.b16 %v396, %v395
        %v430 = vpack.c.b16 %v398, %v397
        %v441 = vunpack.c.l.b16 %v257
        %v442 = vunpack.c.l.b16 %v258
        %v443 = vunpack.c.l.b16 %v259
        %v444 = vunpack.c.l.b16 %v260
        %v445 = vunpack.c.l.b16 %v261
        %v446 = vunpack.c.l.b16 %v262
        %v447 = vunpack.c.l.b16 %v263
        %v448 = vunpack.c.l.b16 %v264
        %v449 = vunpack.c.l.b16 %v265
        %v450 = vunpack.c.l.b16 %v266
        %v451 = vpack.c.b16 %v442, %v441
        %v452 = vpack.c.b16 %v444, %v443
        %v453 = vpack.c.b16 %v446, %v445
        %v454 = vpack.c.b16 %v448, %v447
        %v455 = vpack.c.b16 %v450, %v449
        %vm460 = vcmask 613376
        %v462 = vsel %vm460, %v399, 0
        %v465 = vsel %vm460, %v400, 0
        %v468 = vsel %vm460, %v401, 0
        %v471 = vsel %vm460, %v402, 0
        %v474 = vsel %vm460, %v403, 0
        %v477 = vsel %vm460, %v404, 0
        %v480 = vsel %vm460, %v405, 0
        %v483 = vsel %vm460, %v406, 0
        %v486 = vsel %vm460, %v407, 0
        %v489 = vsel %vm460, %v408, 0
        %v492 = vsel %vm460, %v409, 0
        %v495 = vsel %vm460, %v410, 0
        %v498 = vsel %vm460, %v411, 0
        %v501 = vsel %vm460, %v412, 0
        %v504 = vsel %vm460, %v413, 0
        %v507 = vsel %vm460, %v414, 0
        %v510 = vsel %vm460, %v415, 0
        %v513 = vsel %vm460, %v416, 0
        %v516 = vsel %vm460, %v417, 0
        %v519 = vsel %vm460, %v418, 0
        %v522 = vsel %vm460, %v419, 0
        %v525 = vsel %vm460, %v420, 0
        %v528 = vsel %vm460, %v421, 0
        %v531 = vsel %vm460, %v422, 0
        %v534 = vsel %vm460, %v423, 0
        %v537 = vsel %vm460, %v424, 0
        %v540 = vsel %vm460, %v425, 0
        %v543 = vsel %vm460, %v426, 0
        %v546 = vsel %vm460, %v427, 0
        %v549 = vsel %vm460, %v428, 0
        %v552 = vsel %vm460, %v429, 0
        %v555 = vsel %vm460, %v430, 0
        %vm557 = vcmask 1044480
        %vm558 = vcmask 1045504
        %v559 = vsel %vm557, 4294967295, 65535
        %v560 = vsel %vm558, %v559, 0
        %v562 = vand.u32 %v455, %v560
        %564 = vmatpush.bf16.msra.mxu0 0
        %565 = vmatpush.bf16.msra.mxu0 0
        %566 = vmatpush.bf16.msra.mxu0 0
        %567 = vmatpush.bf16.msra.mxu0 %v562
        %568 = vmatpush.bf16.msra.mxu0 %v454
        %569 = vmatpush.bf16.msra.mxu0 %v453
        %570 = vmatpush.bf16.msra.mxu0 %v452
        %571 = vmatpush.bf16.msra.mxu0 %v451
        %572 = vmatmul.bf16.gmra.mxu0 %v462
        %v573 = vpop.f32.mrf.mxu0
        %v574 = vadd.f32 %v269, %v573
        %v575 = vpop.f32.mrf.mxu0
        %v576 = vadd.f32 %v269, %v575
        %577 = vmatmul.bf16.gmra.mxu0 %v465
        %v578 = vpop.f32.mrf.mxu0
        %v579 = vadd.f32 %v269, %v578
        %v580 = vpop.f32.mrf.mxu0
        %v581 = vadd.f32 %v269, %v580
        %582 = vmatmul.bf16.gmra.mxu0 %v468
        %v583 = vpop.f32.mrf.mxu0
        %v584 = vadd.f32 %v269, %v583
        %v585 = vpop.f32.mrf.mxu0
        %v586 = vadd.f32 %v269, %v585
        %587 = vmatmul.bf16.gmra.mxu0 %v471
        %v588 = vpop.f32.mrf.mxu0
        %v589 = vadd.f32 %v269, %v588
        %v590 = vpop.f32.mrf.mxu0
        %v591 = vadd.f32 %v269, %v590
        %592 = vmatmul.bf16.gmra.mxu0 %v474
        %v593 = vpop.f32.mrf.mxu0
        %v594 = vadd.f32 %v269, %v593
        %v595 = vpop.f32.mrf.mxu0
        %v596 = vadd.f32 %v269, %v595
        %597 = vmatmul.bf16.gmra.mxu0 %v477
        %v598 = vpop.f32.mrf.mxu0
        %v599 = vadd.f32 %v269, %v598
        %v600 = vpop.f32.mrf.mxu0
        %v601 = vadd.f32 %v269, %v600
        %602 = vmatmul.bf16.gmra.mxu0 %v480
        %v603 = vpop.f32.mrf.mxu0
        %v604 = vadd.f32 %v269, %v603
        %v605 = vpop.f32.mrf.mxu0
        %v606 = vadd.f32 %v269, %v605
        %607 = vmatmul.bf16.gmra.mxu0 %v483
        %v608 = vpop.f32.mrf.mxu0
        %v609 = vadd.f32 %v269, %v608
        %v610 = vpop.f32.mrf.mxu0
        %v611 = vadd.f32 %v269, %v610
        %612 = vmatmul.bf16.gmra.mxu0 %v486
        %v613 = vpop.f32.mrf.mxu0
        %v614 = vadd.f32 %v269, %v613
        %v615 = vpop.f32.mrf.mxu0
        %v616 = vadd.f32 %v269, %v615
        %617 = vmatmul.bf16.gmra.mxu0 %v489
        %v618 = vpop.f32.mrf.mxu0
        %v619 = vadd.f32 %v269, %v618
        %v620 = vpop.f32.mrf.mxu0
        %v621 = vadd.f32 %v269, %v620
        %622 = vmatmul.bf16.gmra.mxu0 %v492
        %v623 = vpop.f32.mrf.mxu0
        %v624 = vadd.f32 %v269, %v623
        %v625 = vpop.f32.mrf.mxu0
        %v626 = vadd.f32 %v269, %v625
        %627 = vmatmul.bf16.gmra.mxu0 %v495
        %v628 = vpop.f32.mrf.mxu0
        %v629 = vadd.f32 %v269, %v628
        %v630 = vpop.f32.mrf.mxu0
        %v631 = vadd.f32 %v269, %v630
        %632 = vmatmul.bf16.gmra.mxu0 %v498
        %v633 = vpop.f32.mrf.mxu0
        %v634 = vadd.f32 %v269, %v633
        %v635 = vpop.f32.mrf.mxu0
        %v636 = vadd.f32 %v269, %v635
        %637 = vmatmul.bf16.gmra.mxu0 %v501
        %v638 = vpop.f32.mrf.mxu0
        %v639 = vadd.f32 %v269, %v638
        %v640 = vpop.f32.mrf.mxu0
        %v641 = vadd.f32 %v269, %v640
        %642 = vmatmul.bf16.gmra.mxu0 %v504
        %v643 = vpop.f32.mrf.mxu0
        %v644 = vadd.f32 %v269, %v643
        %v645 = vpop.f32.mrf.mxu0
        %v646 = vadd.f32 %v269, %v645
        %647 = vmatmul.bf16.gmra.mxu0 %v507
        %v648 = vpop.f32.mrf.mxu0
        %v649 = vadd.f32 %v269, %v648
        %v650 = vpop.f32.mrf.mxu0
        %v651 = vadd.f32 %v269, %v650
        %652 = vmatmul.bf16.gmra.mxu0 %v510
        %v653 = vpop.f32.mrf.mxu0
        %v654 = vadd.f32 %v269, %v653
        %v655 = vpop.f32.mrf.mxu0
        %v656 = vadd.f32 %v269, %v655
        %657 = vmatmul.bf16.gmra.mxu0 %v513
        %v658 = vpop.f32.mrf.mxu0
        %v659 = vadd.f32 %v269, %v658
        %v660 = vpop.f32.mrf.mxu0
        %v661 = vadd.f32 %v269, %v660
        %662 = vmatmul.bf16.gmra.mxu0 %v516
        %v663 = vpop.f32.mrf.mxu0
        %v664 = vadd.f32 %v269, %v663
        %v665 = vpop.f32.mrf.mxu0
        %v666 = vadd.f32 %v269, %v665
        %667 = vmatmul.bf16.gmra.mxu0 %v519
        %v668 = vpop.f32.mrf.mxu0
        %v669 = vadd.f32 %v269, %v668
        %v670 = vpop.f32.mrf.mxu0
        %v671 = vadd.f32 %v269, %v670
        %672 = vmatmul.bf16.gmra.mxu0 %v522
        %v673 = vpop.f32.mrf.mxu0
        %v674 = vadd.f32 %v269, %v673
        %v675 = vpop.f32.mrf.mxu0
        %v676 = vadd.f32 %v269, %v675
        %677 = vmatmul.bf16.gmra.mxu0 %v525
        %v678 = vpop.f32.mrf.mxu0
        %v679 = vadd.f32 %v269, %v678
        %v680 = vpop.f32.mrf.mxu0
        %v681 = vadd.f32 %v269, %v680
        %682 = vmatmul.bf16.gmra.mxu0 %v528
        %v683 = vpop.f32.mrf.mxu0
        %v684 = vadd.f32 %v269, %v683
        %v685 = vpop.f32.mrf.mxu0
        %v686 = vadd.f32 %v269, %v685
        %687 = vmatmul.bf16.gmra.mxu0 %v531
        %v688 = vpop.f32.mrf.mxu0
        %v689 = vadd.f32 %v269, %v688
        %v690 = vpop.f32.mrf.mxu0
        %v691 = vadd.f32 %v269, %v690
        %692 = vmatmul.bf16.gmra.mxu0 %v534
        %v693 = vpop.f32.mrf.mxu0
        %v694 = vadd.f32 %v269, %v693
        %v695 = vpop.f32.mrf.mxu0
        %v696 = vadd.f32 %v269, %v695
        %697 = vmatmul.bf16.gmra.mxu0 %v537
        %v698 = vpop.f32.mrf.mxu0
        %v699 = vadd.f32 %v269, %v698
        %v700 = vpop.f32.mrf.mxu0
        %v701 = vadd.f32 %v269, %v700
        %702 = vmatmul.bf16.gmra.mxu0 %v540
        %v703 = vpop.f32.mrf.mxu0
        %v704 = vadd.f32 %v269, %v703
        %v705 = vpop.f32.mrf.mxu0
        %v706 = vadd.f32 %v269, %v705
        %707 = vmatmul.bf16.gmra.mxu0 %v543
        %v708 = vpop.f32.mrf.mxu0
        %v709 = vadd.f32 %v269, %v708
        %v710 = vpop.f32.mrf.mxu0
        %v711 = vadd.f32 %v269, %v710
        %712 = vmatmul.bf16.gmra.mxu0 %v546
        %v713 = vpop.f32.mrf.mxu0
        %v714 = vadd.f32 %v269, %v713
        %v715 = vpop.f32.mrf.mxu0
        %v716 = vadd.f32 %v269, %v715
        %717 = vmatmul.bf16.gmra.mxu0 %v549
        %v718 = vpop.f32.mrf.mxu0
        %v719 = vadd.f32 %v269, %v718
        %v720 = vpop.f32.mrf.mxu0
        %v721 = vadd.f32 %v269, %v720
        %722 = vmatmul.bf16.gmra.mxu0 %v552
        %v723 = vpop.f32.mrf.mxu0
        %v724 = vadd.f32 %v269, %v723
        %v725 = vpop.f32.mrf.mxu0
        %v726 = vadd.f32 %v269, %v725
        %727 = vmatmul.bf16.gmra.mxu0 %v555
        %v728 = vpop.f32.mrf.mxu0
        %v729 = vadd.f32 %v269, %v728
        %v730 = vpop.f32.mrf.mxu0
        %v731 = vadd.f32 %v269, %v730
        %732 = vdwg.mxu0
        %v733 = vmax.f32 %v574, 0.0
        %v734 = vmax.f32 %v576, 0.0
        %v735 = vmax.f32 %v579, 0.0
        %v736 = vmax.f32 %v581, 0.0
        %v737 = vmax.f32 %v584, 0.0
        %v738 = vmax.f32 %v586, 0.0
        %v739 = vmax.f32 %v589, 0.0
        %v740 = vmax.f32 %v591, 0.0
        %v741 = vmax.f32 %v594, 0.0
        %v742 = vmax.f32 %v596, 0.0
        %v743 = vmax.f32 %v599, 0.0
        %v744 = vmax.f32 %v601, 0.0
        %v745 = vmax.f32 %v604, 0.0
        %v746 = vmax.f32 %v606, 0.0
        %v747 = vmax.f32 %v609, 0.0
        %v748 = vmax.f32 %v611, 0.0
        %v749 = vmax.f32 %v614, 0.0
        %v750 = vmax.f32 %v616, 0.0
        %v751 = vmax.f32 %v619, 0.0
        %v752 = vmax.f32 %v621, 0.0
        %v753 = vmax.f32 %v624, 0.0
        %v754 = vmax.f32 %v626, 0.0
        %v755 = vmax.f32 %v629, 0.0
        %v756 = vmax.f32 %v631, 0.0
        %v757 = vmax.f32 %v634, 0.0
        %v758 = vmax.f32 %v636, 0.0
        %v759 = vmax.f32 %v639, 0.0
        %v760 = vmax.f32 %v641, 0.0
        %v761 = vmax.f32 %v644, 0.0
        %v762 = vmax.f32 %v646, 0.0
        %v763 = vmax.f32 %v649, 0.0
        %v764 = vmax.f32 %v651, 0.0
        %v765 = vmax.f32 %v654, 0.0
        %v766 = vmax.f32 %v656, 0.0
        %v767 = vmax.f32 %v659, 0.0
        %v768 = vmax.f32 %v661, 0.0
        %v769 = vmax.f32 %v664, 0.0
        %v770 = vmax.f32 %v666, 0.0
        %v771 = vmax.f32 %v669, 0.0
        %v772 = vmax.f32 %v671, 0.0
        %v773 = vmax.f32 %v674, 0.0
        %v774 = vmax.f32 %v676, 0.0
        %v775 = vmax.f32 %v679, 0.0
        %v776 = vmax.f32 %v681, 0.0
        %v777 = vmax.f32 %v684, 0.0
        %v778 = vmax.f32 %v686, 0.0
        %v779 = vmax.f32 %v689, 0.0
        %v780 = vmax.f32 %v691, 0.0
        %v781 = vmax.f32 %v694, 0.0
        %v782 = vmax.f32 %v696, 0.0
        %v783 = vmax.f32 %v699, 0.0
        %v784 = vmax.f32 %v701, 0.0
        %v785 = vmax.f32 %v704, 0.0
        %v786 = vmax.f32 %v706, 0.0
        %v787 = vmax.f32 %v709, 0.0
        %v788 = vmax.f32 %v711, 0.0
        %v789 = vmax.f32 %v714, 0.0
        %v790 = vmax.f32 %v716, 0.0
        %v791 = vmax.f32 %v719, 0.0
        %v792 = vmax.f32 %v721, 0.0
        %v793 = vmax.f32 %v724, 0.0
        %v794 = vmax.f32 %v726, 0.0
        %v795 = vmax.f32 %v729, 0.0
        %v796 = vmax.f32 %v731, 0.0
        %v797 = vpack.c.bf16 %v733, %v733
        %v798 = vpack.c.bf16 %v734, %v734
        %v799 = vpack.c.bf16 %v735, %v735
        %v800 = vpack.c.bf16 %v736, %v736
        %v801 = vpack.c.bf16 %v737, %v737
        %v802 = vpack.c.bf16 %v738, %v738
        %v803 = vpack.c.bf16 %v739, %v739
        %v804 = vpack.c.bf16 %v740, %v740
        %v805 = vpack.c.bf16 %v741, %v741
        %v806 = vpack.c.bf16 %v742, %v742
        %v807 = vpack.c.bf16 %v743, %v743
        %v808 = vpack.c.bf16 %v744, %v744
        %v809 = vpack.c.bf16 %v745, %v745
        %v810 = vpack.c.bf16 %v746, %v746
        %v811 = vpack.c.bf16 %v747, %v747
        %v812 = vpack.c.bf16 %v748, %v748
        %v813 = vpack.c.bf16 %v749, %v749
        %v814 = vpack.c.bf16 %v750, %v750
        %v815 = vpack.c.bf16 %v751, %v751
        %v816 = vpack.c.bf16 %v752, %v752
        %v817 = vpack.c.bf16 %v753, %v753
        %v818 = vpack.c.bf16 %v754, %v754
        %v819 = vpack.c.bf16 %v755, %v755
        %v820 = vpack.c.bf16 %v756, %v756
        %v821 = vpack.c.bf16 %v757, %v757
        %v822 = vpack.c.bf16 %v758, %v758
        %v823 = vpack.c.bf16 %v759, %v759
        %v824 = vpack.c.bf16 %v760, %v760
        %v825 = vpack.c.bf16 %v761, %v761
        %v826 = vpack.c.bf16 %v762, %v762
        %v827 = vpack.c.bf16 %v763, %v763
        %v828 = vpack.c.bf16 %v764, %v764
        %v829 = vpack.c.bf16 %v765, %v765
        %v830 = vpack.c.bf16 %v766, %v766
        %v831 = vpack.c.bf16 %v767, %v767
        %v832 = vpack.c.bf16 %v768, %v768
        %v833 = vpack.c.bf16 %v769, %v769
        %v834 = vpack.c.bf16 %v770, %v770
        %v835 = vpack.c.bf16 %v771, %v771
        %v836 = vpack.c.bf16 %v772, %v772
        %v837 = vpack.c.bf16 %v773, %v773
        %v838 = vpack.c.bf16 %v774, %v774
        %v839 = vpack.c.bf16 %v775, %v775
        %v840 = vpack.c.bf16 %v776, %v776
        %v841 = vpack.c.bf16 %v777, %v777
        %v842 = vpack.c.bf16 %v778, %v778
        %v843 = vpack.c.bf16 %v779, %v779
        %v844 = vpack.c.bf16 %v780, %v780
        %v845 = vpack.c.bf16 %v781, %v781
        %v846 = vpack.c.bf16 %v782, %v782
        %v847 = vpack.c.bf16 %v783, %v783
        %v848 = vpack.c.bf16 %v784, %v784
        %v849 = vpack.c.bf16 %v785, %v785
        %v850 = vpack.c.bf16 %v786, %v786
        %v851 = vpack.c.bf16 %v787, %v787
        %v852 = vpack.c.bf16 %v788, %v788
        %v853 = vpack.c.bf16 %v789, %v789
        %v854 = vpack.c.bf16 %v790, %v790
        %v855 = vpack.c.bf16 %v791, %v791
        %v856 = vpack.c.bf16 %v792, %v792
        %v857 = vpack.c.bf16 %v793, %v793
        %v858 = vpack.c.bf16 %v794, %v794
        %v859 = vpack.c.bf16 %v795, %v795
        %v860 = vpack.c.bf16 %v796, %v796
        %vm861 = vcmask 191488
        %862 = vst.msk [vmem:[%s172] sm:$0xf] %vm861, %v797
        %863 = vst.msk [vmem:[%s172 + $0x4] sm:$0xf] %vm861, %v798
        %864 = vst.msk [vmem:[%s172 + $0x8] sm:$0xf] %vm861, %v799
        %865 = vst.msk [vmem:[%s172 + $0xc] sm:$0xf] %vm861, %v800
        %866 = vst.msk [vmem:[%s172 + $0x10] sm:$0xf] %vm861, %v801
        %867 = vst.msk [vmem:[%s172 + $0x14] sm:$0xf] %vm861, %v802
        %868 = vst.msk [vmem:[%s172 + $0x18] sm:$0xf] %vm861, %v803
        %869 = vst.msk [vmem:[%s172 + $0x1c] sm:$0xf] %vm861, %v804
        %870 = vst.msk [vmem:[%s172 + $0x20] sm:$0xf] %vm861, %v805
        %871 = vst.msk [vmem:[%s172 + $0x24] sm:$0xf] %vm861, %v806
        %872 = vst.msk [vmem:[%s172 + $0x28] sm:$0xf] %vm861, %v807
        %873 = vst.msk [vmem:[%s172 + $0x2c] sm:$0xf] %vm861, %v808
        %874 = vst.msk [vmem:[%s172 + $0x30] sm:$0xf] %vm861, %v809
        %875 = vst.msk [vmem:[%s172 + $0x34] sm:$0xf] %vm861, %v810
        %876 = vst.msk [vmem:[%s172 + $0x38] sm:$0xf] %vm861, %v811
        %877 = vst.msk [vmem:[%s172 + $0x3c] sm:$0xf] %vm861, %v812
        %878 = vst.msk [vmem:[%s172 + $0x40] sm:$0xf] %vm861, %v813
        %879 = vst.msk [vmem:[%s172 + $0x44] sm:$0xf] %vm861, %v814
        %880 = vst.msk [vmem:[%s172 + $0x48] sm:$0xf] %vm861, %v815
        %881 = vst.msk [vmem:[%s172 + $0x4c] sm:$0xf] %vm861, %v816
        %882 = vst.msk [vmem:[%s172 + $0x50] sm:$0xf] %vm861, %v817
        %883 = vst.msk [vmem:[%s172 + $0x54] sm:$0xf] %vm861, %v818
        %884 = vst.msk [vmem:[%s172 + $0x58] sm:$0xf] %vm861, %v819
        %885 = vst.msk [vmem:[%s172 + $0x5c] sm:$0xf] %vm861, %v820
        %886 = vst.msk [vmem:[%s172 + $0x60] sm:$0xf] %vm861, %v821
        %887 = vst.msk [vmem:[%s172 + $0x64] sm:$0xf] %vm861, %v822
        %888 = vst.msk [vmem:[%s172 + $0x68] sm:$0xf] %vm861, %v823
        %889 = vst.msk [vmem:[%s172 + $0x6c] sm:$0xf] %vm861, %v824
        %890 = vst.msk [vmem:[%s172 + $0x70] sm:$0xf] %vm861, %v825
        %891 = vst.msk [vmem:[%s172 + $0x74] sm:$0xf] %vm861, %v826
        %892 = vst.msk [vmem:[%s172 + $0x78] sm:$0xf] %vm861, %v827
        %893 = vst.msk [vmem:[%s172 + $0x7c] sm:$0xf] %vm861, %v828
        %894 = vst.msk [vmem:[%s172 + $0x80] sm:$0xf] %vm861, %v829
        %895 = vst.msk [vmem:[%s172 + $0x84] sm:$0xf] %vm861, %v830
        %896 = vst.msk [vmem:[%s172 + $0x88] sm:$0xf] %vm861, %v831
        %897 = vst.msk [vmem:[%s172 + $0x8c] sm:$0xf] %vm861, %v832
        %898 = vst.msk [vmem:[%s172 + $0x90] sm:$0xf] %vm861, %v833
        %899 = vst.msk [vmem:[%s172 + $0x94] sm:$0xf] %vm861, %v834
        %900 = vst.msk [vmem:[%s172 + $0x98] sm:$0xf] %vm861, %v835
        %901 = vst.msk [vmem:[%s172 + $0x9c] sm:$0xf] %vm861, %v836
        %902 = vst.msk [vmem:[%s172 + $0xa0] sm:$0xf] %vm861, %v837
        %903 = vst.msk [vmem:[%s172 + $0xa4] sm:$0xf] %vm861, %v838
        %904 = vst.msk [vmem:[%s172 + $0xa8] sm:$0xf] %vm861, %v839
        %905 = vst.msk [vmem:[%s172 + $0xac] sm:$0xf] %vm861, %v840
        %906 = vst.msk [vmem:[%s172 + $0xb0] sm:$0xf] %vm861, %v841
        %907 = vst.msk [vmem:[%s172 + $0xb4] sm:$0xf] %vm861, %v842
        %908 = vst.msk [vmem:[%s172 + $0xb8] sm:$0xf] %vm861, %v843
        %909 = vst.msk [vmem:[%s172 + $0xbc] sm:$0xf] %vm861, %v844
        %910 = vst.msk [vmem:[%s172 + $0xc0] sm:$0xf] %vm861, %v845
        %911 = vst.msk [vmem:[%s172 + $0xc4] sm:$0xf] %vm861, %v846
        %912 = vst.msk [vmem:[%s172 + $0xc8] sm:$0xf] %vm861, %v847
        %913 = vst.msk [vmem:[%s172 + $0xcc] sm:$0xf] %vm861, %v848
        %914 = vst.msk [vmem:[%s172 + $0xd0] sm:$0xf] %vm861, %v849
        %915 = vst.msk [vmem:[%s172 + $0xd4] sm:$0xf] %vm861, %v850
        %916 = vst.msk [vmem:[%s172 + $0xd8] sm:$0xf] %vm861, %v851
        %917 = vst.msk [vmem:[%s172 + $0xdc] sm:$0xf] %vm861, %v852
        %918 = vst.msk [vmem:[%s172 + $0xe0] sm:$0xf] %vm861, %v853
        %919 = vst.msk [vmem:[%s172 + $0xe4] sm:$0xf] %vm861, %v854
        %920 = vst.msk [vmem:[%s172 + $0xe8] sm:$0xf] %vm861, %v855
        %921 = vst.msk [vmem:[%s172 + $0xec] sm:$0xf] %vm861, %v856
        %922 = vst.msk [vmem:[%s172 + $0xf0] sm:$0xf] %vm861, %v857
        %923 = vst.msk [vmem:[%s172 + $0xf4] sm:$0xf] %vm861, %v858
        %924 = vst.msk [vmem:[%s172 + $0xf8] sm:$0xf] %vm861, %v859
        %925 = vst.msk [vmem:[%s172 + $0xfc] sm:$0xf] %vm861, %v860
        %s926 = sand.u32 %s90, 1
        %s927 = sand.u32 %s90, 1
        %s928 = smul.addr %s927, 256
        %s929 = scalar_lea.vmem [#allocation2], %s928
        // Predicated region
        $region33: #{dave2v1_forward.4} parent=31 // pred_check
          %p930 = pneg %p100
        $region34: #{dave2v1_forward.4} parent=31 // pred_check_branch
          %932 = sbr.rel (%p930) target = $region36
        $region35: #{dave2v1_forward.4} parent=31 // pred_region
          %s933 = smul.u32 64, %s14
          %s934 = ssub.s32 225, %s933
          %p935 = scmp.lt.s32.totalorder %s934, 64
          %s936 = scalar_select %p935, %s934, 64
          %s937 = smul.u32 4, %s936
          %p938 = scmp.ne.s32.totalorder 0, %s937
          %s939 = smul.addr %s933, 4
          %s940 = scalar_lea.vmem %s3, %s939
          // Predicated region
          $region37: #{dave2v1_forward.4} parent=35 // pred_check
            %p941 = pneg %p938
          $region38: #{dave2v1_forward.4} parent=35 // pred_check_branch
            %943 = sbr.rel (%p941) target = $region40
          $region39: #{dave2v1_forward.4} parent=35 // pred_region
            // Predicated region
            $region41: #{dave2v1_forward.4} parent=39 // pred_check
              _
            $region42: #{dave2v1_forward.4} parent=39 // pred_check_branch
              %945 = sbr.rel target = $region44
            $region43: #{dave2v1_forward.4} parent=39 // pred_region
              // Predicated region
              $region63: #{dave2v1_forward.4} parent=43 // pred_check
                _
              $region64: #{dave2v1_forward.4} parent=43 // pred_check_branch
                %1057 = sbr.rel (0) target = $region66
              $region65: #{dave2v1_forward.4} parent=43 // pred_region
                %s1059 = ssub.s32 16, 1
                %s1060 = sshrl.u32 %s936, 5
                // While loop
                $region67: #{dave2v1_forward.4} parent=65 // loop_pre_header
                  _
                $region68: #{dave2v1_forward.4} parent=65 // loop_header
                  %s1062 = sphi 0, %s1064
                  %p1063 = scmp.ge.s32.totalorder %s1062, %s1060
                  %s1067 = sphi 0, %s1136
                  %s1068 = sphi %s929, %s1139
                  %s1069 = sphi %s940, %s1140
                $region69: #{dave2v1_forward.4} parent=65 // loop_header_branch
                  %1066 = sbr.rel (%p1063) target = $region73
                $region70: #{dave2v1_forward.4} parent=65 // loop_body
                  %v1070 = vld [vmem:[%s1068] sm:%s1059]
                  %1071 = vst [vmem:[%s1069] sm:%s1059] %v1070
                  %v1072 = vld [vmem:[%s1068 + $0x4] sm:%s1059]
                  %1073 = vst [vmem:[%s1069 + $0x4] sm:%s1059] %v1072
                  %v1074 = vld [vmem:[%s1068 + $0x8] sm:%s1059]
                  %1075 = vst [vmem:[%s1069 + $0x8] sm:%s1059] %v1074
                  %v1076 = vld [vmem:[%s1068 + $0xc] sm:%s1059]
                  %1077 = vst [vmem:[%s1069 + $0xc] sm:%s1059] %v1076
                  %v1078 = vld [vmem:[%s1068 + $0x10] sm:%s1059]
                  %1079 = vst [vmem:[%s1069 + $0x10] sm:%s1059] %v1078
                  %v1080 = vld [vmem:[%s1068 + $0x14] sm:%s1059]
                  %1081 = vst [vmem:[%s1069 + $0x14] sm:%s1059] %v1080
                  %v1082 = vld [vmem:[%s1068 + $0x18] sm:%s1059]
                  %1083 = vst [vmem:[%s1069 + $0x18] sm:%s1059] %v1082
                  %v1084 = vld [vmem:[%s1068 + $0x1c] sm:%s1059]
                  %1085 = vst [vmem:[%s1069 + $0x1c] sm:%s1059] %v1084
                  %v1086 = vld [vmem:[%s1068 + $0x20] sm:%s1059]
                  %1087 = vst [vmem:[%s1069 + $0x20] sm:%s1059] %v1086
                  %v1088 = vld [vmem:[%s1068 + $0x24] sm:%s1059]
                  %1089 = vst [vmem:[%s1069 + $0x24] sm:%s1059] %v1088
                  %v1090 = vld [vmem:[%s1068 + $0x28] sm:%s1059]
                  %1091 = vst [vmem:[%s1069 + $0x28] sm:%s1059] %v1090
                  %v1092 = vld [vmem:[%s1068 + $0x2c] sm:%s1059]
                  %1093 = vst [vmem:[%s1069 + $0x2c] sm:%s1059] %v1092
                  %v1094 = vld [vmem:[%s1068 + $0x30] sm:%s1059]
                  %1095 = vst [vmem:[%s1069 + $0x30] sm:%s1059] %v1094
                  %v1096 = vld [vmem:[%s1068 + $0x34] sm:%s1059]
                  %1097 = vst [vmem:[%s1069 + $0x34] sm:%s1059] %v1096
                  %v1098 = vld [vmem:[%s1068 + $0x38] sm:%s1059]
                  %1099 = vst [vmem:[%s1069 + $0x38] sm:%s1059] %v1098
                  %v1100 = vld [vmem:[%s1068 + $0x3c] sm:%s1059]
                  %1101 = vst [vmem:[%s1069 + $0x3c] sm:%s1059] %v1100
                  %v1102 = vld [vmem:[%s1068 + $0x40] sm:%s1059]
                  %1103 = vst [vmem:[%s1069 + $0x40] sm:%s1059] %v1102
                  %v1104 = vld [vmem:[%s1068 + $0x44] sm:%s1059]
                  %1105 = vst [vmem:[%s1069 + $0x44] sm:%s1059] %v1104
                  %v1106 = vld [vmem:[%s1068 + $0x48] sm:%s1059]
                  %1107 = vst [vmem:[%s1069 + $0x48] sm:%s1059] %v1106
                  %v1108 = vld [vmem:[%s1068 + $0x4c] sm:%s1059]
                  %1109 = vst [vmem:[%s1069 + $0x4c] sm:%s1059] %v1108
                  %v1110 = vld [vmem:[%s1068 + $0x50] sm:%s1059]
                  %1111 = vst [vmem:[%s1069 + $0x50] sm:%s1059] %v1110
                  %v1112 = vld [vmem:[%s1068 + $0x54] sm:%s1059]
                  %1113 = vst [vmem:[%s1069 + $0x54] sm:%s1059] %v1112
                  %v1114 = vld [vmem:[%s1068 + $0x58] sm:%s1059]
                  %1115 = vst [vmem:[%s1069 + $0x58] sm:%s1059] %v1114
                  %v1116 = vld [vmem:[%s1068 + $0x5c] sm:%s1059]
                  %1117 = vst [vmem:[%s1069 + $0x5c] sm:%s1059] %v1116
                  %v1118 = vld [vmem:[%s1068 + $0x60] sm:%s1059]
                  %1119 = vst [vmem:[%s1069 + $0x60] sm:%s1059] %v1118
                  %v1120 = vld [vmem:[%s1068 + $0x64] sm:%s1059]
                  %1121 = vst [vmem:[%s1069 + $0x64] sm:%s1059] %v1120
                  %v1122 = vld [vmem:[%s1068 + $0x68] sm:%s1059]
                  %1123 = vst [vmem:[%s1069 + $0x68] sm:%s1059] %v1122
                  %v1124 = vld [vmem:[%s1068 + $0x6c] sm:%s1059]
                  %1125 = vst [vmem:[%s1069 + $0x6c] sm:%s1059] %v1124
                  %v1126 = vld [vmem:[%s1068 + $0x70] sm:%s1059]
                  %1127 = vst [vmem:[%s1069 + $0x70] sm:%s1059] %v1126
                  %v1128 = vld [vmem:[%s1068 + $0x74] sm:%s1059]
                  %1129 = vst [vmem:[%s1069 + $0x74] sm:%s1059] %v1128
                  %v1130 = vld [vmem:[%s1068 + $0x78] sm:%s1059]
                  %1131 = vst [vmem:[%s1069 + $0x78] sm:%s1059] %v1130
                  %v1132 = vld [vmem:[%s1068 + $0x7c] sm:%s1059]
                  %1133 = vst [vmem:[%s1069 + $0x7c] sm:%s1059] %v1132
                  %s1134 = sadd.s32 1, %s1067
                  %p1135 = scmp.ge.s32.totalorder %s1134, %s1060
                  %s1136 = scalar_select %p1135, 0, %s1134
                  %s1137 = smul.u32 %s1136, 128
                  %s1138 = smul.u32 %s1136, 128
                  %s1139 = scalar_lea.vmem %s929, %s1137 [#allocation2]
                  %s1140 = scalar_lea.vmem %s940, %s1138
                $region71: #{dave2v1_forward.4} parent=65 // loop_footer
                  %s1064 = sadd.s32 %s1062, 1
                $region72: #{dave2v1_forward.4} parent=65 // loop_footer_branch
                  %1061 = sbr.rel target = $region68
                $region73: #{dave2v1_forward.4} parent=65 // loop_exit
                  _
                %s1141 = sshrl.u32 %s936, 5
                %s1142 = sand.u32 %s936, 31
                %s1143 = smul.u32 %s1141, 32
                %s1144 = smul.u32 4, %s1143
                %s1145 = scalar_lea.vmem %s929, %s1144 [#allocation2]
                %s1146 = smul.u32 4, %s1143
                %s1147 = scalar_lea.vmem %s940, %s1146
                // While loop
                $region74: #{dave2v1_forward.4} parent=65 // loop_pre_header
                  _
                $region75: #{dave2v1_forward.4} parent=65 // loop_header
                  %s1149 = sphi 0, %s1151
                  %p1150 = scmp.ge.s32.totalorder %s1149, %s1142
                  %s1154 = sphi 0, %s1161
                  %s1155 = sphi %s1145, %s1164
                  %s1156 = sphi %s1147, %s1165
                $region76: #{dave2v1_forward.4} parent=65 // loop_header_branch
                  %1153 = sbr.rel (%p1150) target = $region80
                $region77: #{dave2v1_forward.4} parent=65 // loop_body
                  %v1157 = vld [vmem:[%s1155] sm:%s1059]
                  %1158 = vst [vmem:[%s1156] sm:%s1059] %v1157
                  %s1159 = sadd.s32 1, %s1154
                  %p1160 = scmp.ge.s32.totalorder %s1159, %s1142
                  %s1161 = scalar_select %p1160, 0, %s1159
                  %s1162 = smul.u32 %s1161, 4
                  %s1163 = smul.u32 %s1161, 4
                  %s1164 = scalar_lea.vmem %s1145, %s1162 [#allocation2]
                  %s1165 = scalar_lea.vmem %s1147, %s1163
                $region78: #{dave2v1_forward.4} parent=65 // loop_footer
                  %s1151 = sadd.s32 %s1149, 1
                $region79: #{dave2v1_forward.4} parent=65 // loop_footer_branch
                  %1148 = sbr.rel target = $region75
                $region80: #{dave2v1_forward.4} parent=65 // loop_exit
                  _
              $region66: #{dave2v1_forward.4} parent=43 // pred_fallthru
                _
            $region44: #{dave2v1_forward.4} parent=39 // pred_fallthru
              _
            // Predicated region
            $region45: #{dave2v1_forward.4} parent=39 // pred_check
              _
            $region46: #{dave2v1_forward.4} parent=39 // pred_check_branch
              %947 = sbr.rel (0) target = $region48
            $region47: #{dave2v1_forward.4} parent=39 // pred_region
              %s949 = ssub.s32 16, 1
              %s950 = sshrl.u32 %s936, 5
              // While loop
              $region49: #{dave2v1_forward.4} parent=47 // loop_pre_header
                _
              $region50: #{dave2v1_forward.4} parent=47 // loop_header
                %s952 = sphi 0, %s954
                %p953 = scmp.ge.s32.totalorder %s952, %s950
                %s957 = sphi 0, %s1026
                %s958 = sphi %s929, %s1029
                %s959 = sphi %s940, %s1030
              $region51: #{dave2v1_forward.4} parent=47 // loop_header_branch
                %956 = sbr.rel (%p953) target = $region55
              $region52: #{dave2v1_forward.4} parent=47 // loop_body
                %v960 = vld [vmem:[%s958] sm:%s949]
                %961 = vst [vmem:[%s959] sm:%s949] %v960
                %v962 = vld [vmem:[%s958 + $0x4] sm:%s949]
                %963 = vst [vmem:[%s959 + $0x4] sm:%s949] %v962
                %v964 = vld [vmem:[%s958 + $0x8] sm:%s949]
                %965 = vst [vmem:[%s959 + $0x8] sm:%s949] %v964
                %v966 = vld [vmem:[%s958 + $0xc] sm:%s949]
                %967 = vst [vmem:[%s959 + $0xc] sm:%s949] %v966
                %v968 = vld [vmem:[%s958 + $0x10] sm:%s949]
                %969 = vst [vmem:[%s959 + $0x10] sm:%s949] %v968
                %v970 = vld [vmem:[%s958 + $0x14] sm:%s949]
                %971 = vst [vmem:[%s959 + $0x14] sm:%s949] %v970
                %v972 = vld [vmem:[%s958 + $0x18] sm:%s949]
                %973 = vst [vmem:[%s959 + $0x18] sm:%s949] %v972
                %v974 = vld [vmem:[%s958 + $0x1c] sm:%s949]
                %975 = vst [vmem:[%s959 + $0x1c] sm:%s949] %v974
                %v976 = vld [vmem:[%s958 + $0x20] sm:%s949]
                %977 = vst [vmem:[%s959 + $0x20] sm:%s949] %v976
                %v978 = vld [vmem:[%s958 + $0x24] sm:%s949]
                %979 = vst [vmem:[%s959 + $0x24] sm:%s949] %v978
                %v980 = vld [vmem:[%s958 + $0x28] sm:%s949]
                %981 = vst [vmem:[%s959 + $0x28] sm:%s949] %v980
                %v982 = vld [vmem:[%s958 + $0x2c] sm:%s949]
                %983 = vst [vmem:[%s959 + $0x2c] sm:%s949] %v982
                %v984 = vld [vmem:[%s958 + $0x30] sm:%s949]
                %985 = vst [vmem:[%s959 + $0x30] sm:%s949] %v984
                %v986 = vld [vmem:[%s958 + $0x34] sm:%s949]
                %987 = vst [vmem:[%s959 + $0x34] sm:%s949] %v986
                %v988 = vld [vmem:[%s958 + $0x38] sm:%s949]
                %989 = vst [vmem:[%s959 + $0x38] sm:%s949] %v988
                %v990 = vld [vmem:[%s958 + $0x3c] sm:%s949]
                %991 = vst [vmem:[%s959 + $0x3c] sm:%s949] %v990
                %v992 = vld [vmem:[%s958 + $0x40] sm:%s949]
                %993 = vst [vmem:[%s959 + $0x40] sm:%s949] %v992
                %v994 = vld [vmem:[%s958 + $0x44] sm:%s949]
                %995 = vst [vmem:[%s959 + $0x44] sm:%s949] %v994
                %v996 = vld [vmem:[%s958 + $0x48] sm:%s949]
                %997 = vst [vmem:[%s959 + $0x48] sm:%s949] %v996
                %v998 = vld [vmem:[%s958 + $0x4c] sm:%s949]
                %999 = vst [vmem:[%s959 + $0x4c] sm:%s949] %v998
                %v1000 = vld [vmem:[%s958 + $0x50] sm:%s949]
                %1001 = vst [vmem:[%s959 + $0x50] sm:%s949] %v1000
                %v1002 = vld [vmem:[%s958 + $0x54] sm:%s949]
                %1003 = vst [vmem:[%s959 + $0x54] sm:%s949] %v1002
                %v1004 = vld [vmem:[%s958 + $0x58] sm:%s949]
                %1005 = vst [vmem:[%s959 + $0x58] sm:%s949] %v1004
                %v1006 = vld [vmem:[%s958 + $0x5c] sm:%s949]
                %1007 = vst [vmem:[%s959 + $0x5c] sm:%s949] %v1006
                %v1008 = vld [vmem:[%s958 + $0x60] sm:%s949]
                %1009 = vst [vmem:[%s959 + $0x60] sm:%s949] %v1008
                %v1010 = vld [vmem:[%s958 + $0x64] sm:%s949]
                %1011 = vst [vmem:[%s959 + $0x64] sm:%s949] %v1010
                %v1012 = vld [vmem:[%s958 + $0x68] sm:%s949]
                %1013 = vst [vmem:[%s959 + $0x68] sm:%s949] %v1012
                %v1014 = vld [vmem:[%s958 + $0x6c] sm:%s949]
                %1015 = vst [vmem:[%s959 + $0x6c] sm:%s949] %v1014
                %v1016 = vld [vmem:[%s958 + $0x70] sm:%s949]
                %1017 = vst [vmem:[%s959 + $0x70] sm:%s949] %v1016
                %v1018 = vld [vmem:[%s958 + $0x74] sm:%s949]
                %1019 = vst [vmem:[%s959 + $0x74] sm:%s949] %v1018
                %v1020 = vld [vmem:[%s958 + $0x78] sm:%s949]
                %1021 = vst [vmem:[%s959 + $0x78] sm:%s949] %v1020
                %v1022 = vld [vmem:[%s958 + $0x7c] sm:%s949]
                %1023 = vst [vmem:[%s959 + $0x7c] sm:%s949] %v1022
                %s1024 = sadd.s32 1, %s957
                %p1025 = scmp.ge.s32.totalorder %s1024, %s950
                %s1026 = scalar_select %p1025, 0, %s1024
                %s1027 = smul.u32 %s1026, 128
                %s1028 = smul.u32 %s1026, 128
                %s1029 = scalar_lea.vmem %s929, %s1027 [#allocation2]
                %s1030 = scalar_lea.vmem %s940, %s1028
              $region53: #{dave2v1_forward.4} parent=47 // loop_footer
                %s954 = sadd.s32 %s952, 1
              $region54: #{dave2v1_forward.4} parent=47 // loop_footer_branch
                %951 = sbr.rel target = $region50
              $region55: #{dave2v1_forward.4} parent=47 // loop_exit
                _
              %s1031 = sshrl.u32 %s936, 5
              %s1032 = sand.u32 %s936, 31
              %s1033 = smul.u32 %s1031, 32
              %s1034 = smul.u32 4, %s1033
              %s1035 = scalar_lea.vmem %s929, %s1034 [#allocation2]
              %s1036 = smul.u32 4, %s1033
              %s1037 = scalar_lea.vmem %s940, %s1036
              // While loop
              $region56: #{dave2v1_forward.4} parent=47 // loop_pre_header
                _
              $region57: #{dave2v1_forward.4} parent=47 // loop_header
                %s1039 = sphi 0, %s1041
                %p1040 = scmp.ge.s32.totalorder %s1039, %s1032
                %s1044 = sphi 0, %s1051
                %s1045 = sphi %s1035, %s1054
                %s1046 = sphi %s1037, %s1055
              $region58: #{dave2v1_forward.4} parent=47 // loop_header_branch
                %1043 = sbr.rel (%p1040) target = $region62
              $region59: #{dave2v1_forward.4} parent=47 // loop_body
                %v1047 = vld [vmem:[%s1045] sm:%s949]
                %1048 = vst [vmem:[%s1046] sm:%s949] %v1047
                %s1049 = sadd.s32 1, %s1044
                %p1050 = scmp.ge.s32.totalorder %s1049, %s1032
                %s1051 = scalar_select %p1050, 0, %s1049
                %s1052 = smul.u32 %s1051, 4
                %s1053 = smul.u32 %s1051, 4
                %s1054 = scalar_lea.vmem %s1035, %s1052 [#allocation2]
                %s1055 = scalar_lea.vmem %s1037, %s1053
              $region60: #{dave2v1_forward.4} parent=47 // loop_footer
                %s1041 = sadd.s32 %s1039, 1
              $region61: #{dave2v1_forward.4} parent=47 // loop_footer_branch
                %1038 = sbr.rel target = $region57
              $region62: #{dave2v1_forward.4} parent=47 // loop_exit
                _
            $region48: #{dave2v1_forward.4} parent=39 // pred_fallthru
              _
          $region40: #{dave2v1_forward.4} parent=35 // pred_fallthru
            _
          %1166 = vnop
        $region36: #{dave2v1_forward.4} parent=31 // pred_fallthru
          _
      $region32: #{dave2v1_forward.4} parent=5 // pred_fallthru
        _
      %p1167 = scmp.le.s32.totalorder 2, %s9
      // Predicated region
      $region81: #{dave2v1_forward.4} parent=5 // pred_check
        %p1168 = pneg %p1167
      $region82: #{dave2v1_forward.4} parent=5 // pred_check_branch
        %1170 = sbr.rel (%p1168) target = $region84
      $region83: #{dave2v1_forward.4} parent=5 // pred_region
        %s1171 = ssub.s32 %s9, 2
        // Predicated region
        $region85: #{dave2v1_forward.4} parent=83 // pred_check
          %p1172 = pneg %p106
        $region86: #{dave2v1_forward.4} parent=83 // pred_check_branch
          %1174 = sbr.rel (%p1172) target = $region88
        $region87: #{dave2v1_forward.4} parent=83 // pred_region
          %s1175 = sand.u32 %s91, 1
          %s1176 = sand.u32 %s91, 1
          %s1177 = smul.addr %s1176, 256
          %s1178 = scalar_lea.vmem [#allocation2], %s1177
        $region88: #{dave2v1_forward.4} parent=83 // pred_fallthru
          _
      $region84: #{dave2v1_forward.4} parent=5 // pred_fallthru
        _
    $region6: #{dave2v1_forward.4} parent=1 // loop_footer
      %s13 = sadd.s32 1, %s9
    $region7: #{dave2v1_forward.4} parent=1 // loop_footer_branch
      %8 = sbr.rel target = $region3
    $region8: #{dave2v1_forward.4} parent=1 // loop_exit
      _

// kernel: dave2v1_forward.5
$region0: #{dave2v1_forward.5}
  #allocation0 [shape = 'u32[]', space=smem, size = 0x4, offset = 0x4, fixed_abs, tag = 'smem constant byte address 0x4 - core index']
  #allocation1 [shape = 'u32[72,128]{1,0:T(1,128)}', space=vmem, size = 0x9000, scoped, tag = 'internal scratch']
  %s0 = inlined_call_operand.vmem [shape: bf16[338,600], index: 0, kind: input, shape index: {}]
  %s1 = inlined_call_operand.vmem [shape: bf16[600,36], index: 1, kind: input, shape index: {}]
  %s2 = inlined_call_operand.vmem [shape: f32[1,36], index: 2, kind: input, shape index: {}]
  %s3 = inlined_call_operand.vmem [shape: bf16[338,36], index: 3, kind: output, shape index: {}]
  %s4 = sld [smem:[#allocation0]]
  $region89: #{dave2v1_forward.5} parent=0
    _
  %s6 = ssub.s32 1, %s4
  %s7 = scalar_select 0, %s6, %s4
  $region1: #{dave2v1_forward.5} parent=0
    #allocation2 [shape = 'u8[90112]{0}', space=vmem, size = 0x16000, scoped, tag = 'output window, operand 0']
    loop: start=0, step=1, limit=4
    $region2: #{dave2v1_forward.5} parent=1 // loop_pre_header
      _
    $region3: #{dave2v1_forward.5} parent=1 // loop_header
      %s9 = sphi 0, %s13
      %p10 = scmp.ge.s32.totalorder %s9, 4
      %s19 = sphi 0, %s21
      %s22 = sphi 0, %s19
      %s23 = sphi 0, %s22
      %s39 = sphi 0, %s23
      %s43 = sphi 0, %s43
      %s45 = sphi 0, %s43
      %s46 = sphi 0, %s45
      %s60 = sphi 0, %s46
      %s64 = sphi 0, %s64
      %s66 = sphi 0, %s64
      %s67 = sphi 0, %s66
      %s81 = sphi 0, %s67
      %s87 = sphi 0, %s89
      %s90 = sphi 0, %s87
      %s91 = sphi 0, %s90
      %s107 = sphi 0, %s91
    $region4: #{dave2v1_forward.5} parent=1 // loop_header_branch
      %12 = sbr.rel (%p10) target = $region8
    $region5: #{dave2v1_forward.5} parent=1 // loop_body
      %s14 = ssub.s32 %s9, 1
      %s15 = ssub.s32 %s9, 2
      %s16 = sadd.s32 %s9, 1
      %s17 = ssub.s32 %s9, %s16
      %p18 = scmp.eq.s32.totalorder %s17, 0
      %s20 = sadd.s32 %s19, 1
      %s21 = scalar_select %p18, %s19, %s20
      %p24 = pneg %p18
      %p25 = scmp.eq.s32.totalorder %s9, 1
      %p26 = por %p24, %p25
      %p27 = scmp.ne.s32.totalorder %s19, %s22
      %p28 = scmp.eq.s32.totalorder %s9, 0
      %p29 = por %p27, %p28
      %p30 = scmp.ne.s32.totalorder %s19, %s22
      %p31 = scmp.eq.s32.totalorder %s14, 1
      %p32 = por %p30, %p31
      %p33 = scmp.ne.s32.totalorder %s22, %s23
      %p34 = scmp.eq.s32.totalorder %s14, 0
      %p35 = por %p33, %p34
      %p36 = scmp.ne.s32.totalorder %s22, %s23
      %p37 = scmp.eq.s32.totalorder %s15, 1
      %p38 = por %p36, %p37
      %p40 = scmp.ne.s32.totalorder %s23, %s39
      %p41 = scmp.eq.s32.totalorder %s15, 0
      %p42 = por %p40, %p41
      %s44 = sadd.s32 %s43, 1
      %p47 = scmp.eq.s32.totalorder %s9, 1
      %p48 = scmp.ne.s32.totalorder %s43, %s45
      %p49 = scmp.eq.s32.totalorder %s9, 0
      %p50 = por %p48, %p49
      %p51 = scmp.ne.s32.totalorder %s43, %s45
      %p52 = scmp.eq.s32.totalorder %s14, 1
      %p53 = por %p51, %p52
      %p54 = scmp.ne.s32.totalorder %s45, %s46
      %p55 = scmp.eq.s32.totalorder %s14, 0
      %p56 = por %p54, %p55
      %p57 = scmp.ne.s32.totalorder %s45, %s46
      %p58 = scmp.eq.s32.totalorder %s15, 1
      %p59 = por %p57, %p58
      %p61 = scmp.ne.s32.totalorder %s46, %s60
      %p62 = scmp.eq.s32.totalorder %s15, 0
      %p63 = por %p61, %p62
      %s65 = sadd.s32 %s64, 1
      %p68 = scmp.eq.s32.totalorder %s9, 1
      %p69 = scmp.ne.s32.totalorder %s64, %s66
      %p70 = scmp.eq.s32.totalorder %s9, 0
      %p71 = por %p69, %p70
      %p72 = scmp.ne.s32.totalorder %s64, %s66
      %p73 = scmp.eq.s32.totalorder %s14, 1
      %p74 = por %p72, %p73
      %p75 = scmp.ne.s32.totalorder %s66, %s67
      %p76 = scmp.eq.s32.totalorder %s14, 0
      %p77 = por %p75, %p76
      %p78 = scmp.ne.s32.totalorder %s66, %s67
      %p79 = scmp.eq.s32.totalorder %s15, 1
      %p80 = por %p78, %p79
      %p82 = scmp.ne.s32.totalorder %s67, %s81
      %p83 = scmp.eq.s32.totalorder %s15, 0
      %p84 = por %p82, %p83
      %s85 = ssub.s32 %s9, %s16
      %p86 = scmp.eq.s32.totalorder %s85, 0
      %s88 = sadd.s32 %s87, 1
      %s89 = scalar_select %p86, %s87, %s88
      %p92 = pneg %p86
      %p93 = scmp.eq.s32.totalorder %s9, 1
      %p94 = por %p92, %p93
      %p95 = scmp.ne.s32.totalorder %s87, %s90
      %p96 = scmp.eq.s32.totalorder %s9, 0
      %p97 = por %p95, %p96
      %p98 = scmp.ne.s32.totalorder %s87, %s90
      %p99 = scmp.eq.s32.totalorder %s14, 1
      %p100 = por %p98, %p99
      %p101 = scmp.ne.s32.totalorder %s90, %s91
      %p102 = scmp.eq.s32.totalorder %s14, 0
      %p103 = por %p101, %p102
      %p104 = scmp.ne.s32.totalorder %s90, %s91
      %p105 = scmp.eq.s32.totalorder %s15, 1
      %p106 = por %p104, %p105
      %p108 = scmp.ne.s32.totalorder %s91, %s107
      %p109 = scmp.eq.s32.totalorder %s15, 0
      %p110 = por %p108, %p109
      %p111 = scmp.le.s32.totalorder 1, %s9
      %p112 = scmp.lt.s32.totalorder %s9, 3
      %p113 = pnand %p111, %p112
      %p114 = pneg %p113
      // Predicated region
      $region9: #{dave2v1_forward.5} parent=5 // pred_check
        _
      $region10: #{dave2v1_forward.5} parent=5 // pred_check_branch
        %116 = sbr.rel (%p113) target = $region12
      $region11: #{dave2v1_forward.5} parent=5 // pred_region
        %s117 = ssub.s32 %s9, 1
        // Predicated region
        $region13: #{dave2v1_forward.5} parent=11 // pred_check
          %p118 = pneg %p56
        $region14: #{dave2v1_forward.5} parent=11 // pred_check_branch
          %120 = sbr.rel (%p118) target = $region16
        $region15: #{dave2v1_forward.5} parent=11 // pred_region
          _
        $region16: #{dave2v1_forward.5} parent=11 // pred_fallthru
          _
        // Predicated region
        $region17: #{dave2v1_forward.5} parent=11 // pred_check
          %p121 = pneg %p77
        $region18: #{dave2v1_forward.5} parent=11 // pred_check_branch
          %123 = sbr.rel (%p121) target = $region20
        $region19: #{dave2v1_forward.5} parent=11 // pred_region
          _
        $region20: #{dave2v1_forward.5} parent=11 // pred_fallthru
          _
      $region12: #{dave2v1_forward.5} parent=5 // pred_fallthru
        _
      %p124 = scmp.lt.s32.totalorder %s9, 2
      // Predicated region
      $region21: #{dave2v1_forward.5} parent=5 // pred_check
        %p125 = pneg %p124
      $region22: #{dave2v1_forward.5} parent=5 // pred_check_branch
        %127 = sbr.rel (%p125) target = $region24
      $region23: #{dave2v1_forward.5} parent=5 // pred_region
        // Predicated region
        $region25: #{dave2v1_forward.5} parent=23 // pred_check
          %p128 = pneg %p29
        $region26: #{dave2v1_forward.5} parent=23 // pred_check_branch
          %130 = sbr.rel (%p128) target = $region28
        $region27: #{dave2v1_forward.5} parent=23 // pred_region
          %s131 = smul.u32 22, %s9
          %s132 = ssub.s32 43, %s131
          %p133 = scmp.lt.s32.totalorder %s132, 22
          %s134 = scalar_select %p133, %s132, 22
          %s135 = smul.u32 4, %s134
          %s136 = smul.u32 %s135, 5
          %p137 = scmp.lt.s32.totalorder %s131, 42
          %s138 = scalar_select %p137, %s131, 42
          %s139 = smul.addr %s138, 5
          %s140 = smul.addr %s139, 4
          %s141 = scalar_lea.vmem %s0, %s140
          %s142 = smul.u32 22, %s9
          %s143 = ssub.s32 43, %s142
          %p144 = scmp.lt.s32.totalorder %s143, 22
          %s145 = scalar_select %p144, %s143, 22
          %s146 = smul.u32 4, %s145
          %s147 = smul.u32 %s146, 5
        $region28: #{dave2v1_forward.5} parent=23 // pred_fallthru
          _
      $region24: #{dave2v1_forward.5} parent=5 // pred_fallthru
        _
      %p148 = scmp.le.s32.totalorder 1, %s9
      %p149 = scmp.lt.s32.totalorder %s9, 3
      %p150 = pnand %p148, %p149
      %p151 = pneg %p150
      // Predicated region
      $region29: #{dave2v1_forward.5} parent=5 // pred_check
        _
      $region30: #{dave2v1_forward.5} parent=5 // pred_check_branch
        %153 = sbr.rel (%p150) target = $region32
      $region31: #{dave2v1_forward.5} parent=5 // pred_region
        %s154 = ssub.s32 %s9, 1
        %s155 = smul.u32 22, %s14
        %s156 = ssub.s32 43, %s155
        %p157 = scmp.lt.s32.totalorder %s156, 22
        %s158 = scalar_select %p157, %s156, 22
        %s159 = smul.u32 4, %s158
        %s160 = smul.u32 %s159, 5
        %p161 = scmp.lt.s32.totalorder %s155, 42
        %s162 = scalar_select %p161, %s155, 42
        %s163 = smul.addr %s162, 5
        %s164 = smul.addr %s163, 4
        %s165 = scalar_lea.vmem %s0, %s164
        %p166 = pneg %p35
        %p167 = pneg %p32
        %p168 = pneg %p56
        %p169 = pneg %p53
        %p170 = pneg %p77
        %p171 = pneg %p74
        %p172 = pneg %p103
        %p173 = pneg %p100
        %s174 = sand.u32 %s90, 1
        %s175 = sand.u32 %s90, 1
        %s176 = smul.addr %s175, 88
        %s177 = scalar_lea.vmem [#allocation2], %s176
        %s178 = smul.u32 22, %s14
        %s179 = ssub.s32 43, %s178
        %p180 = scmp.lt.s32.totalorder %s179, 22
        %s181 = scalar_select %p180, %s179, 22
        %s182 = smul.u32 4, %s181
        %s183 = smul.u32 %s182, 5
        %p184 = scmp.lt.s32.totalorder %s178, 42
        %s185 = scalar_select %p184, %s178, 42
        %s186 = smul.addr %s185, 5
        %s187 = smul.addr %s186, 4
        %s188 = scalar_lea.vmem %s0, %s187
        %s189 = smul.u32 22, %s14
        %s190 = ssub.s32 43, %s189
        %p191 = scmp.lt.s32.totalorder %s190, 22
        %s192 = scalar_select %p191, %s190, 22
        %s193 = smul.u32 4, %s192
        %s194 = smul.u32 %s193, 5
        %s195 = smul.u32 22, %s14
        %s196 = ssub.s32 43, %s195
        %p197 = scmp.lt.s32.totalorder %s196, 22
        %s198 = scalar_select %p197, %s196, 22
        %s199 = smul.u32 4, %s198
        %v201 = vld [vmem:[%s188] sm:$0xff]
        %v202 = vld [vmem:[%s188 + $0x8] sm:$0xff]
        %v203 = vld [vmem:[%s188 + $0x10] sm:$0xf]
        %v204 = vld [vmem:[%s188 + $0x14] sm:$0xff]
        %v205 = vld [vmem:[%s188 + $0x1c] sm:$0xff]
        %v206 = vld [vmem:[%s188 + $0x24] sm:$0xf]
        %v207 = vld [vmem:[%s188 + $0x28] sm:$0xff]
        %v208 = vld [vmem:[%s188 + $0x30] sm:$0xff]
        %v209 = vld [vmem:[%s188 + $0x38] sm:$0xf]
        %v210 = vld [vmem:[%s188 + $0x3c] sm:$0xff]
        %v211 = vld [vmem:[%s188 + $0x44] sm:$0xff]
        %v212 = vld [vmem:[%s188 + $0x4c] sm:$0xf]
        %v213 = vld [vmem:[%s188 + $0x50] sm:$0xff]
        %v214 = vld [vmem:[%s188 + $0x58] sm:$0xff]
        %v215 = vld [vmem:[%s188 + $0x60] sm:$0xf]
        %v216 = vld [vmem:[%s188 + $0x64] sm:$0xff]
        %v217 = vld [vmem:[%s188 + $0x6c] sm:$0xff]
        %v218 = vld [vmem:[%s188 + $0x74] sm:$0xf]
        %v219 = vld [vmem:[%s188 + $0x78] sm:$0xff]
        %v220 = vld [vmem:[%s188 + $0x80] sm:$0xff]
        %v221 = vld [vmem:[%s188 + $0x88] sm:$0xf]
        %v222 = vld [vmem:[%s188 + $0x8c] sm:$0xff]
        %v223 = vld [vmem:[%s188 + $0x94] sm:$0xff]
        %v224 = vld [vmem:[%s188 + $0x9c] sm:$0xf]
        %v225 = vld [vmem:[%s188 + $0xa0] sm:$0xff]
        %v226 = vld [vmem:[%s188 + $0xa8] sm:$0xff]
        %v227 = vld [vmem:[%s188 + $0xb0] sm:$0xf]
        %v228 = vld [vmem:[%s188 + $0xb4] sm:$0xff]
        %v229 = vld [vmem:[%s188 + $0xbc] sm:$0xff]
        %v230 = vld [vmem:[%s188 + $0xc4] sm:$0xf]
        %v231 = vld [vmem:[%s188 + $0xc8] sm:$0xff]
        %v232 = vld [vmem:[%s188 + $0xd0] sm:$0xff]
        %v233 = vld [vmem:[%s188 + $0xd8] sm:$0xf]
        %v234 = vld [vmem:[%s188 + $0xdc] sm:$0xff]
        %v235 = vld [vmem:[%s188 + $0xe4] sm:$0xff]
        %v236 = vld [vmem:[%s188 + $0xec] sm:$0xf]
        %v237 = vld [vmem:[%s188 + $0xf0] sm:$0xff]
        %v238 = vld [vmem:[%s188 + $0xf8] sm:$0xff]
        %v239 = vld [vmem:[%s188 + $0x100] sm:$0xf]
        %v240 = vld [vmem:[%s188 + $0x104] sm:$0xff]
        %v241 = vld [vmem:[%s188 + $0x10c] sm:$0xff]
        %v242 = vld [vmem:[%s188 + $0x114] sm:$0xf]
        %v243 = vld [vmem:[%s188 + $0x118] sm:$0xff]
        %v244 = vld [vmem:[%s188 + $0x120] sm:$0xff]
        %v245 = vld [vmem:[%s188 + $0x128] sm:$0xf]
        %v246 = vld [vmem:[%s188 + $0x12c] sm:$0xff]
        %v247 = vld [vmem:[%s188 + $0x134] sm:$0xff]
        %v248 = vld [vmem:[%s188 + $0x13c] sm:$0xf]
        %v249 = vld [vmem:[%s188 + $0x140] sm:$0xff]
        %v250 = vld [vmem:[%s188 + $0x148] sm:$0xff]
        %v251 = vld [vmem:[%s188 + $0x150] sm:$0xf]
        %v252 = vld [vmem:[%s188 + $0x154] sm:$0xff]
        %v253 = vld [vmem:[%s188 + $0x15c] sm:$0xff]
        %v254 = vld [vmem:[%s188 + $0x164] sm:$0xf]
        %v255 = vld [vmem:[%s188 + $0x168] sm:$0xff]
        %v256 = vld [vmem:[%s188 + $0x170] sm:$0xff]
        %v257 = vld [vmem:[%s188 + $0x178] sm:$0xf]
        %v258 = vld [vmem:[%s188 + $0x17c] sm:$0xff]
        %v259 = vld [vmem:[%s188 + $0x184] sm:$0xff]
        %v260 = vld [vmem:[%s188 + $0x18c] sm:$0xf]
        %v261 = vld [vmem:[%s188 + $0x190] sm:$0xff]
        %v262 = vld [vmem:[%s188 + $0x198] sm:$0xff]
        %v263 = vld [vmem:[%s188 + $0x1a0] sm:$0xf]
        %v264 = vld [vmem:[%s188 + $0x1a4] sm:$0xff]
        %v265 = vld [vmem:[%s188 + $0x1ac] sm:$0xff]
        %v266 = vld [vmem:[%s188 + $0x1b4] sm:$0xf]
        %v267 = vld [vmem:[%s1] sm:$0xf]
        %v268 = vld [vmem:[%s1 + $0x4] sm:$0xf]
        %v269 = vld [vmem:[%s1 + $0x8] sm:$0xf]
        %v270 = vld [vmem:[%s1 + $0xc] sm:$0xf]
        %v271 = vld [vmem:[%s1 + $0x10] sm:$0xf]
        %v272 = vld [vmem:[%s1 + $0x14] sm:$0xf]
        %v273 = vld [vmem:[%s1 + $0x18] sm:$0xf]
        %v274 = vld [vmem:[%s1 + $0x1c] sm:$0xf]
        %v275 = vld [vmem:[%s1 + $0x20] sm:$0xf]
        %v276 = vld [vmem:[%s1 + $0x24] sm:$0xf]
        %v277 = vld [vmem:[%s1 + $0x28] sm:$0xf]
        %v278 = vld [vmem:[%s1 + $0x2c] sm:$0xf]
        %v279 = vld [vmem:[%s1 + $0x30] sm:$0xf]
        %v280 = vld [vmem:[%s1 + $0x34] sm:$0xf]
        %v281 = vld [vmem:[%s1 + $0x38] sm:$0xf]
        %v282 = vld [vmem:[%s1 + $0x3c] sm:$0xf]
        %v283 = vld [vmem:[%s1 + $0x40] sm:$0xf]
        %v284 = vld [vmem:[%s1 + $0x44] sm:$0xf]
        %v285 = vld [vmem:[%s1 + $0x48] sm:$0xf]
        %v286 = vld [vmem:[%s1 + $0x4c] sm:$0xf]
        %v287 = vld [vmem:[%s1 + $0x50] sm:$0xf]
        %v288 = vld [vmem:[%s1 + $0x54] sm:$0xf]
        %v289 = vld [vmem:[%s1 + $0x58] sm:$0xf]
        %v290 = vld [vmem:[%s1 + $0x5c] sm:$0xf]
        %v291 = vld [vmem:[%s1 + $0x60] sm:$0xf]
        %v292 = vld [vmem:[%s1 + $0x64] sm:$0xf]
        %v293 = vld [vmem:[%s1 + $0x68] sm:$0xf]
        %v294 = vld [vmem:[%s1 + $0x6c] sm:$0xf]
        %v295 = vld [vmem:[%s1 + $0x70] sm:$0xf]
        %v296 = vld [vmem:[%s1 + $0x74] sm:$0xf]
        %v297 = vld [vmem:[%s1 + $0x78] sm:$0xf]
        %v298 = vld [vmem:[%s1 + $0x7c] sm:$0xf]
        %v299 = vld [vmem:[%s1 + $0x80] sm:$0xf]
        %v300 = vld [vmem:[%s1 + $0x84] sm:$0xf]
        %v301 = vld [vmem:[%s1 + $0x88] sm:$0xf]
        %v302 = vld [vmem:[%s1 + $0x8c] sm:$0xf]
        %v303 = vld [vmem:[%s1 + $0x90] sm:$0xf]
        %v304 = vld [vmem:[%s1 + $0x94] sm:$0xf]
        %v305 = vld [vmem:[%s1 + $0x98] sm:$0xf]
        %v306 = vld [vmem:[%s1 + $0x9c] sm:$0xf]
        %v307 = vld [vmem:[%s1 + $0xa0] sm:$0xf]
        %v308 = vld [vmem:[%s1 + $0xa4] sm:$0xf]
        %v309 = vld [vmem:[%s1 + $0xa8] sm:$0xf]
        %v310 = vld [vmem:[%s1 + $0xac] sm:$0xf]
        %v311 = vld [vmem:[%s1 + $0xb0] sm:$0xf]
        %v312 = vld [vmem:[%s1 + $0xb4] sm:$0xf]
        %v313 = vld [vmem:[%s1 + $0xb8] sm:$0xf]
        %v314 = vld [vmem:[%s1 + $0xbc] sm:$0xf]
        %v315 = vld [vmem:[%s1 + $0xc0] sm:$0xf]
        %v316 = vld [vmem:[%s1 + $0xc4] sm:$0xf]
        %v317 = vld [vmem:[%s1 + $0xc8] sm:$0xf]
        %v318 = vld [vmem:[%s1 + $0xcc] sm:$0xf]
        %v319 = vld [vmem:[%s1 + $0xd0] sm:$0xf]
        %v320 = vld [vmem:[%s1 + $0xd4] sm:$0xf]
        %v321 = vld [vmem:[%s1 + $0xd8] sm:$0xf]
        %v322 = vld [vmem:[%s1 + $0xdc] sm:$0xf]
        %v323 = vld [vmem:[%s1 + $0xe0] sm:$0xf]
        %v324 = vld [vmem:[%s1 + $0xe4] sm:$0xf]
        %v325 = vld [vmem:[%s1 + $0xe8] sm:$0xf]
        %v326 = vld [vmem:[%s1 + $0xec] sm:$0xf]
        %v327 = vld [vmem:[%s1 + $0xf0] sm:$0xf]
        %v328 = vld [vmem:[%s1 + $0xf4] sm:$0xf]
        %v329 = vld [vmem:[%s1 + $0xf8] sm:$0xf]
        %v330 = vld [vmem:[%s1 + $0xfc] sm:$0xf]
        %v331 = vld [vmem:[%s1 + $0x100] sm:$0xf]
        %v332 = vld [vmem:[%s1 + $0x104] sm:$0xf]
        %v333 = vld [vmem:[%s1 + $0x108] sm:$0xf]
        %v334 = vld [vmem:[%s1 + $0x10c] sm:$0xf]
        %v335 = vld [vmem:[%s1 + $0x110] sm:$0xf]
        %v336 = vld [vmem:[%s1 + $0x114] sm:$0xf]
        %v337 = vld [vmem:[%s1 + $0x118] sm:$0xf]
        %v338 = vld [vmem:[%s1 + $0x11c] sm:$0xf]
        %v339 = vld [vmem:[%s1 + $0x120] sm:$0xf]
        %v340 = vld [vmem:[%s1 + $0x124] sm:$0xf]
        %v341 = vld [vmem:[%s1 + $0x128] sm:$0xf]
        %v342 = vld [vmem:[%s2] sm:$0x1]
        %v344 = vperm.slane %v342, 0
        %v412 = vunpack.c.l.b16 %v201
        %v413 = vunpack.c.h.b16 %v201
        %v414 = vunpack.c.l.b16 %v202
        %v415 = vunpack.c.h.b16 %v202
        %v416 = vunpack.c.l.b16 %v203
        %v417 = vunpack.c.l.b16 %v204
        %v418 = vunpack.c.h.b16 %v204
        %v419 = vunpack.c.l.b16 %v205
        %v420 = vunpack.c.h.b16 %v205
        %v421 = vunpack.c.l.b16 %v206
        %v422 = vunpack.c.l.b16 %v207
        %v423 = vunpack.c.h.b16 %v207
        %v424 = vunpack.c.l.b16 %v208
        %v425 = vunpack.c.h.b16 %v208
        %v426 = vunpack.c.l.b16 %v209
        %v427 = vunpack.c.l.b16 %v210
        %v428 = vunpack.c.h.b16 %v210
        %v429 = vunpack.c.l.b16 %v211
        %v430 = vunpack.c.h.b16 %v211
        %v431 = vunpack.c.l.b16 %v212
        %v432 = vunpack.c.l.b16 %v213
        %v433 = vunpack.c.h.b16 %v213
        %v434 = vunpack.c.l.b16 %v214
        %v435 = vunpack.c.h.b16 %v214
        %v436 = vunpack.c.l.b16 %v215
        %v437 = vunpack.c.l.b16 %v216
        %v438 = vunpack.c.h.b16 %v216
        %v439 = vunpack.c.l.b16 %v217
        %v440 = vunpack.c.h.b16 %v217
        %v441 = vunpack.c.l.b16 %v218
        %v442 = vunpack.c.l.b16 %v219
        %v443 = vunpack.c.h.b16 %v219
        %v444 = vunpack.c.l.b16 %v220
        %v445 = vunpack.c.h.b16 %v220
        %v446 = vunpack.c.l.b16 %v221
        %v447 = vunpack.c.l.b16 %v222
        %v448 = vunpack.c.h.b16 %v222
        %v449 = vunpack.c.l.b16 %v223
        %v450 = vunpack.c.h.b16 %v223
        %v451 = vunpack.c.l.b16 %v224
        %v452 = vunpack.c.l.b16 %v225
        %v453 = vunpack.c.h.b16 %v225
        %v454 = vunpack.c.l.b16 %v226
        %v455 = vunpack.c.h.b16 %v226
        %v456 = vunpack.c.l.b16 %v227
        %v457 = vunpack.c.l.b16 %v228
        %v458 = vunpack.c.h.b16 %v228
        %v459 = vunpack.c.l.b16 %v229
        %v460 = vunpack.c.h.b16 %v229
        %v461 = vunpack.c.l.b16 %v230
        %v462 = vunpack.c.l.b16 %v231
        %v463 = vunpack.c.h.b16 %v231
        %v464 = vunpack.c.l.b16 %v232
        %v465 = vunpack.c.h.b16 %v232
        %v466 = vunpack.c.l.b16 %v233
        %v467 = vunpack.c.l.b16 %v234
        %v468 = vunpack.c.h.b16 %v234
        %v469 = vunpack.c.l.b16 %v235
        %v470 = vunpack.c.h.b16 %v235
        %v471 = vunpack.c.l.b16 %v236
        %v472 = vunpack.c.l.b16 %v237
        %v473 = vunpack.c.h.b16 %v237
        %v474 = vunpack.c.l.b16 %v238
        %v475 = vunpack.c.h.b16 %v238
        %v476 = vunpack.c.l.b16 %v239
        %v477 = vunpack.c.l.b16 %v240
        %v478 = vunpack.c.h.b16 %v240
        %v479 = vunpack.c.l.b16 %v241
        %v480 = vunpack.c.h.b16 %v241
        %v481 = vunpack.c.l.b16 %v242
        %v482 = vunpack.c.l.b16 %v243
        %v483 = vunpack.c.h.b16 %v243
        %v484 = vunpack.c.l.b16 %v244
        %v485 = vunpack.c.h.b16 %v244
        %v486 = vunpack.c.l.b16 %v245
        %v487 = vunpack.c.l.b16 %v246
        %v488 = vunpack.c.h.b16 %v246
        %v489 = vunpack.c.l.b16 %v247
        %v490 = vunpack.c.h.b16 %v247
        %v491 = vunpack.c.l.b16 %v248
        %v492 = vunpack.c.l.b16 %v249
        %v493 = vunpack.c.h.b16 %v249
        %v494 = vunpack.c.l.b16 %v250
        %v495 = vunpack.c.h.b16 %v250
        %v496 = vunpack.c.l.b16 %v251
        %v497 = vunpack.c.l.b16 %v252
        %v498 = vunpack.c.h.b16 %v252
        %v499 = vunpack.c.l.b16 %v253
        %v500 = vunpack.c.h.b16 %v253
        %v501 = vunpack.c.l.b16 %v254
        %v502 = vunpack.c.l.b16 %v255
        %v503 = vunpack.c.h.b16 %v255
        %v504 = vunpack.c.l.b16 %v256
        %v505 = vunpack.c.h.b16 %v256
        %v506 = vunpack.c.l.b16 %v257
        %v507 = vunpack.c.l.b16 %v258
        %v508 = vunpack.c.h.b16 %v258
        %v509 = vunpack.c.l.b16 %v259
        %v510 = vunpack.c.h.b16 %v259
        %v511 = vunpack.c.l.b16 %v260
        %v512 = vunpack.c.l.b16 %v261
        %v513 = vunpack.c.h.b16 %v261
        %v514 = vunpack.c.l.b16 %v262
        %v515 = vunpack.c.h.b16 %v262
        %v516 = vunpack.c.l.b16 %v263
        %v517 = vunpack.c.l.b16 %v264
        %v518 = vunpack.c.h.b16 %v264
        %v519 = vunpack.c.l.b16 %v265
        %v520 = vunpack.c.h.b16 %v265
        %v521 = vunpack.c.l.b16 %v266
        %v522 = vpack.c.b16 %v417, %v412
        %v523 = vpack.c.b16 %v418, %v413
        %v524 = vpack.c.b16 %v419, %v414
        %v525 = vpack.c.b16 %v420, %v415
        %v526 = vpack.c.b16 %v421, %v416
        %v527 = vpack.c.b16 %v427, %v422
        %v528 = vpack.c.b16 %v428, %v423
        %v529 = vpack.c.b16 %v429, %v424
        %v530 = vpack.c.b16 %v430, %v425
        %v531 = vpack.c.b16 %v431, %v426
        %v532 = vpack.c.b16 %v437, %v432
        %v533 = vpack.c.b16 %v438, %v433
        %v534 = vpack.c.b16 %v439, %v434
        %v535 = vpack.c.b16 %v440, %v435
        %v536 = vpack.c.b16 %v441, %v436
        %v537 = vpack.c.b16 %v447, %v442
        %v538 = vpack.c.b16 %v448, %v443
        %v539 = vpack.c.b16 %v449, %v444
        %v540 = vpack.c.b16 %v450, %v445
        %v541 = vpack.c.b16 %v451, %v446
        %v542 = vpack.c.b16 %v457, %v452
        %v543 = vpack.c.b16 %v458, %v453
        %v544 = vpack.c.b16 %v459, %v454
        %v545 = vpack.c.b16 %v460, %v455
        %v546 = vpack.c.b16 %v461, %v456
        %v547 = vpack.c.b16 %v467, %v462
        %v548 = vpack.c.b16 %v468, %v463
        %v549 = vpack.c.b16 %v469, %v464
        %v550 = vpack.c.b16 %v470, %v465
        %v551 = vpack.c.b16 %v471, %v466
        %v552 = vpack.c.b16 %v477, %v472
        %v553 = vpack.c.b16 %v478, %v473
        %v554 = vpack.c.b16 %v479, %v474
        %v555 = vpack.c.b16 %v480, %v475
        %v556 = vpack.c.b16 %v481, %v476
        %v557 = vpack.c.b16 %v487, %v482
        %v558 = vpack.c.b16 %v488, %v483
        %v559 = vpack.c.b16 %v489, %v484
        %v560 = vpack.c.b16 %v490, %v485
        %v561 = vpack.c.b16 %v491, %v486
        %v562 = vpack.c.b16 %v497, %v492
        %v563 = vpack.c.b16 %v498, %v493
        %v564 = vpack.c.b16 %v499, %v494
        %v565 = vpack.c.b16 %v500, %v495
        %v566 = vpack.c.b16 %v501, %v496
        %v567 = vpack.c.b16 %v507, %v502
        %v568 = vpack.c.b16 %v508, %v503
        %v569 = vpack.c.b16 %v509, %v504
        %v570 = vpack.c.b16 %v510, %v505
        %v571 = vpack.c.b16 %v511, %v506
        %v572 = vpack.c.b16 %v517, %v512
        %v573 = vpack.c.b16 %v518, %v513
        %v574 = vpack.c.b16 %v519, %v514
        %v575 = vpack.c.b16 %v520, %v515
        %v576 = vpack.c.b16 %v521, %v516
        %v696 = vunpack.c.l.b16 %v267
        %v697 = vunpack.c.l.b16 %v268
        %v698 = vunpack.c.l.b16 %v269
        %v699 = vunpack.c.l.b16 %v270
        %v700 = vunpack.c.l.b16 %v271
        %v701 = vunpack.c.l.b16 %v272
        %v702 = vunpack.c.l.b16 %v273
        %v703 = vunpack.c.l.b16 %v274
        %v704 = vunpack.c.l.b16 %v275
        %v705 = vunpack.c.l.b16 %v276
        %v706 = vunpack.c.l.b16 %v277
        %v707 = vunpack.c.l.b16 %v278
        %v708 = vunpack.c.l.b16 %v279
        %v709 = vunpack.c.l.b16 %v280
        %v710 = vunpack.c.l.b16 %v281
        %v711 = vunpack.c.l.b16 %v282
        %v712 = vunpack.c.l.b16 %v283
        %v713 = vunpack.c.l.b16 %v284
        %v714 = vunpack.c.l.b16 %v285
        %v715 = vunpack.c.l.b16 %v286
        %v716 = vunpack.c.l.b16 %v287
        %v717 = vunpack.c.l.b16 %v288
        %v718 = vunpack.c.l.b16 %v289
        %v719 = vunpack.c.l.b16 %v290
        %v720 = vunpack.c.l.b16 %v291
        %v721 = vunpack.c.l.b16 %v292
        %v722 = vunpack.c.l.b16 %v293
        %v723 = vunpack.c.l.b16 %v294
        %v724 = vunpack.c.l.b16 %v295
        %v725 = vunpack.c.l.b16 %v296
        %v726 = vunpack.c.l.b16 %v297
        %v727 = vunpack.c.l.b16 %v298
        %v728 = vunpack.c.l.b16 %v299
        %v729 = vunpack.c.l.b16 %v300
        %v730 = vunpack.c.l.b16 %v301
        %v731 = vunpack.c.l.b16 %v302
        %v732 = vunpack.c.l.b16 %v303
        %v733 = vunpack.c.l.b16 %v304
        %v734 = vunpack.c.l.b16 %v305
        %v735 = vunpack.c.l.b16 %v306
        %v736 = vunpack.c.l.b16 %v307
        %v737 = vunpack.c.l.b16 %v308
        %v738 = vunpack.c.l.b16 %v309
        %v739 = vunpack.c.l.b16 %v310
        %v740 = vunpack.c.l.b16 %v311
        %v741 = vunpack.c.l.b16 %v312
        %v742 = vunpack.c.l.b16 %v313
        %v743 = vunpack.c.l.b16 %v314
        %v744 = vunpack.c.l.b16 %v315
        %v745 = vunpack.c.l.b16 %v316
        %v746 = vunpack.c.l.b16 %v317
        %v747 = vunpack.c.l.b16 %v318
        %v748 = vunpack.c.l.b16 %v319
        %v749 = vunpack.c.l.b16 %v320
        %v750 = vunpack.c.l.b16 %v321
        %v751 = vunpack.c.l.b16 %v322
        %v752 = vunpack.c.l.b16 %v323
        %v753 = vunpack.c.l.b16 %v324
        %v754 = vunpack.c.l.b16 %v325
        %v755 = vunpack.c.l.b16 %v326
        %v756 = vunpack.c.l.b16 %v327
        %v757 = vunpack.c.l.b16 %v328
        %v758 = vunpack.c.l.b16 %v329
        %v759 = vunpack.c.l.b16 %v330
        %v760 = vunpack.c.l.b16 %v331
        %v761 = vunpack.c.l.b16 %v332
        %v762 = vunpack.c.l.b16 %v333
        %v763 = vunpack.c.l.b16 %v334
        %v764 = vunpack.c.l.b16 %v335
        %v765 = vunpack.c.l.b16 %v336
        %v766 = vunpack.c.l.b16 %v337
        %v767 = vunpack.c.l.b16 %v338
        %v768 = vunpack.c.l.b16 %v339
        %v769 = vunpack.c.l.b16 %v340
        %v770 = vunpack.c.l.b16 %v341
        %v771 = vpack.c.b16 %v697, %v696
        %v772 = vpack.c.b16 %v699, %v698
        %v773 = vpack.c.b16 %v701, %v700
        %v774 = vpack.c.b16 %v703, %v702
        %v775 = vpack.c.b16 %v705, %v704
        %v776 = vpack.c.b16 %v707, %v706
        %v777 = vpack.c.b16 %v709, %v708
        %v778 = vpack.c.b16 %v711, %v710
        %v779 = vpack.c.b16 %v713, %v712
        %v780 = vpack.c.b16 %v715, %v714
        %v781 = vpack.c.b16 %v717, %v716
        %v782 = vpack.c.b16 %v719, %v718
        %v783 = vpack.c.b16 %v721, %v720
        %v784 = vpack.c.b16 %v723, %v722
        %v785 = vpack.c.b16 %v725, %v724
        %v786 = vpack.c.b16 %v727, %v726
        %v787 = vpack.c.b16 %v729, %v728
        %v788 = vpack.c.b16 %v731, %v730
        %v789 = vpack.c.b16 %v733, %v732
        %v790 = vpack.c.b16 %v735, %v734
        %v791 = vpack.c.b16 %v737, %v736
        %v792 = vpack.c.b16 %v739, %v738
        %v793 = vpack.c.b16 %v741, %v740
        %v794 = vpack.c.b16 %v743, %v742
        %v795 = vpack.c.b16 %v745, %v744
        %v796 = vpack.c.b16 %v747, %v746
        %v797 = vpack.c.b16 %v749, %v748
        %v798 = vpack.c.b16 %v751, %v750
        %v799 = vpack.c.b16 %v753, %v752
        %v800 = vpack.c.b16 %v755, %v754
        %v801 = vpack.c.b16 %v757, %v756
        %v802 = vpack.c.b16 %v759, %v758
        %v803 = vpack.c.b16 %v761, %v760
        %v804 = vpack.c.b16 %v763, %v762
        %v805 = vpack.c.b16 %v765, %v764
        %v806 = vpack.c.b16 %v767, %v766
        %v807 = vpack.c.b16 %v769, %v768
        %v808 = vpack.c.b16 %v770, %v770
        %vm846 = vcmask 719872
        %v848 = vsel %vm846, %v526, 0
        %v851 = vsel %vm846, %v531, 0
        %v854 = vsel %vm846, %v536, 0
        %v857 = vsel %vm846, %v541, 0
        %v860 = vsel %vm846, %v546, 0
        %v863 = vsel %vm846, %v551, 0
        %v866 = vsel %vm846, %v556, 0
        %v869 = vsel %vm846, %v561, 0
        %v872 = vsel %vm846, %v566, 0
        %v875 = vsel %vm846, %v571, 0
        %v878 = vsel %vm846, %v576, 0
        %vm880 = vcmask 1043456
        %v882 = vsel %vm880, %v808, 0
        %884 = vmatpush.bf16.msra.mxu0 %v778
        %885 = vmatpush.bf16.msra.mxu0 %v777
        %886 = vmatpush.bf16.msra.mxu0 %v776
        %887 = vmatpush.bf16.msra.mxu0 %v775
        %888 = vmatpush.bf16.msra.mxu0 %v774
        %889 = vmatpush.bf16.msra.mxu0 %v773
        %890 = vmatpush.bf16.msra.mxu0 %v772
        %891 = vmatpush.bf16.msra.mxu0 %v771
        %892 = vmatmul.bf16.gmra.mxu0 %v522
        %v893 = vpop.f32.mrf.mxu0
        %v894 = vadd.f32 %v344, %v893
        %v895 = vpop.f32.mrf.mxu0
        %v896 = vadd.f32 %v344, %v895
        %897 = vmatmul.bf16.gmra.mxu0 %v527
        %v898 = vpop.f32.mrf.mxu0
        %v899 = vadd.f32 %v344, %v898
        %v900 = vpop.f32.mrf.mxu0
        %v901 = vadd.f32 %v344, %v900
        %902 = vmatmul.bf16.gmra.mxu0 %v532
        %v903 = vpop.f32.mrf.mxu0
        %v904 = vadd.f32 %v344, %v903
        %v905 = vpop.f32.mrf.mxu0
        %v906 = vadd.f32 %v344, %v905
        %907 = vmatmul.bf16.gmra.mxu0 %v537
        %v908 = vpop.f32.mrf.mxu0
        %v909 = vadd.f32 %v344, %v908
        %v910 = vpop.f32.mrf.mxu0
        %v911 = vadd.f32 %v344, %v910
        %912 = vmatmul.bf16.gmra.mxu0 %v542
        %v913 = vpop.f32.mrf.mxu0
        %v914 = vadd.f32 %v344, %v913
        %v915 = vpop.f32.mrf.mxu0
        %v916 = vadd.f32 %v344, %v915
        %917 = vmatmul.bf16.gmra.mxu0 %v547
        %v918 = vpop.f32.mrf.mxu0
        %v919 = vadd.f32 %v344, %v918
        %v920 = vpop.f32.mrf.mxu0
        %v921 = vadd.f32 %v344, %v920
        %922 = vmatmul.bf16.gmra.mxu0 %v552
        %v923 = vpop.f32.mrf.mxu0
        %v924 = vadd.f32 %v344, %v923
        %v925 = vpop.f32.mrf.mxu0
        %v926 = vadd.f32 %v344, %v925
        %927 = vmatmul.bf16.gmra.mxu0 %v557
        %v928 = vpop.f32.mrf.mxu0
        %v929 = vadd.f32 %v344, %v928
        %v930 = vpop.f32.mrf.mxu0
        %v931 = vadd.f32 %v344, %v930
        %932 = vmatmul.bf16.gmra.mxu0 %v562
        %v933 = vpop.f32.mrf.mxu0
        %v934 = vadd.f32 %v344, %v933
        %v935 = vpop.f32.mrf.mxu0
        %v936 = vadd.f32 %v344, %v935
        %937 = vmatmul.bf16.gmra.mxu0 %v567
        %v938 = vpop.f32.mrf.mxu0
        %v939 = vadd.f32 %v344, %v938
        %v940 = vpop.f32.mrf.mxu0
        %v941 = vadd.f32 %v344, %v940
        %942 = vmatmul.bf16.gmra.mxu0 %v572
        %v943 = vpop.f32.mrf.mxu0
        %v944 = vadd.f32 %v344, %v943
        %v945 = vpop.f32.mrf.mxu0
        %v946 = vadd.f32 %v344, %v945
        %947 = vdwg.mxu0
        %948 = vmatpush.bf16.msra.mxu0 %v786
        %949 = vmatpush.bf16.msra.mxu0 %v785
        %950 = vmatpush.bf16.msra.mxu0 %v784
        %951 = vmatpush.bf16.msra.mxu0 %v783
        %952 = vmatpush.bf16.msra.mxu0 %v782
        %953 = vmatpush.bf16.msra.mxu0 %v781
        %954 = vmatpush.bf16.msra.mxu0 %v780
        %955 = vmatpush.bf16.msra.mxu0 %v779
        %956 = vmatmul.bf16.gmra.mxu0 %v523
        %v957 = vpop.f32.mrf.mxu0
        %v958 = vadd.f32 %v894, %v957
        %v959 = vpop.f32.mrf.mxu0
        %v960 = vadd.f32 %v896, %v959
        %961 = vmatmul.bf16.gmra.mxu0 %v528
        %v962 = vpop.f32.mrf.mxu0
        %v963 = vadd.f32 %v899, %v962
        %v964 = vpop.f32.mrf.mxu0
        %v965 = vadd.f32 %v901, %v964
        %966 = vmatmul.bf16.gmra.mxu0 %v533
        %v967 = vpop.f32.mrf.mxu0
        %v968 = vadd.f32 %v904, %v967
        %v969 = vpop.f32.mrf.mxu0
        %v970 = vadd.f32 %v906, %v969
        %971 = vmatmul.bf16.gmra.mxu0 %v538
        %v972 = vpop.f32.mrf.mxu0
        %v973 = vadd.f32 %v909, %v972
        %v974 = vpop.f32.mrf.mxu0
        %v975 = vadd.f32 %v911, %v974
        %976 = vmatmul.bf16.gmra.mxu0 %v543
        %v977 = vpop.f32.mrf.mxu0
        %v978 = vadd.f32 %v914, %v977
        %v979 = vpop.f32.mrf.mxu0
        %v980 = vadd.f32 %v916, %v979
        %981 = vmatmul.bf16.gmra.mxu0 %v548
        %v982 = vpop.f32.mrf.mxu0
        %v983 = vadd.f32 %v919, %v982
        %v984 = vpop.f32.mrf.mxu0
        %v985 = vadd.f32 %v921, %v984
        %986 = vmatmul.bf16.gmra.mxu0 %v553
        %v987 = vpop.f32.mrf.mxu0
        %v988 = vadd.f32 %v924, %v987
        %v989 = vpop.f32.mrf.mxu0
        %v990 = vadd.f32 %v926, %v989
        %991 = vmatmul.bf16.gmra.mxu0 %v558
        %v992 = vpop.f32.mrf.mxu0
        %v993 = vadd.f32 %v929, %v992
        %v994 = vpop.f32.mrf.mxu0
        %v995 = vadd.f32 %v931, %v994
        %996 = vmatmul.bf16.gmra.mxu0 %v563
        %v997 = vpop.f32.mrf.mxu0
        %v998 = vadd.f32 %v934, %v997
        %v999 = vpop.f32.mrf.mxu0
        %v1000 = vadd.f32 %v936, %v999
        %1001 = vmatmul.bf16.gmra.mxu0 %v568
        %v1002 = vpop.f32.mrf.mxu0
        %v1003 = vadd.f32 %v939, %v1002
        %v1004 = vpop.f32.mrf.mxu0
        %v1005 = vadd.f32 %v941, %v1004
        %1006 = vmatmul.bf16.gmra.mxu0 %v573
        %v1007 = vpop.f32.mrf.mxu0
        %v1008 = vadd.f32 %v944, %v1007
        %v1009 = vpop.f32.mrf.mxu0
        %v1010 = vadd.f32 %v946, %v1009
        %1011 = vdwg.mxu0
        %1012 = vmatpush.bf16.msra.mxu0 %v794
        %1013 = vmatpush.bf16.msra.mxu0 %v793
        %1014 = vmatpush.bf16.msra.mxu0 %v792
        %1015 = vmatpush.bf16.msra.mxu0 %v791
        %1016 = vmatpush.bf16.msra.mxu0 %v790
        %1017 = vmatpush.bf16.msra.mxu0 %v789
        %1018 = vmatpush.bf16.msra.mxu0 %v788
        %1019 = vmatpush.bf16.msra.mxu0 %v787
        %1020 = vmatmul.bf16.gmra.mxu0 %v524
        %v1021 = vpop.f32.mrf.mxu0
        %v1022 = vadd.f32 %v958, %v1021
        %v1023 = vpop.f32.mrf.mxu0
        %v1024 = vadd.f32 %v960, %v1023
        %1025 = vmatmul.bf16.gmra.mxu0 %v529
        %v1026 = vpop.f32.mrf.mxu0
        %v1027 = vadd.f32 %v963, %v1026
        %v1028 = vpop.f32.mrf.mxu0
        %v1029 = vadd.f32 %v965, %v1028
        %1030 = vmatmul.bf16.gmra.mxu0 %v534
        %v1031 = vpop.f32.mrf.mxu0
        %v1032 = vadd.f32 %v968, %v1031
        %v1033 = vpop.f32.mrf.mxu0
        %v1034 = vadd.f32 %v970, %v1033
        %1035 = vmatmul.bf16.gmra.mxu0 %v539
        %v1036 = vpop.f32.mrf.mxu0
        %v1037 = vadd.f32 %v973, %v1036
        %v1038 = vpop.f32.mrf.mxu0
        %v1039 = vadd.f32 %v975, %v1038
        %1040 = vmatmul.bf16.gmra.mxu0 %v544
        %v1041 = vpop.f32.mrf.mxu0
        %v1042 = vadd.f32 %v978, %v1041
        %v1043 = vpop.f32.mrf.mxu0
        %v1044 = vadd.f32 %v980, %v1043
        %1045 = vmatmul.bf16.gmra.mxu0 %v549
        %v1046 = vpop.f32.mrf.mxu0
        %v1047 = vadd.f32 %v983, %v1046
        %v1048 = vpop.f32.mrf.mxu0
        %v1049 = vadd.f32 %v985, %v1048
        %1050 = vmatmul.bf16.gmra.mxu0 %v554
        %v1051 = vpop.f32.mrf.mxu0
        %v1052 = vadd.f32 %v988, %v1051
        %v1053 = vpop.f32.mrf.mxu0
        %v1054 = vadd.f32 %v990, %v1053
        %1055 = vmatmul.bf16.gmra.mxu0 %v559
        %v1056 = vpop.f32.mrf.mxu0
        %v1057 = vadd.f32 %v993, %v1056
        %v1058 = vpop.f32.mrf.mxu0
        %v1059 = vadd.f32 %v995, %v1058
        %1060 = vmatmul.bf16.gmra.mxu0 %v564
        %v1061 = vpop.f32.mrf.mxu0
        %v1062 = vadd.f32 %v998, %v1061
        %v1063 = vpop.f32.mrf.mxu0
        %v1064 = vadd.f32 %v1000, %v1063
        %1065 = vmatmul.bf16.gmra.mxu0 %v569
        %v1066 = vpop.f32.mrf.mxu0
        %v1067 = vadd.f32 %v1003, %v1066
        %v1068 = vpop.f32.mrf.mxu0
        %v1069 = vadd.f32 %v1005, %v1068
        %1070 = vmatmul.bf16.gmra.mxu0 %v574
        %v1071 = vpop.f32.mrf.mxu0
        %v1072 = vadd.f32 %v1008, %v1071
        %v1073 = vpop.f32.mrf.mxu0
        %v1074 = vadd.f32 %v1010, %v1073
        %1075 = vdwg.mxu0
        %1076 = vmatpush.bf16.msra.mxu0 %v802
        %1077 = vmatpush.bf16.msra.mxu0 %v801
        %1078 = vmatpush.bf16.msra.mxu0 %v800
        %1079 = vmatpush.bf16.msra.mxu0 %v799
        %1080 = vmatpush.bf16.msra.mxu0 %v798
        %1081 = vmatpush.bf16.msra.mxu0 %v797
        %1082 = vmatpush.bf16.msra.mxu0 %v796
        %1083 = vmatpush.bf16.msra.mxu0 %v795
        %1084 = vmatmul.bf16.gmra.mxu0 %v525
        %v1085 = vpop.f32.mrf.mxu0
        %v1086 = vadd.f32 %v1022, %v1085
        %v1087 = vpop.f32.mrf.mxu0
        %v1088 = vadd.f32 %v1024, %v1087
        %1089 = vmatmul.bf16.gmra.mxu0 %v530
        %v1090 = vpop.f32.mrf.mxu0
        %v1091 = vadd.f32 %v1027, %v1090
        %v1092 = vpop.f32.mrf.mxu0
        %v1093 = vadd.f32 %v1029, %v1092
        %1094 = vmatmul.bf16.gmra.mxu0 %v535
        %v1095 = vpop.f32.mrf.mxu0
        %v1096 = vadd.f32 %v1032, %v1095
        %v1097 = vpop.f32.mrf.mxu0
        %v1098 = vadd.f32 %v1034, %v1097
        %1099 = vmatmul.bf16.gmra.mxu0 %v540
        %v1100 = vpop.f32.mrf.mxu0
        %v1101 = vadd.f32 %v1037, %v1100
        %v1102 = vpop.f32.mrf.mxu0
        %v1103 = vadd.f32 %v1039, %v1102
        %1104 = vmatmul.bf16.gmra.mxu0 %v545
        %v1105 = vpop.f32.mrf.mxu0
        %v1106 = vadd.f32 %v1042, %v1105
        %v1107 = vpop.f32.mrf.mxu0
        %v1108 = vadd.f32 %v1044, %v1107
        %1109 = vmatmul.bf16.gmra.mxu0 %v550
        %v1110 = vpop.f32.mrf.mxu0
        %v1111 = vadd.f32 %v1047, %v1110
        %v1112 = vpop.f32.mrf.mxu0
        %v1113 = vadd.f32 %v1049, %v1112
        %1114 = vmatmul.bf16.gmra.mxu0 %v555
        %v1115 = vpop.f32.mrf.mxu0
        %v1116 = vadd.f32 %v1052, %v1115
        %v1117 = vpop.f32.mrf.mxu0
        %v1118 = vadd.f32 %v1054, %v1117
        %1119 = vmatmul.bf16.gmra.mxu0 %v560
        %v1120 = vpop.f32.mrf.mxu0
        %v1121 = vadd.f32 %v1057, %v1120
        %v1122 = vpop.f32.mrf.mxu0
        %v1123 = vadd.f32 %v1059, %v1122
        %1124 = vmatmul.bf16.gmra.mxu0 %v565
        %v1125 = vpop.f32.mrf.mxu0
        %v1126 = vadd.f32 %v1062, %v1125
        %v1127 = vpop.f32.mrf.mxu0
        %v1128 = vadd.f32 %v1064, %v1127
        %1129 = vmatmul.bf16.gmra.mxu0 %v570
        %v1130 = vpop.f32.mrf.mxu0
        %v1131 = vadd.f32 %v1067, %v1130
        %v1132 = vpop.f32.mrf.mxu0
        %v1133 = vadd.f32 %v1069, %v1132
        %1134 = vmatmul.bf16.gmra.mxu0 %v575
        %v1135 = vpop.f32.mrf.mxu0
        %v1136 = vadd.f32 %v1072, %v1135
        %v1137 = vpop.f32.mrf.mxu0
        %v1138 = vadd.f32 %v1074, %v1137
        %1139 = vdwg.mxu0
        %1140 = vmatpush.bf16.msra.mxu0 0
        %1141 = vmatpush.bf16.msra.mxu0 0
        %1142 = vmatpush.bf16.msra.mxu0 %v882
        %1143 = vmatpush.bf16.msra.mxu0 %v807
        %1144 = vmatpush.bf16.msra.mxu0 %v806
        %1145 = vmatpush.bf16.msra.mxu0 %v805
        %1146 = vmatpush.bf16.msra.mxu0 %v804
        %1147 = vmatpush.bf16.msra.mxu0 %v803
        %1148 = vmatmul.bf16.gmra.mxu0 %v848
        %v1149 = vpop.f32.mrf.mxu0
        %v1150 = vadd.f32 %v1086, %v1149
        %v1151 = vpop.f32.mrf.mxu0
        %v1152 = vadd.f32 %v1088, %v1151
        %1153 = vmatmul.bf16.gmra.mxu0 %v851
        %v1154 = vpop.f32.mrf.mxu0
        %v1155 = vadd.f32 %v1091, %v1154
        %v1156 = vpop.f32.mrf.mxu0
        %v1157 = vadd.f32 %v1093, %v1156
        %1158 = vmatmul.bf16.gmra.mxu0 %v854
        %v1159 = vpop.f32.mrf.mxu0
        %v1160 = vadd.f32 %v1096, %v1159
        %v1161 = vpop.f32.mrf.mxu0
        %v1162 = vadd.f32 %v1098, %v1161
        %1163 = vmatmul.bf16.gmra.mxu0 %v857
        %v1164 = vpop.f32.mrf.mxu0
        %v1165 = vadd.f32 %v1101, %v1164
        %v1166 = vpop.f32.mrf.mxu0
        %v1167 = vadd.f32 %v1103, %v1166
        %1168 = vmatmul.bf16.gmra.mxu0 %v860
        %v1169 = vpop.f32.mrf.mxu0
        %v1170 = vadd.f32 %v1106, %v1169
        %v1171 = vpop.f32.mrf.mxu0
        %v1172 = vadd.f32 %v1108, %v1171
        %1173 = vmatmul.bf16.gmra.mxu0 %v863
        %v1174 = vpop.f32.mrf.mxu0
        %v1175 = vadd.f32 %v1111, %v1174
        %v1176 = vpop.f32.mrf.mxu0
        %v1177 = vadd.f32 %v1113, %v1176
        %1178 = vmatmul.bf16.gmra.mxu0 %v866
        %v1179 = vpop.f32.mrf.mxu0
        %v1180 = vadd.f32 %v1116, %v1179
        %v1181 = vpop.f32.mrf.mxu0
        %v1182 = vadd.f32 %v1118, %v1181
        %1183 = vmatmul.bf16.gmra.mxu0 %v869
        %v1184 = vpop.f32.mrf.mxu0
        %v1185 = vadd.f32 %v1121, %v1184
        %v1186 = vpop.f32.mrf.mxu0
        %v1187 = vadd.f32 %v1123, %v1186
        %1188 = vmatmul.bf16.gmra.mxu0 %v872
        %v1189 = vpop.f32.mrf.mxu0
        %v1190 = vadd.f32 %v1126, %v1189
        %v1191 = vpop.f32.mrf.mxu0
        %v1192 = vadd.f32 %v1128, %v1191
        %1193 = vmatmul.bf16.gmra.mxu0 %v875
        %v1194 = vpop.f32.mrf.mxu0
        %v1195 = vadd.f32 %v1131, %v1194
        %v1196 = vpop.f32.mrf.mxu0
        %v1197 = vadd.f32 %v1133, %v1196
        %1198 = vmatmul.bf16.gmra.mxu0 %v878
        %v1199 = vpop.f32.mrf.mxu0
        %v1200 = vadd.f32 %v1136, %v1199
        %v1201 = vpop.f32.mrf.mxu0
        %v1202 = vadd.f32 %v1138, %v1201
        %1203 = vdwg.mxu0
        %v1204 = vmax.f32 %v1150, 0.0
        %v1205 = vmax.f32 %v1152, 0.0
        %v1206 = vmax.f32 %v1155, 0.0
        %v1207 = vmax.f32 %v1157, 0.0
        %v1208 = vmax.f32 %v1160, 0.0
        %v1209 = vmax.f32 %v1162, 0.0
        %v1210 = vmax.f32 %v1165, 0.0
        %v1211 = vmax.f32 %v1167, 0.0
        %v1212 = vmax.f32 %v1170, 0.0
        %v1213 = vmax.f32 %v1172, 0.0
        %v1214 = vmax.f32 %v1175, 0.0
        %v1215 = vmax.f32 %v1177, 0.0
        %v1216 = vmax.f32 %v1180, 0.0
        %v1217 = vmax.f32 %v1182, 0.0
        %v1218 = vmax.f32 %v1185, 0.0
        %v1219 = vmax.f32 %v1187, 0.0
        %v1220 = vmax.f32 %v1190, 0.0
        %v1221 = vmax.f32 %v1192, 0.0
        %v1222 = vmax.f32 %v1195, 0.0
        %v1223 = vmax.f32 %v1197, 0.0
        %v1224 = vmax.f32 %v1200, 0.0
        %v1225 = vmax.f32 %v1202, 0.0
        %v1226 = vpack.c.bf16 %v1204, %v1204
        %v1227 = vpack.c.bf16 %v1205, %v1205
        %v1228 = vpack.c.bf16 %v1206, %v1206
        %v1229 = vpack.c.bf16 %v1207, %v1207
        %v1230 = vpack.c.bf16 %v1208, %v1208
        %v1231 = vpack.c.bf16 %v1209, %v1209
        %v1232 = vpack.c.bf16 %v1210, %v1210
        %v1233 = vpack.c.bf16 %v1211, %v1211
        %v1234 = vpack.c.bf16 %v1212, %v1212
        %v1235 = vpack.c.bf16 %v1213, %v1213
        %v1236 = vpack.c.bf16 %v1214, %v1214
        %v1237 = vpack.c.bf16 %v1215, %v1215
        %v1238 = vpack.c.bf16 %v1216, %v1216
        %v1239 = vpack.c.bf16 %v1217, %v1217
        %v1240 = vpack.c.bf16 %v1218, %v1218
        %v1241 = vpack.c.bf16 %v1219, %v1219
        %v1242 = vpack.c.bf16 %v1220, %v1220
        %v1243 = vpack.c.bf16 %v1221, %v1221
        %v1244 = vpack.c.bf16 %v1222, %v1222
        %v1245 = vpack.c.bf16 %v1223, %v1223
        %v1246 = vpack.c.bf16 %v1224, %v1224
        %v1247 = vpack.c.bf16 %v1225, %v1225
        %vm1248 = vcmask 289792
        %1249 = vst.msk [vmem:[%s177] sm:$0xf] %vm1248, %v1226
        %1250 = vst.msk [vmem:[%s177 + $0x4] sm:$0xf] %vm1248, %v1227
        %1251 = vst.msk [vmem:[%s177 + $0x8] sm:$0xf] %vm1248, %v1228
        %1252 = vst.msk [vmem:[%s177 + $0xc] sm:$0xf] %vm1248, %v1229
        %1253 = vst.msk [vmem:[%s177 + $0x10] sm:$0xf] %vm1248, %v1230
        %1254 = vst.msk [vmem:[%s177 + $0x14] sm:$0xf] %vm1248, %v1231
        %1255 = vst.msk [vmem:[%s177 + $0x18] sm:$0xf] %vm1248, %v1232
        %1256 = vst.msk [vmem:[%s177 + $0x1c] sm:$0xf] %vm1248, %v1233
        %1257 = vst.msk [vmem:[%s177 + $0x20] sm:$0xf] %vm1248, %v1234
        %1258 = vst.msk [vmem:[%s177 + $0x24] sm:$0xf] %vm1248, %v1235
        %1259 = vst.msk [vmem:[%s177 + $0x28] sm:$0xf] %vm1248, %v1236
        %1260 = vst.msk [vmem:[%s177 + $0x2c] sm:$0xf] %vm1248, %v1237
        %1261 = vst.msk [vmem:[%s177 + $0x30] sm:$0xf] %vm1248, %v1238
        %1262 = vst.msk [vmem:[%s177 + $0x34] sm:$0xf] %vm1248, %v1239
        %1263 = vst.msk [vmem:[%s177 + $0x38] sm:$0xf] %vm1248, %v1240
        %1264 = vst.msk [vmem:[%s177 + $0x3c] sm:$0xf] %vm1248, %v1241
        %1265 = vst.msk [vmem:[%s177 + $0x40] sm:$0xf] %vm1248, %v1242
        %1266 = vst.msk [vmem:[%s177 + $0x44] sm:$0xf] %vm1248, %v1243
        %1267 = vst.msk [vmem:[%s177 + $0x48] sm:$0xf] %vm1248, %v1244
        %1268 = vst.msk [vmem:[%s177 + $0x4c] sm:$0xf] %vm1248, %v1245
        %1269 = vst.msk [vmem:[%s177 + $0x50] sm:$0xf] %vm1248, %v1246
        %1270 = vst.msk [vmem:[%s177 + $0x54] sm:$0xf] %vm1248, %v1247
        %s1271 = sand.u32 %s90, 1
        %s1272 = sand.u32 %s90, 1
        %s1273 = smul.addr %s1272, 88
        %s1274 = scalar_lea.vmem [#allocation2], %s1273
        // Predicated region
        $region33: #{dave2v1_forward.5} parent=31 // pred_check
          %p1275 = pneg %p100
        $region34: #{dave2v1_forward.5} parent=31 // pred_check_branch
          %1277 = sbr.rel (%p1275) target = $region36
        $region35: #{dave2v1_forward.5} parent=31 // pred_region
          %s1278 = smul.u32 22, %s14
          %s1279 = ssub.s32 43, %s1278
          %p1280 = scmp.lt.s32.totalorder %s1279, 22
          %s1281 = scalar_select %p1280, %s1279, 22
          %s1282 = smul.u32 4, %s1281
          %p1283 = scmp.ne.s32.totalorder 0, %s1282
          %s1284 = smul.addr %s1278, 4
          %s1285 = scalar_lea.vmem %s3, %s1284
          // Predicated region
          $region37: #{dave2v1_forward.5} parent=35 // pred_check
            %p1286 = pneg %p1283
          $region38: #{dave2v1_forward.5} parent=35 // pred_check_branch
            %1288 = sbr.rel (%p1286) target = $region40
          $region39: #{dave2v1_forward.5} parent=35 // pred_region
            // Predicated region
            $region41: #{dave2v1_forward.5} parent=39 // pred_check
              _
            $region42: #{dave2v1_forward.5} parent=39 // pred_check_branch
              %1290 = sbr.rel target = $region44
            $region43: #{dave2v1_forward.5} parent=39 // pred_region
              // Predicated region
              $region63: #{dave2v1_forward.5} parent=43 // pred_check
                _
              $region64: #{dave2v1_forward.5} parent=43 // pred_check_branch
                %1383 = sbr.rel (0) target = $region66
              $region65: #{dave2v1_forward.5} parent=43 // pred_region
                %s1385 = ssub.s32 16, 1
                %s1386 = sdiv.u32.pop %s1281, 22
                %s1387 = srem.u32.pop %s1281, 22
                // While loop
                $region67: #{dave2v1_forward.5} parent=65 // loop_pre_header
                  _
                $region68: #{dave2v1_forward.5} parent=65 // loop_header
                  %s1389 = sphi 0, %s1391
                  %p1390 = scmp.ge.s32.totalorder %s1389, %s1386
                  %s1394 = sphi 0, %s1443
                  %s1395 = sphi %s1274, %s1446
                  %s1396 = sphi %s1285, %s1447
                $region69: #{dave2v1_forward.5} parent=65 // loop_header_branch
                  %1393 = sbr.rel (%p1390) target = $region73
                $region70: #{dave2v1_forward.5} parent=65 // loop_body
                  %v1397 = vld [vmem:[%s1395] sm:%s1385]
                  %1398 = vst [vmem:[%s1396] sm:%s1385] %v1397
                  %v1399 = vld [vmem:[%s1395 + $0x4] sm:%s1385]
                  %1400 = vst [vmem:[%s1396 + $0x4] sm:%s1385] %v1399
                  %v1401 = vld [vmem:[%s1395 + $0x8] sm:%s1385]
                  %1402 = vst [vmem:[%s1396 + $0x8] sm:%s1385] %v1401
                  %v1403 = vld [vmem:[%s1395 + $0xc] sm:%s1385]
                  %1404 = vst [vmem:[%s1396 + $0xc] sm:%s1385] %v1403
                  %v1405 = vld [vmem:[%s1395 + $0x10] sm:%s1385]
                  %1406 = vst [vmem:[%s1396 + $0x10] sm:%s1385] %v1405
                  %v1407 = vld [vmem:[%s1395 + $0x14] sm:%s1385]
                  %1408 = vst [vmem:[%s1396 + $0x14] sm:%s1385] %v1407
                  %v1409 = vld [vmem:[%s1395 + $0x18] sm:%s1385]
                  %1410 = vst [vmem:[%s1396 + $0x18] sm:%s1385] %v1409
                  %v1411 = vld [vmem:[%s1395 + $0x1c] sm:%s1385]
                  %1412 = vst [vmem:[%s1396 + $0x1c] sm:%s1385] %v1411
                  %v1413 = vld [vmem:[%s1395 + $0x20] sm:%s1385]
                  %1414 = vst [vmem:[%s1396 + $0x20] sm:%s1385] %v1413
                  %v1415 = vld [vmem:[%s1395 + $0x24] sm:%s1385]
                  %1416 = vst [vmem:[%s1396 + $0x24] sm:%s1385] %v1415
                  %v1417 = vld [vmem:[%s1395 + $0x28] sm:%s1385]
                  %1418 = vst [vmem:[%s1396 + $0x28] sm:%s1385] %v1417
                  %v1419 = vld [vmem:[%s1395 + $0x2c] sm:%s1385]
                  %1420 = vst [vmem:[%s1396 + $0x2c] sm:%s1385] %v1419
                  %v1421 = vld [vmem:[%s1395 + $0x30] sm:%s1385]
                  %1422 = vst [vmem:[%s1396 + $0x30] sm:%s1385] %v1421
                  %v1423 = vld [vmem:[%s1395 + $0x34] sm:%s1385]
                  %1424 = vst [vmem:[%s1396 + $0x34] sm:%s1385] %v1423
                  %v1425 = vld [vmem:[%s1395 + $0x38] sm:%s1385]
                  %1426 = vst [vmem:[%s1396 + $0x38] sm:%s1385] %v1425
                  %v1427 = vld [vmem:[%s1395 + $0x3c] sm:%s1385]
                  %1428 = vst [vmem:[%s1396 + $0x3c] sm:%s1385] %v1427
                  %v1429 = vld [vmem:[%s1395 + $0x40] sm:%s1385]
                  %1430 = vst [vmem:[%s1396 + $0x40] sm:%s1385] %v1429
                  %v1431 = vld [vmem:[%s1395 + $0x44] sm:%s1385]
                  %1432 = vst [vmem:[%s1396 + $0x44] sm:%s1385] %v1431
                  %v1433 = vld [vmem:[%s1395 + $0x48] sm:%s1385]
                  %1434 = vst [vmem:[%s1396 + $0x48] sm:%s1385] %v1433
                  %v1435 = vld [vmem:[%s1395 + $0x4c] sm:%s1385]
                  %1436 = vst [vmem:[%s1396 + $0x4c] sm:%s1385] %v1435
                  %v1437 = vld [vmem:[%s1395 + $0x50] sm:%s1385]
                  %1438 = vst [vmem:[%s1396 + $0x50] sm:%s1385] %v1437
                  %v1439 = vld [vmem:[%s1395 + $0x54] sm:%s1385]
                  %1440 = vst [vmem:[%s1396 + $0x54] sm:%s1385] %v1439
                  %s1441 = sadd.s32 1, %s1394
                  %p1442 = scmp.ge.s32.totalorder %s1441, %s1386
                  %s1443 = scalar_select %p1442, 0, %s1441
                  %s1444 = smul.u32 %s1443, 88
                  %s1445 = smul.u32 %s1443, 88
                  %s1446 = scalar_lea.vmem %s1274, %s1444 [#allocation2]
                  %s1447 = scalar_lea.vmem %s1285, %s1445
                $region71: #{dave2v1_forward.5} parent=65 // loop_footer
                  %s1391 = sadd.s32 %s1389, 1
                $region72: #{dave2v1_forward.5} parent=65 // loop_footer_branch
                  %1388 = sbr.rel target = $region68
                $region73: #{dave2v1_forward.5} parent=65 // loop_exit
                  _
                %s1448 = sdiv.u32.pop %s1281, 22
                %s1449 = srem.u32.pop %s1281, 22
                %s1450 = smul.u32 %s1448, 22
                %s1451 = smul.u32 4, %s1450
                %s1452 = scalar_lea.vmem %s1274, %s1451 [#allocation2]
                %s1453 = smul.u32 4, %s1450
                %s1454 = scalar_lea.vmem %s1285, %s1453
                // While loop
                $region74: #{dave2v1_forward.5} parent=65 // loop_pre_header
                  _
                $region75: #{dave2v1_forward.5} parent=65 // loop_header
                  %s1456 = sphi 0, %s1458
                  %p1457 = scmp.ge.s32.totalorder %s1456, %s1449
                  %s1461 = sphi 0, %s1468
                  %s1462 = sphi %s1452, %s1471
                  %s1463 = sphi %s1454, %s1472
                $region76: #{dave2v1_forward.5} parent=65 // loop_header_branch
                  %1460 = sbr.rel (%p1457) target = $region80
                $region77: #{dave2v1_forward.5} parent=65 // loop_body
                  %v1464 = vld [vmem:[%s1462] sm:%s1385]
                  %1465 = vst [vmem:[%s1463] sm:%s1385] %v1464
                  %s1466 = sadd.s32 1, %s1461
                  %p1467 = scmp.ge.s32.totalorder %s1466, %s1449
                  %s1468 = scalar_select %p1467, 0, %s1466
                  %s1469 = smul.u32 %s1468, 4
                  %s1470 = smul.u32 %s1468, 4
                  %s1471 = scalar_lea.vmem %s1452, %s1469 [#allocation2]
                  %s1472 = scalar_lea.vmem %s1454, %s1470
                $region78: #{dave2v1_forward.5} parent=65 // loop_footer
                  %s1458 = sadd.s32 %s1456, 1
                $region79: #{dave2v1_forward.5} parent=65 // loop_footer_branch
                  %1455 = sbr.rel target = $region75
                $region80: #{dave2v1_forward.5} parent=65 // loop_exit
                  _
              $region66: #{dave2v1_forward.5} parent=43 // pred_fallthru
                _
            $region44: #{dave2v1_forward.5} parent=39 // pred_fallthru
              _
            // Predicated region
            $region45: #{dave2v1_forward.5} parent=39 // pred_check
              _
            $region46: #{dave2v1_forward.5} parent=39 // pred_check_branch
              %1292 = sbr.rel (0) target = $region48
            $region47: #{dave2v1_forward.5} parent=39 // pred_region
              %s1294 = ssub.s32 16, 1
              %s1295 = sdiv.u32.pop %s1281, 22
              %s1296 = srem.u32.pop %s1281, 22
              // While loop
              $region49: #{dave2v1_forward.5} parent=47 // loop_pre_header
                _
              $region50: #{dave2v1_forward.5} parent=47 // loop_header
                %s1298 = sphi 0, %s1300
                %p1299 = scmp.ge.s32.totalorder %s1298, %s1295
                %s1303 = sphi 0, %s1352
                %s1304 = sphi %s1274, %s1355
                %s1305 = sphi %s1285, %s1356
              $region51: #{dave2v1_forward.5} parent=47 // loop_header_branch
                %1302 = sbr.rel (%p1299) target = $region55
              $region52: #{dave2v1_forward.5} parent=47 // loop_body
                %v1306 = vld [vmem:[%s1304] sm:%s1294]
                %1307 = vst [vmem:[%s1305] sm:%s1294] %v1306
                %v1308 = vld [vmem:[%s1304 + $0x4] sm:%s1294]
                %1309 = vst [vmem:[%s1305 + $0x4] sm:%s1294] %v1308
                %v1310 = vld [vmem:[%s1304 + $0x8] sm:%s1294]
                %1311 = vst [vmem:[%s1305 + $0x8] sm:%s1294] %v1310
                %v1312 = vld [vmem:[%s1304 + $0xc] sm:%s1294]
                %1313 = vst [vmem:[%s1305 + $0xc] sm:%s1294] %v1312
                %v1314 = vld [vmem:[%s1304 + $0x10] sm:%s1294]
                %1315 = vst [vmem:[%s1305 + $0x10] sm:%s1294] %v1314
                %v1316 = vld [vmem:[%s1304 + $0x14] sm:%s1294]
                %1317 = vst [vmem:[%s1305 + $0x14] sm:%s1294] %v1316
                %v1318 = vld [vmem:[%s1304 + $0x18] sm:%s1294]
                %1319 = vst [vmem:[%s1305 + $0x18] sm:%s1294] %v1318
                %v1320 = vld [vmem:[%s1304 + $0x1c] sm:%s1294]
                %1321 = vst [vmem:[%s1305 + $0x1c] sm:%s1294] %v1320
                %v1322 = vld [vmem:[%s1304 + $0x20] sm:%s1294]
                %1323 = vst [vmem:[%s1305 + $0x20] sm:%s1294] %v1322
                %v1324 = vld [vmem:[%s1304 + $0x24] sm:%s1294]
                %1325 = vst [vmem:[%s1305 + $0x24] sm:%s1294] %v1324
                %v1326 = vld [vmem:[%s1304 + $0x28] sm:%s1294]
                %1327 = vst [vmem:[%s1305 + $0x28] sm:%s1294] %v1326
                %v1328 = vld [vmem:[%s1304 + $0x2c] sm:%s1294]
                %1329 = vst [vmem:[%s1305 + $0x2c] sm:%s1294] %v1328
                %v1330 = vld [vmem:[%s1304 + $0x30] sm:%s1294]
                %1331 = vst [vmem:[%s1305 + $0x30] sm:%s1294] %v1330
                %v1332 = vld [vmem:[%s1304 + $0x34] sm:%s1294]
                %1333 = vst [vmem:[%s1305 + $0x34] sm:%s1294] %v1332
                %v1334 = vld [vmem:[%s1304 + $0x38] sm:%s1294]
                %1335 = vst [vmem:[%s1305 + $0x38] sm:%s1294] %v1334
                %v1336 = vld [vmem:[%s1304 + $0x3c] sm:%s1294]
                %1337 = vst [vmem:[%s1305 + $0x3c] sm:%s1294] %v1336
                %v1338 = vld [vmem:[%s1304 + $0x40] sm:%s1294]
                %1339 = vst [vmem:[%s1305 + $0x40] sm:%s1294] %v1338
                %v1340 = vld [vmem:[%s1304 + $0x44] sm:%s1294]
                %1341 = vst [vmem:[%s1305 + $0x44] sm:%s1294] %v1340
                %v1342 = vld [vmem:[%s1304 + $0x48] sm:%s1294]
                %1343 = vst [vmem:[%s1305 + $0x48] sm:%s1294] %v1342
                %v1344 = vld [vmem:[%s1304 + $0x4c] sm:%s1294]
                %1345 = vst [vmem:[%s1305 + $0x4c] sm:%s1294] %v1344
                %v1346 = vld [vmem:[%s1304 + $0x50] sm:%s1294]
                %1347 = vst [vmem:[%s1305 + $0x50] sm:%s1294] %v1346
                %v1348 = vld [vmem:[%s1304 + $0x54] sm:%s1294]
                %1349 = vst [vmem:[%s1305 + $0x54] sm:%s1294] %v1348
                %s1350 = sadd.s32 1, %s1303
                %p1351 = scmp.ge.s32.totalorder %s1350, %s1295
                %s1352 = scalar_select %p1351, 0, %s1350
                %s1353 = smul.u32 %s1352, 88
                %s1354 = smul.u32 %s1352, 88
                %s1355 = scalar_lea.vmem %s1274, %s1353 [#allocation2]
                %s1356 = scalar_lea.vmem %s1285, %s1354
              $region53: #{dave2v1_forward.5} parent=47 // loop_footer
                %s1300 = sadd.s32 %s1298, 1
              $region54: #{dave2v1_forward.5} parent=47 // loop_footer_branch
                %1297 = sbr.rel target = $region50
              $region55: #{dave2v1_forward.5} parent=47 // loop_exit
                _
              %s1357 = sdiv.u32.pop %s1281, 22
              %s1358 = srem.u32.pop %s1281, 22
              %s1359 = smul.u32 %s1357, 22
              %s1360 = smul.u32 4, %s1359
              %s1361 = scalar_lea.vmem %s1274, %s1360 [#allocation2]
              %s1362 = smul.u32 4, %s1359
              %s1363 = scalar_lea.vmem %s1285, %s1362
              // While loop
              $region56: #{dave2v1_forward.5} parent=47 // loop_pre_header
                _
              $region57: #{dave2v1_forward.5} parent=47 // loop_header
                %s1365 = sphi 0, %s1367
                %p1366 = scmp.ge.s32.totalorder %s1365, %s1358
                %s1370 = sphi 0, %s1377
                %s1371 = sphi %s1361, %s1380
                %s1372 = sphi %s1363, %s1381
              $region58: #{dave2v1_forward.5} parent=47 // loop_header_branch
                %1369 = sbr.rel (%p1366) target = $region62
              $region59: #{dave2v1_forward.5} parent=47 // loop_body
                %v1373 = vld [vmem:[%s1371] sm:%s1294]
                %1374 = vst [vmem:[%s1372] sm:%s1294] %v1373
                %s1375 = sadd.s32 1, %s1370
                %p1376 = scmp.ge.s32.totalorder %s1375, %s1358
                %s1377 = scalar_select %p1376, 0, %s1375
                %s1378 = smul.u32 %s1377, 4
                %s1379 = smul.u32 %s1377, 4
                %s1380 = scalar_lea.vmem %s1361, %s1378 [#allocation2]
                %s1381 = scalar_lea.vmem %s1363, %s1379
              $region60: #{dave2v1_forward.5} parent=47 // loop_footer
                %s1367 = sadd.s32 %s1365, 1
              $region61: #{dave2v1_forward.5} parent=47 // loop_footer_branch
                %1364 = sbr.rel target = $region57
              $region62: #{dave2v1_forward.5} parent=47 // loop_exit
                _
            $region48: #{dave2v1_forward.5} parent=39 // pred_fallthru
              _
          $region40: #{dave2v1_forward.5} parent=35 // pred_fallthru
            _
          %1473 = vnop
        $region36: #{dave2v1_forward.5} parent=31 // pred_fallthru
          _
      $region32: #{dave2v1_forward.5} parent=5 // pred_fallthru
        _
      %p1474 = scmp.le.s32.totalorder 2, %s9
      // Predicated region
      $region81: #{dave2v1_forward.5} parent=5 // pred_check
        %p1475 = pneg %p1474
      $region82: #{dave2v1_forward.5} parent=5 // pred_check_branch
        %1477 = sbr.rel (%p1475) target = $region84
      $region83: #{dave2v1_forward.5} parent=5 // pred_region
        %s1478 = ssub.s32 %s9, 2
        // Predicated region
        $region85: #{dave2v1_forward.5} parent=83 // pred_check
          %p1479 = pneg %p106
        $region86: #{dave2v1_forward.5} parent=83 // pred_check_branch
          %1481 = sbr.rel (%p1479) target = $region88
        $region87: #{dave2v1_forward.5} parent=83 // pred_region
          %s1482 = sand.u32 %s91, 1
          %s1483 = sand.u32 %s91, 1
          %s1484 = smul.addr %s1483, 88
          %s1485 = scalar_lea.vmem [#allocation2], %s1484
        $region88: #{dave2v1_forward.5} parent=83 // pred_fallthru
          _
      $region84: #{dave2v1_forward.5} parent=5 // pred_fallthru
        _
    $region6: #{dave2v1_forward.5} parent=1 // loop_footer
      %s13 = sadd.s32 1, %s9
    $region7: #{dave2v1_forward.5} parent=1 // loop_footer_branch
      %8 = sbr.rel target = $region3
    $region8: #{dave2v1_forward.5} parent=1 // loop_exit
      _

// kernel: dave2v1_forward.6
$region0: #{dave2v1_forward.6}
  #allocation0 [shape = 'u32[]', space=smem, size = 0x4, offset = 0x4, fixed_abs, tag = 'smem constant byte address 0x4 - core index']
  #allocation1 [shape = 'u32[72,128]{1,0:T(1,128)}', space=vmem, size = 0x9000, scoped, tag = 'internal scratch']
  %s0 = inlined_call_operand.vmem [shape: bf16[50,900], index: 0, kind: input, shape index: {}]
  %s1 = inlined_call_operand.vmem [shape: bf16[900,48], index: 1, kind: input, shape index: {}]
  %s2 = inlined_call_operand.vmem [shape: f32[1,48], index: 2, kind: input, shape index: {}]
  %s3 = inlined_call_operand.vmem [shape: bf16[50,48], index: 3, kind: output, shape index: {}]
  %s4 = sld [smem:[#allocation0]]
  $region89: #{dave2v1_forward.6} parent=0
    _
  %s6 = ssub.s32 1, %s4
  %s7 = scalar_select 0, %s6, %s4
  $region1: #{dave2v1_forward.6} parent=0
    #allocation2 [shape = 'u8[16384]{0}', space=vmem, size = 0x4000, scoped, tag = 'output window, operand 0']
    loop: start=0, step=1, limit=4
    $region2: #{dave2v1_forward.6} parent=1 // loop_pre_header
      _
    $region3: #{dave2v1_forward.6} parent=1 // loop_header
      %s9 = sphi 0, %s13
      %p10 = scmp.ge.s32.totalorder %s9, 4
      %s19 = sphi 0, %s21
      %s22 = sphi 0, %s19
      %s23 = sphi 0, %s22
      %s39 = sphi 0, %s23
      %s43 = sphi 0, %s43
      %s45 = sphi 0, %s43
      %s46 = sphi 0, %s45
      %s60 = sphi 0, %s46
      %s64 = sphi 0, %s64
      %s66 = sphi 0, %s64
      %s67 = sphi 0, %s66
      %s81 = sphi 0, %s67
      %s87 = sphi 0, %s89
      %s90 = sphi 0, %s87
      %s91 = sphi 0, %s90
      %s107 = sphi 0, %s91
    $region4: #{dave2v1_forward.6} parent=1 // loop_header_branch
      %12 = sbr.rel (%p10) target = $region8
    $region5: #{dave2v1_forward.6} parent=1 // loop_body
      %s14 = ssub.s32 %s9, 1
      %s15 = ssub.s32 %s9, 2
      %s16 = sadd.s32 %s9, 1
      %s17 = ssub.s32 %s9, %s16
      %p18 = scmp.eq.s32.totalorder %s17, 0
      %s20 = sadd.s32 %s19, 1
      %s21 = scalar_select %p18, %s19, %s20
      %p24 = pneg %p18
      %p25 = scmp.eq.s32.totalorder %s9, 1
      %p26 = por %p24, %p25
      %p27 = scmp.ne.s32.totalorder %s19, %s22
      %p28 = scmp.eq.s32.totalorder %s9, 0
      %p29 = por %p27, %p28
      %p30 = scmp.ne.s32.totalorder %s19, %s22
      %p31 = scmp.eq.s32.totalorder %s14, 1
      %p32 = por %p30, %p31
      %p33 = scmp.ne.s32.totalorder %s22, %s23
      %p34 = scmp.eq.s32.totalorder %s14, 0
      %p35 = por %p33, %p34
      %p36 = scmp.ne.s32.totalorder %s22, %s23
      %p37 = scmp.eq.s32.totalorder %s15, 1
      %p38 = por %p36, %p37
      %p40 = scmp.ne.s32.totalorder %s23, %s39
      %p41 = scmp.eq.s32.totalorder %s15, 0
      %p42 = por %p40, %p41
      %s44 = sadd.s32 %s43, 1
      %p47 = scmp.eq.s32.totalorder %s9, 1
      %p48 = scmp.ne.s32.totalorder %s43, %s45
      %p49 = scmp.eq.s32.totalorder %s9, 0
      %p50 = por %p48, %p49
      %p51 = scmp.ne.s32.totalorder %s43, %s45
      %p52 = scmp.eq.s32.totalorder %s14, 1
      %p53 = por %p51, %p52
      %p54 = scmp.ne.s32.totalorder %s45, %s46
      %p55 = scmp.eq.s32.totalorder %s14, 0
      %p56 = por %p54, %p55
      %p57 = scmp.ne.s32.totalorder %s45, %s46
      %p58 = scmp.eq.s32.totalorder %s15, 1
      %p59 = por %p57, %p58
      %p61 = scmp.ne.s32.totalorder %s46, %s60
      %p62 = scmp.eq.s32.totalorder %s15, 0
      %p63 = por %p61, %p62
      %s65 = sadd.s32 %s64, 1
      %p68 = scmp.eq.s32.totalorder %s9, 1
      %p69 = scmp.ne.s32.totalorder %s64, %s66
      %p70 = scmp.eq.s32.totalorder %s9, 0
      %p71 = por %p69, %p70
      %p72 = scmp.ne.s32.totalorder %s64, %s66
      %p73 = scmp.eq.s32.totalorder %s14, 1
      %p74 = por %p72, %p73
      %p75 = scmp.ne.s32.totalorder %s66, %s67
      %p76 = scmp.eq.s32.totalorder %s14, 0
      %p77 = por %p75, %p76
      %p78 = scmp.ne.s32.totalorder %s66, %s67
      %p79 = scmp.eq.s32.totalorder %s15, 1
      %p80 = por %p78, %p79
      %p82 = scmp.ne.s32.totalorder %s67, %s81
      %p83 = scmp.eq.s32.totalorder %s15, 0
      %p84 = por %p82, %p83
      %s85 = ssub.s32 %s9, %s16
      %p86 = scmp.eq.s32.totalorder %s85, 0
      %s88 = sadd.s32 %s87, 1
      %s89 = scalar_select %p86, %s87, %s88
      %p92 = pneg %p86
      %p93 = scmp.eq.s32.totalorder %s9, 1
      %p94 = por %p92, %p93
      %p95 = scmp.ne.s32.totalorder %s87, %s90
      %p96 = scmp.eq.s32.totalorder %s9, 0
      %p97 = por %p95, %p96
      %p98 = scmp.ne.s32.totalorder %s87, %s90
      %p99 = scmp.eq.s32.totalorder %s14, 1
      %p100 = por %p98, %p99
      %p101 = scmp.ne.s32.totalorder %s90, %s91
      %p102 = scmp.eq.s32.totalorder %s14, 0
      %p103 = por %p101, %p102
      %p104 = scmp.ne.s32.totalorder %s90, %s91
      %p105 = scmp.eq.s32.totalorder %s15, 1
      %p106 = por %p104, %p105
      %p108 = scmp.ne.s32.totalorder %s91, %s107
      %p109 = scmp.eq.s32.totalorder %s15, 0
      %p110 = por %p108, %p109
      %p111 = scmp.le.s32.totalorder 1, %s9
      %p112 = scmp.lt.s32.totalorder %s9, 3
      %p113 = pnand %p111, %p112
      %p114 = pneg %p113
      // Predicated region
      $region9: #{dave2v1_forward.6} parent=5 // pred_check
        _
      $region10: #{dave2v1_forward.6} parent=5 // pred_check_branch
        %116 = sbr.rel (%p113) target = $region12
      $region11: #{dave2v1_forward.6} parent=5 // pred_region
        %s117 = ssub.s32 %s9, 1
        // Predicated region
        $region13: #{dave2v1_forward.6} parent=11 // pred_check
          %p118 = pneg %p56
        $region14: #{dave2v1_forward.6} parent=11 // pred_check_branch
          %120 = sbr.rel (%p118) target = $region16
        $region15: #{dave2v1_forward.6} parent=11 // pred_region
          _
        $region16: #{dave2v1_forward.6} parent=11 // pred_fallthru
          _
        // Predicated region
        $region17: #{dave2v1_forward.6} parent=11 // pred_check
          %p121 = pneg %p77
        $region18: #{dave2v1_forward.6} parent=11 // pred_check_branch
          %123 = sbr.rel (%p121) target = $region20
        $region19: #{dave2v1_forward.6} parent=11 // pred_region
          _
        $region20: #{dave2v1_forward.6} parent=11 // pred_fallthru
          _
      $region12: #{dave2v1_forward.6} parent=5 // pred_fallthru
        _
      %p124 = scmp.lt.s32.totalorder %s9, 2
      // Predicated region
      $region21: #{dave2v1_forward.6} parent=5 // pred_check
        %p125 = pneg %p124
      $region22: #{dave2v1_forward.6} parent=5 // pred_check_branch
        %127 = sbr.rel (%p125) target = $region24
      $region23: #{dave2v1_forward.6} parent=5 // pred_region
        // Predicated region
        $region25: #{dave2v1_forward.6} parent=23 // pred_check
          %p128 = pneg %p29
        $region26: #{dave2v1_forward.6} parent=23 // pred_check_branch
          %130 = sbr.rel (%p128) target = $region28
        $region27: #{dave2v1_forward.6} parent=23 // pred_region
          %s131 = smul.u32 4, %s9
          %s132 = ssub.s32 7, %s131
          %p133 = scmp.lt.s32.totalorder %s132, 4
          %s134 = scalar_select %p133, %s132, 4
          %s135 = smul.u32 4, %s134
          %s136 = smul.u32 %s135, 8
          %p137 = scmp.lt.s32.totalorder %s131, 6
          %s138 = scalar_select %p137, %s131, 6
          %s139 = smul.addr %s138, 8
          %s140 = smul.addr %s139, 4
          %s141 = scalar_lea.vmem %s0, %s140
          %s142 = smul.u32 4, %s9
          %s143 = ssub.s32 7, %s142
          %p144 = scmp.lt.s32.totalorder %s143, 4
          %s145 = scalar_select %p144, %s143, 4
          %s146 = smul.u32 4, %s145
          %s147 = smul.u32 %s146, 8
        $region28: #{dave2v1_forward.6} parent=23 // pred_fallthru
          _
      $region24: #{dave2v1_forward.6} parent=5 // pred_fallthru
        _
      %p148 = scmp.le.s32.totalorder 1, %s9
      %p149 = scmp.lt.s32.totalorder %s9, 3
      %p150 = pnand %p148, %p149
      %p151 = pneg %p150
      // Predicated region
      $region29: #{dave2v1_forward.6} parent=5 // pred_check
        _
      $region30: #{dave2v1_forward.6} parent=5 // pred_check_branch
        %153 = sbr.rel (%p150) target = $region32
      $region31: #{dave2v1_forward.6} parent=5 // pred_region
        %s154 = ssub.s32 %s9, 1
        %s155 = smul.u32 4, %s14
        %s156 = ssub.s32 7, %s155
        %p157 = scmp.lt.s32.totalorder %s156, 4
        %s158 = scalar_select %p157, %s156, 4
        %s159 = smul.u32 4, %s158
        %s160 = smul.u32 %s159, 8
        %p161 = scmp.lt.s32.totalorder %s155, 6
        %s162 = scalar_select %p161, %s155, 6
        %s163 = smul.addr %s162, 8
        %s164 = smul.addr %s163, 4
        %s165 = scalar_lea.vmem %s0, %s164
        %p166 = pneg %p35
        %p167 = pneg %p32
        %p168 = pneg %p56
        %p169 = pneg %p53
        %p170 = pneg %p77
        %p171 = pneg %p74
        %p172 = pneg %p103
        %p173 = pneg %p100
        %s174 = sand.u32 %s90, 1
        %s175 = sand.u32 %s90, 1
        %s176 = smul.addr %s175, 16
        %s177 = scalar_lea.vmem [#allocation2], %s176
        %s178 = smul.u32 4, %s14
        %s179 = ssub.s32 7, %s178
        %p180 = scmp.lt.s32.totalorder %s179, 4
        %s181 = scalar_select %p180, %s179, 4
        %s182 = smul.u32 4, %s181
        %s183 = smul.u32 %s182, 8
        %p184 = scmp.lt.s32.totalorder %s178, 6
        %s185 = scalar_select %p184, %s178, 6
        %s186 = smul.addr %s185, 8
        %s187 = smul.addr %s186, 4
        %s188 = scalar_lea.vmem %s0, %s187
        %s189 = smul.u32 4, %s14
        %s190 = ssub.s32 7, %s189
        %p191 = scmp.lt.s32.totalorder %s190, 4
        %s192 = scalar_select %p191, %s190, 4
        %s193 = smul.u32 4, %s192
        %s194 = smul.u32 %s193, 8
        %s195 = smul.u32 4, %s14
        %s196 = ssub.s32 7, %s195
        %p197 = scmp.lt.s32.totalorder %s196, 4
        %s198 = scalar_select %p197, %s196, 4
        %s199 = smul.u32 4, %s198
        %v201 = vld [vmem:[%s188] sm:$0xff]
        %v202 = vld [vmem:[%s188 + $0x8] sm:$0xff]
        %v203 = vld [vmem:[%s188 + $0x10] sm:$0xff]
        %v204 = vld [vmem:[%s188 + $0x18] sm:$0xff]
        %v205 = vld [vmem:[%s188 + $0x20] sm:$0xff]
        %v206 = vld [vmem:[%s188 + $0x28] sm:$0xff]
        %v207 = vld [vmem:[%s188 + $0x30] sm:$0xff]
        %v208 = vld [vmem:[%s188 + $0x38] sm:$0xff]
        %v209 = vld [vmem:[%s188 + $0x40] sm:$0xff]
        %v210 = vld [vmem:[%s188 + $0x48] sm:$0xff]
        %v211 = vld [vmem:[%s188 + $0x50] sm:$0xff]
        %v212 = vld [vmem:[%s188 + $0x58] sm:$0xff]
        %v213 = vld [vmem:[%s188 + $0x60] sm:$0xff]
        %v214 = vld [vmem:[%s188 + $0x68] sm:$0xff]
        %v215 = vld [vmem:[%s188 + $0x70] sm:$0xff]
        %v216 = vld [vmem:[%s188 + $0x78] sm:$0xff]
        %v217 = vld [vmem:[%s1] sm:$0xf]
        %v218 = vld [vmem:[%s1 + $0x4] sm:$0xf]
        %v219 = vld [vmem:[%s1 + $0x8] sm:$0xf]
        %v220 = vld [vmem:[%s1 + $0xc] sm:$0xf]
        %v221 = vld [vmem:[%s1 + $0x10] sm:$0xf]
        %v222 = vld [vmem:[%s1 + $0x14] sm:$0xf]
        %v223 = vld [vmem:[%s1 + $0x18] sm:$0xf]
        %v224 = vld [vmem:[%s1 + $0x1c] sm:$0xf]
        %v225 = vld [vmem:[%s1 + $0x20] sm:$0xf]
        %v226 = vld [vmem:[%s1 + $0x24] sm:$0xf]
        %v227 = vld [vmem:[%s1 + $0x28] sm:$0xf]
        %v228 = vld [vmem:[%s1 + $0x2c] sm:$0xf]
        %v229 = vld [vmem:[%s1 + $0x30] sm:$0xf]
        %v230 = vld [vmem:[%s1 + $0x34] sm:$0xf]
        %v231 = vld [vmem:[%s1 + $0x38] sm:$0xf]
        %v232 = vld [vmem:[%s1 + $0x3c] sm:$0xf]
        %v233 = vld [vmem:[%s1 + $0x40] sm:$0xf]
        %v234 = vld [vmem:[%s1 + $0x44] sm:$0xf]
        %v235 = vld [vmem:[%s1 + $0x48] sm:$0xf]
        %v236 = vld [vmem:[%s1 + $0x4c] sm:$0xf]
        %v237 = vld [vmem:[%s1 + $0x50] sm:$0xf]
        %v238 = vld [vmem:[%s1 + $0x54] sm:$0xf]
        %v239 = vld [vmem:[%s1 + $0x58] sm:$0xf]
        %v240 = vld [vmem:[%s1 + $0x5c] sm:$0xf]
        %v241 = vld [vmem:[%s1 + $0x60] sm:$0xf]
        %v242 = vld [vmem:[%s1 + $0x64] sm:$0xf]
        %v243 = vld [vmem:[%s1 + $0x68] sm:$0xf]
        %v244 = vld [vmem:[%s1 + $0x6c] sm:$0xf]
        %v245 = vld [vmem:[%s1 + $0x70] sm:$0xf]
        %v246 = vld [vmem:[%s1 + $0x74] sm:$0xf]
        %v247 = vld [vmem:[%s1 + $0x78] sm:$0xf]
        %v248 = vld [vmem:[%s1 + $0x7c] sm:$0xf]
        %v249 = vld [vmem:[%s1 + $0x80] sm:$0xf]
        %v250 = vld [vmem:[%s1 + $0x84] sm:$0xf]
        %v251 = vld [vmem:[%s1 + $0x88] sm:$0xf]
        %v252 = vld [vmem:[%s1 + $0x8c] sm:$0xf]
        %v253 = vld [vmem:[%s1 + $0x90] sm:$0xf]
        %v254 = vld [vmem:[%s1 + $0x94] sm:$0xf]
        %v255 = vld [vmem:[%s1 + $0x98] sm:$0xf]
        %v256 = vld [vmem:[%s1 + $0x9c] sm:$0xf]
        %v257 = vld [vmem:[%s1 + $0xa0] sm:$0xf]
        %v258 = vld [vmem:[%s1 + $0xa4] sm:$0xf]
        %v259 = vld [vmem:[%s1 + $0xa8] sm:$0xf]
        %v260 = vld [vmem:[%s1 + $0xac] sm:$0xf]
        %v261 = vld [vmem:[%s1 + $0xb0] sm:$0xf]
        %v262 = vld [vmem:[%s1 + $0xb4] sm:$0xf]
        %v263 = vld [vmem:[%s1 + $0xb8] sm:$0xf]
        %v264 = vld [vmem:[%s1 + $0xbc] sm:$0xf]
        %v265 = vld [vmem:[%s1 + $0xc0] sm:$0xf]
        %v266 = vld [vmem:[%s1 + $0xc4] sm:$0xf]
        %v267 = vld [vmem:[%s1 + $0xc8] sm:$0xf]
        %v268 = vld [vmem:[%s1 + $0xcc] sm:$0xf]
        %v269 = vld [vmem:[%s1 + $0xd0] sm:$0xf]
        %v270 = vld [vmem:[%s1 + $0xd4] sm:$0xf]
        %v271 = vld [vmem:[%s1 + $0xd8] sm:$0xf]
        %v272 = vld [vmem:[%s1 + $0xdc] sm:$0xf]
        %v273 = vld [vmem:[%s1 + $0xe0] sm:$0xf]
        %v274 = vld [vmem:[%s1 + $0xe4] sm:$0xf]
        %v275 = vld [vmem:[%s1 + $0xe8] sm:$0xf]
        %v276 = vld [vmem:[%s1 + $0xec] sm:$0xf]
        %v277 = vld [vmem:[%s1 + $0xf0] sm:$0xf]
        %v278 = vld [vmem:[%s1 + $0xf4] sm:$0xf]
        %v279 = vld [vmem:[%s1 + $0xf8] sm:$0xf]
        %v280 = vld [vmem:[%s1 + $0xfc] sm:$0xf]
        %v281 = vld [vmem:[%s1 + $0x100] sm:$0xf]
        %v282 = vld [vmem:[%s1 + $0x104] sm:$0xf]
        %v283 = vld [vmem:[%s1 + $0x108] sm:$0xf]
        %v284 = vld [vmem:[%s1 + $0x10c] sm:$0xf]
        %v285 = vld [vmem:[%s1 + $0x110] sm:$0xf]
        %v286 = vld [vmem:[%s1 + $0x114] sm:$0xf]
        %v287 = vld [vmem:[%s1 + $0x118] sm:$0xf]
        %v288 = vld [vmem:[%s1 + $0x11c] sm:$0xf]
        %v289 = vld [vmem:[%s1 + $0x120] sm:$0xf]
        %v290 = vld [vmem:[%s1 + $0x124] sm:$0xf]
        %v291 = vld [vmem:[%s1 + $0x128] sm:$0xf]
        %v292 = vld [vmem:[%s1 + $0x12c] sm:$0xf]
        %v293 = vld [vmem:[%s1 + $0x130] sm:$0xf]
        %v294 = vld [vmem:[%s1 + $0x134] sm:$0xf]
        %v295 = vld [vmem:[%s1 + $0x138] sm:$0xf]
        %v296 = vld [vmem:[%s1 + $0x13c] sm:$0xf]
        %v297 = vld [vmem:[%s1 + $0x140] sm:$0xf]
        %v298 = vld [vmem:[%s1 + $0x144] sm:$0xf]
        %v299 = vld [vmem:[%s1 + $0x148] sm:$0xf]
        %v300 = vld [vmem:[%s1 + $0x14c] sm:$0xf]
        %v301 = vld [vmem:[%s1 + $0x150] sm:$0xf]
        %v302 = vld [vmem:[%s1 + $0x154] sm:$0xf]
        %v303 = vld [vmem:[%s1 + $0x158] sm:$0xf]
        %v304 = vld [vmem:[%s1 + $0x15c] sm:$0xf]
        %v305 = vld [vmem:[%s1 + $0x160] sm:$0xf]
        %v306 = vld [vmem:[%s1 + $0x164] sm:$0xf]
        %v307 = vld [vmem:[%s1 + $0x168] sm:$0xf]
        %v308 = vld [vmem:[%s1 + $0x16c] sm:$0xf]
        %v309 = vld [vmem:[%s1 + $0x170] sm:$0xf]
        %v310 = vld [vmem:[%s1 + $0x174] sm:$0xf]
        %v311 = vld [vmem:[%s1 + $0x178] sm:$0xf]
        %v312 = vld [vmem:[%s1 + $0x17c] sm:$0xf]
        %v313 = vld [vmem:[%s1 + $0x180] sm:$0xf]
        %v314 = vld [vmem:[%s1 + $0x184] sm:$0xf]
        %v315 = vld [vmem:[%s1 + $0x188] sm:$0xf]
        %v316 = vld [vmem:[%s1 + $0x18c] sm:$0xf]
        %v317 = vld [vmem:[%s1 + $0x190] sm:$0xf]
        %v318 = vld [vmem:[%s1 + $0x194] sm:$0xf]
        %v319 = vld [vmem:[%s1 + $0x198] sm:$0xf]
        %v320 = vld [vmem:[%s1 + $0x19c] sm:$0xf]
        %v321 = vld [vmem:[%s1 + $0x1a0] sm:$0xf]
        %v322 = vld [vmem:[%s1 + $0x1a4] sm:$0xf]
        %v323 = vld [vmem:[%s1 + $0x1a8] sm:$0xf]
        %v324 = vld [vmem:[%s1 + $0x1ac] sm:$0xf]
        %v325 = vld [vmem:[%s1 + $0x1b0] sm:$0xf]
        %v326 = vld [vmem:[%s1 + $0x1b4] sm:$0xf]
        %v327 = vld [vmem:[%s1 + $0x1b8] sm:$0xf]
        %v328 = vld [vmem:[%s1 + $0x1bc] sm:$0xf]
        %v329 = vld [vmem:[%s1 + $0x1c0] sm:$0x3]
        %v330 = vld [vmem:[%s2] sm:$0x1]
        %v332 = vperm.slane %v330, 0
        %v350 = vunpack.c.l.b16 %v201
        %v351 = vunpack.c.h.b16 %v201
        %v352 = vunpack.c.l.b16 %v202
        %v353 = vunpack.c.h.b16 %v202
        %v354 = vunpack.c.l.b16 %v203
        %v355 = vunpack.c.h.b16 %v203
        %v356 = vunpack.c.l.b16 %v204
        %v357 = vunpack.c.h.b16 %v204
        %v358 = vunpack.c.l.b16 %v205
        %v359 = vunpack.c.h.b16 %v205
        %v360 = vunpack.c.l.b16 %v206
        %v361 = vunpack.c.h.b16 %v206
        %v362 = vunpack.c.l.b16 %v207
        %v363 = vunpack.c.h.b16 %v207
        %v364 = vunpack.c.l.b16 %v208
        %v365 = vunpack.c.h.b16 %v208
        %v366 = vunpack.c.l.b16 %v209
        %v367 = vunpack.c.h.b16 %v209
        %v368 = vunpack.c.l.b16 %v210
        %v369 = vunpack.c.h.b16 %v210
        %v370 = vunpack.c.l.b16 %v211
        %v371 = vunpack.c.h.b16 %v211
        %v372 = vunpack.c.l.b16 %v212
        %v373 = vunpack.c.h.b16 %v212
        %v374 = vunpack.c.l.b16 %v213
        %v375 = vunpack.c.h.b16 %v213
        %v376 = vunpack.c.l.b16 %v214
        %v377 = vunpack.c.h.b16 %v214
        %v378 = vunpack.c.l.b16 %v215
        %v379 = vunpack.c.h.b16 %v215
        %v380 = vunpack.c.l.b16 %v216
        %v381 = vunpack.c.h.b16 %v216
        %v382 = vpack.c.b16 %v358, %v350
        %v383 = vpack.c.b16 %v359, %v351
        %v384 = vpack.c.b16 %v360, %v352
        %v385 = vpack.c.b16 %v361, %v353
        %v386 = vpack.c.b16 %v362, %v354
        %v387 = vpack.c.b16 %v363, %v355
        %v388 = vpack.c.b16 %v364, %v356
        %v389 = vpack.c.b16 %v365, %v357
        %v390 = vpack.c.b16 %v374, %v366
        %v391 = vpack.c.b16 %v375, %v367
        %v392 = vpack.c.b16 %v376, %v368
        %v393 = vpack.c.b16 %v377, %v369
        %v394 = vpack.c.b16 %v378, %v370
        %v395 = vpack.c.b16 %v379, %v371
        %v396 = vpack.c.b16 %v380, %v372
        %v397 = vpack.c.b16 %v381, %v373
        %v525 = vunpack.c.l.b16 %v217
        %v526 = vunpack.c.l.b16 %v218
        %v527 = vunpack.c.l.b16 %v219
        %v528 = vunpack.c.l.b16 %v220
        %v529 = vunpack.c.l.b16 %v221
        %v530 = vunpack.c.l.b16 %v222
        %v531 = vunpack.c.l.b16 %v223
        %v532 = vunpack.c.l.b16 %v224
        %v533 = vunpack.c.l.b16 %v225
        %v534 = vunpack.c.l.b16 %v226
        %v535 = vunpack.c.l.b16 %v227
        %v536 = vunpack.c.l.b16 %v228
        %v537 = vunpack.c.l.b16 %v229
        %v538 = vunpack.c.l.b16 %v230
        %v539 = vunpack.c.l.b16 %v231
        %v540 = vunpack.c.l.b16 %v232
        %v541 = vunpack.c.l.b16 %v233
        %v542 = vunpack.c.l.b16 %v234
        %v543 = vunpack.c.l.b16 %v235
        %v544 = vunpack.c.l.b16 %v236
        %v545 = vunpack.c.l.b16 %v237
        %v546 = vunpack.c.l.b16 %v238
        %v547 = vunpack.c.l.b16 %v239
        %v548 = vunpack.c.l.b16 %v240
        %v549 = vunpack.c.l.b16 %v241
        %v550 = vunpack.c.l.b16 %v242
        %v551 = vunpack.c.l.b16 %v243
        %v552 = vunpack.c.l.b16 %v244
        %v553 = vunpack.c.l.b16 %v245
        %v554 = vunpack.c.l.b16 %v246
        %v555 = vunpack.c.l.b16 %v247
        %v556 = vunpack.c.l.b16 %v248
        %v557 = vunpack.c.l.b16 %v249
        %v558 = vunpack.c.l.b16 %v250
        %v559 = vunpack.c.l.b16 %v251
        %v560 = vunpack.c.l.b16 %v252
        %v561 = vunpack.c.l.b16 %v253
        %v562 = vunpack.c.l.b16 %v254
        %v563 = vunpack.c.l.b16 %v255
        %v564 = vunpack.c.l.b16 %v256
        %v565 = vunpack.c.l.b16 %v257
        %v566 = vunpack.c.l.b16 %v258
        %v567 = vunpack.c.l.b16 %v259
        %v568 = vunpack.c.l.b16 %v260
        %v569 = vunpack.c.l.b16 %v261
        %v570 = vunpack.c.l.b16 %v262
        %v571 = vunpack.c.l.b16 %v263
        %v572 = vunpack.c.l.b16 %v264
        %v573 = vunpack.c.l.b16 %v265
        %v574 = vunpack.c.l.b16 %v266
        %v575 = vunpack.c.l.b16 %v267
        %v576 = vunpack.c.l.b16 %v268
        %v577 = vunpack.c.l.b16 %v269
        %v578 = vunpack.c.l.b16 %v270
        %v579 = vunpack.c.l.b16 %v271
        %v580 = vunpack.c.l.b16 %v272
        %v581 = vunpack.c.l.b16 %v273
        %v582 = vunpack.c.l.b16 %v274
        %v583 = vunpack.c.l.b16 %v275
        %v584 = vunpack.c.l.b16 %v276
        %v585 = vunpack.c.l.b16 %v277
        %v586 = vunpack.c.l.b16 %v278
        %v587 = vunpack.c.l.b16 %v279
        %v588 = vunpack.c.l.b16 %v280
        %v589 = vunpack.c.l.b16 %v281
        %v590 = vunpack.c.l.b16 %v282
        %v591 = vunpack.c.l.b16 %v283
        %v592 = vunpack.c.l.b16 %v284
        %v593 = vunpack.c.l.b16 %v285
        %v594 = vunpack.c.l.b16 %v286
        %v595 = vunpack.c.l.b16 %v287
        %v596 = vunpack.c.l.b16 %v288
        %v597 = vunpack.c.l.b16 %v289
        %v598 = vunpack.c.l.b16 %v290
        %v599 = vunpack.c.l.b16 %v291
        %v600 = vunpack.c.l.b16 %v292
        %v601 = vunpack.c.l.b16 %v293
        %v602 = vunpack.c.l.b16 %v294
        %v603 = vunpack.c.l.b16 %v295
        %v604 = vunpack.c.l.b16 %v296
        %v605 = vunpack.c.l.b16 %v297
        %v606 = vunpack.c.l.b16 %v298
        %v607 = vunpack.c.l.b16 %v299
        %v608 = vunpack.c.l.b16 %v300
        %v609 = vunpack.c.l.b16 %v301
        %v610 = vunpack.c.l.b16 %v302
        %v611 = vunpack.c.l.b16 %v303
        %v612 = vunpack.c.l.b16 %v304
        %v613 = vunpack.c.l.b16 %v305
        %v614 = vunpack.c.l.b16 %v306
        %v615 = vunpack.c.l.b16 %v307
        %v616 = vunpack.c.l.b16 %v308
        %v617 = vunpack.c.l.b16 %v309
        %v618 = vunpack.c.l.b16 %v310
        %v619 = vunpack.c.l.b16 %v311
        %v620 = vunpack.c.l.b16 %v312
        %v621 = vunpack.c.l.b16 %v313
        %v622 = vunpack.c.l.b16 %v314
        %v623 = vunpack.c.l.b16 %v315
        %v624 = vunpack.c.l.b16 %v316
        %v625 = vunpack.c.l.b16 %v317
        %v626 = vunpack.c.l.b16 %v318
        %v627 = vunpack.c.l.b16 %v319
        %v628 = vunpack.c.l.b16 %v320
        %v629 = vunpack.c.l.b16 %v321
        %v630 = vunpack.c.l.b16 %v322
        %v631 = vunpack.c.l.b16 %v323
        %v632 = vunpack.c.l.b16 %v324
        %v633 = vunpack.c.l.b16 %v325
        %v634 = vunpack.c.l.b16 %v326
        %v635 = vunpack.c.l.b16 %v327
        %v636 = vunpack.c.l.b16 %v328
        %v637 = vunpack.c.l.b16 %v329
        %v638 = vpack.c.b16 %v526, %v525
        %v639 = vpack.c.b16 %v528, %v527
        %v640 = vpack.c.b16 %v530, %v529
        %v641 = vpack.c.b16 %v532, %v531
        %v642 = vpack.c.b16 %v534, %v533
        %v643 = vpack.c.b16 %v536, %v535
        %v644 = vpack.c.b16 %v538, %v537
        %v645 = vpack.c.b16 %v540, %v539
        %v646 = vpack.c.b16 %v542, %v541
        %v647 = vpack.c.b16 %v544, %v543
        %v648 = vpack.c.b16 %v546, %v545
        %v649 = vpack.c.b16 %v548, %v547
        %v650 = vpack.c.b16 %v550, %v549
        %v651 = vpack.c.b16 %v552, %v551
        %v652 = vpack.c.b16 %v554, %v553
        %v653 = vpack.c.b16 %v556, %v555
        %v654 = vpack.c.b16 %v558, %v557
        %v655 = vpack.c.b16 %v560, %v559
        %v656 = vpack.c.b16 %v562, %v561
        %v657 = vpack.c.b16 %v564, %v563
        %v658 = vpack.c.b16 %v566, %v565
        %v659 = vpack.c.b16 %v568, %v567
        %v660 = vpack.c.b16 %v570, %v569
        %v661 = vpack.c.b16 %v572, %v571
        %v662 = vpack.c.b16 %v574, %v573
        %v663 = vpack.c.b16 %v576, %v575
        %v664 = vpack.c.b16 %v578, %v577
        %v665 = vpack.c.b16 %v580, %v579
        %v666 = vpack.c.b16 %v582, %v581
        %v667 = vpack.c.b16 %v584, %v583
        %v668 = vpack.c.b16 %v586, %v585
        %v669 = vpack.c.b16 %v588, %v587
        %v670 = vpack.c.b16 %v590, %v589
        %v671 = vpack.c.b16 %v592, %v591
        %v672 = vpack.c.b16 %v594, %v593
        %v673 = vpack.c.b16 %v596, %v595
        %v674 = vpack.c.b16 %v598, %v597
        %v675 = vpack.c.b16 %v600, %v599
        %v676 = vpack.c.b16 %v602, %v601
        %v677 = vpack.c.b16 %v604, %v603
        %v678 = vpack.c.b16 %v606, %v605
        %v679 = vpack.c.b16 %v608, %v607
        %v680 = vpack.c.b16 %v610, %v609
        %v681 = vpack.c.b16 %v612, %v611
        %v682 = vpack.c.b16 %v614, %v613
        %v683 = vpack.c.b16 %v616, %v615
        %v684 = vpack.c.b16 %v618, %v617
        %v685 = vpack.c.b16 %v620, %v619
        %v686 = vpack.c.b16 %v622, %v621
        %v687 = vpack.c.b16 %v624, %v623
        %v688 = vpack.c.b16 %v626, %v625
        %v689 = vpack.c.b16 %v628, %v627
        %v690 = vpack.c.b16 %v630, %v629
        %v691 = vpack.c.b16 %v632, %v631
        %v692 = vpack.c.b16 %v634, %v633
        %v693 = vpack.c.b16 %v636, %v635
        %v694 = vpack.c.b16 %v637, %v637
        %vm751 = vcmask 31744
        %v753 = vsel %vm751, %v389, 0
        %v756 = vsel %vm751, %v397, 0
        %vm758 = vcmask 1041408
        %v760 = vsel %vm758, %v694, 0
        %762 = vmatpush.bf16.msra.mxu0 %v645
        %763 = vmatpush.bf16.msra.mxu0 %v644
        %764 = vmatpush.bf16.msra.mxu0 %v643
        %765 = vmatpush.bf16.msra.mxu0 %v642
        %766 = vmatpush.bf16.msra.mxu0 %v641
        %767 = vmatpush.bf16.msra.mxu0 %v640
        %768 = vmatpush.bf16.msra.mxu0 %v639
        %769 = vmatpush.bf16.msra.mxu0 %v638
        %770 = vmatmul.bf16.gmra.mxu0 %v382
        %v771 = vpop.f32.mrf.mxu0
        %v772 = vadd.f32 %v332, %v771
        %v773 = vpop.f32.mrf.mxu0
        %v774 = vadd.f32 %v332, %v773
        %775 = vmatmul.bf16.gmra.mxu0 %v390
        %v776 = vpop.f32.mrf.mxu0
        %v777 = vadd.f32 %v332, %v776
        %v778 = vpop.f32.mrf.mxu0
        %v779 = vadd.f32 %v332, %v778
        %780 = vdwg.mxu0
        %781 = vmatpush.bf16.msra.mxu0 %v653
        %782 = vmatpush.bf16.msra.mxu0 %v652
        %783 = vmatpush.bf16.msra.mxu0 %v651
        %784 = vmatpush.bf16.msra.mxu0 %v650
        %785 = vmatpush.bf16.msra.mxu0 %v649
        %786 = vmatpush.bf16.msra.mxu0 %v648
        %787 = vmatpush.bf16.msra.mxu0 %v647
        %788 = vmatpush.bf16.msra.mxu0 %v646
        %789 = vmatmul.bf16.gmra.mxu0 %v383
        %v790 = vpop.f32.mrf.mxu0
        %v791 = vadd.f32 %v772, %v790
        %v792 = vpop.f32.mrf.mxu0
        %v793 = vadd.f32 %v774, %v792
        %794 = vmatmul.bf16.gmra.mxu0 %v391
        %v795 = vpop.f32.mrf.mxu0
        %v796 = vadd.f32 %v777, %v795
        %v797 = vpop.f32.mrf.mxu0
        %v798 = vadd.f32 %v779, %v797
        %799 = vdwg.mxu0
        %800 = vmatpush.bf16.msra.mxu0 %v661
        %801 = vmatpush.bf16.msra.mxu0 %v660
        %802 = vmatpush.bf16.msra.mxu0 %v659
        %803 = vmatpush.bf16.msra.mxu0 %v658
        %804 = vmatpush.bf16.msra.mxu0 %v657
        %805 = vmatpush.bf16.msra.mxu0 %v656
        %806 = vmatpush.bf16.msra.mxu0 %v655
        %807 = vmatpush.bf16.msra.mxu0 %v654
        %808 = vmatmul.bf16.gmra.mxu0 %v384
        %v809 = vpop.f32.mrf.mxu0
        %v810 = vadd.f32 %v791, %v809
        %v811 = vpop.f32.mrf.mxu0
        %v812 = vadd.f32 %v793, %v811
        %813 = vmatmul.bf16.gmra.mxu0 %v392
        %v814 = vpop.f32.mrf.mxu0
        %v815 = vadd.f32 %v796, %v814
        %v816 = vpop.f32.mrf.mxu0
        %v817 = vadd.f32 %v798, %v816
        %818 = vdwg.mxu0
        %819 = vmatpush.bf16.msra.mxu0 %v669
        %820 = vmatpush.bf16.msra.mxu0 %v668
        %821 = vmatpush.bf16.msra.mxu0 %v667
        %822 = vmatpush.bf16.msra.mxu0 %v666
        %823 = vmatpush.bf16.msra.mxu0 %v665
        %824 = vmatpush.bf16.msra.mxu0 %v664
        %825 = vmatpush.bf16.msra.mxu0 %v663
        %826 = vmatpush.bf16.msra.mxu0 %v662
        %827 = vmatmul.bf16.gmra.mxu0 %v385
        %v828 = vpop.f32.mrf.mxu0
        %v829 = vadd.f32 %v810, %v828
        %v830 = vpop.f32.mrf.mxu0
        %v831 = vadd.f32 %v812, %v830
        %832 = vmatmul.bf16.gmra.mxu0 %v393
        %v833 = vpop.f32.mrf.mxu0
        %v834 = vadd.f32 %v815, %v833
        %v835 = vpop.f32.mrf.mxu0
        %v836 = vadd.f32 %v817, %v835
        %837 = vdwg.mxu0
        %838 = vmatpush.bf16.msra.mxu0 %v677
        %839 = vmatpush.bf16.msra.mxu0 %v676
        %840 = vmatpush.bf16.msra.mxu0 %v675
        %841 = vmatpush.bf16.msra.mxu0 %v674
        %842 = vmatpush.bf16.msra.mxu0 %v673
        %843 = vmatpush.bf16.msra.mxu0 %v672
        %844 = vmatpush.bf16.msra.mxu0 %v671
        %845 = vmatpush.bf16.msra.mxu0 %v670
        %846 = vmatmul.bf16.gmra.mxu0 %v386
        %v847 = vpop.f32.mrf.mxu0
        %v848 = vadd.f32 %v829, %v847
        %v849 = vpop.f32.mrf.mxu0
        %v850 = vadd.f32 %v831, %v849
        %851 = vmatmul.bf16.gmra.mxu0 %v394
        %v852 = vpop.f32.mrf.mxu0
        %v853 = vadd.f32 %v834, %v852
        %v854 = vpop.f32.mrf.mxu0
        %v855 = vadd.f32 %v836, %v854
        %856 = vdwg.mxu0
        %857 = vmatpush.bf16.msra.mxu0 %v685
        %858 = vmatpush.bf16.msra.mxu0 %v684
        %859 = vmatpush.bf16.msra.mxu0 %v683
        %860 = vmatpush.bf16.msra.mxu0 %v682
        %861 = vmatpush.bf16.msra.mxu0 %v681
        %862 = vmatpush.bf16.msra.mxu0 %v680
        %863 = vmatpush.bf16.msra.mxu0 %v679
        %864 = vmatpush.bf16.msra.mxu0 %v678
        %865 = vmatmul.bf16.gmra.mxu0 %v387
        %v866 = vpop.f32.mrf.mxu0
        %v867 = vadd.f32 %v848, %v866
        %v868 = vpop.f32.mrf.mxu0
        %v869 = vadd.f32 %v850, %v868
        %870 = vmatmul.bf16.gmra.mxu0 %v395
        %v871 = vpop.f32.mrf.mxu0
        %v872 = vadd.f32 %v853, %v871
        %v873 = vpop.f32.mrf.mxu0
        %v874 = vadd.f32 %v855, %v873
        %875 = vdwg.mxu0
        %876 = vmatpush.bf16.msra.mxu0 %v693
        %877 = vmatpush.bf16.msra.mxu0 %v692
        %878 = vmatpush.bf16.msra.mxu0 %v691
        %879 = vmatpush.bf16.msra.mxu0 %v690
        %880 = vmatpush.bf16.msra.mxu0 %v689
        %881 = vmatpush.bf16.msra.mxu0 %v688
        %882 = vmatpush.bf16.msra.mxu0 %v687
        %883 = vmatpush.bf16.msra.mxu0 %v686
        %884 = vmatmul.bf16.gmra.mxu0 %v388
        %v885 = vpop.f32.mrf.mxu0
        %v886 = vadd.f32 %v867, %v885
        %v887 = vpop.f32.mrf.mxu0
        %v888 = vadd.f32 %v869, %v887
        %889 = vmatmul.bf16.gmra.mxu0 %v396
        %v890 = vpop.f32.mrf.mxu0
        %v891 = vadd.f32 %v872, %v890
        %v892 = vpop.f32.mrf.mxu0
        %v893 = vadd.f32 %v874, %v892
        %894 = vdwg.mxu0
        %895 = vmatpush.bf16.msra.mxu0 0
        %896 = vmatpush.bf16.msra.mxu0 0
        %897 = vmatpush.bf16.msra.mxu0 0
        %898 = vmatpush.bf16.msra.mxu0 0
        %899 = vmatpush.bf16.msra.mxu0 0
        %900 = vmatpush.bf16.msra.mxu0 0
        %901 = vmatpush.bf16.msra.mxu0 0
        %902 = vmatpush.bf16.msra.mxu0 %v760
        %903 = vmatmul.bf16.gmra.mxu0 %v753
        %v904 = vpop.f32.mrf.mxu0
        %v905 = vadd.f32 %v886, %v904
        %v906 = vpop.f32.mrf.mxu0
        %v907 = vadd.f32 %v888, %v906
        %908 = vmatmul.bf16.gmra.mxu0 %v756
        %v909 = vpop.f32.mrf.mxu0
        %v910 = vadd.f32 %v891, %v909
        %v911 = vpop.f32.mrf.mxu0
        %v912 = vadd.f32 %v893, %v911
        %913 = vdwg.mxu0
        %v914 = vmax.f32 %v905, 0.0
        %v915 = vmax.f32 %v907, 0.0
        %v916 = vmax.f32 %v910, 0.0
        %v917 = vmax.f32 %v912, 0.0
        %v918 = vpack.c.bf16 %v914, %v914
        %v919 = vpack.c.bf16 %v915, %v915
        %v920 = vpack.c.bf16 %v916, %v916
        %v921 = vpack.c.bf16 %v917, %v917
        %vm922 = vcmask 388096
        %923 = vst.msk [vmem:[%s177] sm:$0xf] %vm922, %v918
        %924 = vst.msk [vmem:[%s177 + $0x4] sm:$0xf] %vm922, %v919
        %925 = vst.msk [vmem:[%s177 + $0x8] sm:$0xf] %vm922, %v920
        %926 = vst.msk [vmem:[%s177 + $0xc] sm:$0xf] %vm922, %v921
        %s927 = sand.u32 %s90, 1
        %s928 = sand.u32 %s90, 1
        %s929 = smul.addr %s928, 16
        %s930 = scalar_lea.vmem [#allocation2], %s929
        // Predicated region
        $region33: #{dave2v1_forward.6} parent=31 // pred_check
          %p931 = pneg %p100
        $region34: #{dave2v1_forward.6} parent=31 // pred_check_branch
          %933 = sbr.rel (%p931) target = $region36
        $region35: #{dave2v1_forward.6} parent=31 // pred_region
          %s934 = smul.u32 4, %s14
          %s935 = ssub.s32 7, %s934
          %p936 = scmp.lt.s32.totalorder %s935, 4
          %s937 = scalar_select %p936, %s935, 4
          %s938 = smul.u32 4, %s937
          %p939 = scmp.ne.s32.totalorder 0, %s938
          %s940 = smul.addr %s934, 4
          %s941 = scalar_lea.vmem %s3, %s940
          // Predicated region
          $region37: #{dave2v1_forward.6} parent=35 // pred_check
            %p942 = pneg %p939
          $region38: #{dave2v1_forward.6} parent=35 // pred_check_branch
            %944 = sbr.rel (%p942) target = $region40
          $region39: #{dave2v1_forward.6} parent=35 // pred_region
            // Predicated region
            $region41: #{dave2v1_forward.6} parent=39 // pred_check
              _
            $region42: #{dave2v1_forward.6} parent=39 // pred_check_branch
              %946 = sbr.rel target = $region44
            $region43: #{dave2v1_forward.6} parent=39 // pred_region
              // Predicated region
              $region63: #{dave2v1_forward.6} parent=43 // pred_check
                _
              $region64: #{dave2v1_forward.6} parent=43 // pred_check_branch
                %1002 = sbr.rel (0) target = $region66
              $region65: #{dave2v1_forward.6} parent=43 // pred_region
                %s1004 = ssub.s32 16, 1
                %s1005 = sshrl.u32 %s937, 2
                // While loop
                $region67: #{dave2v1_forward.6} parent=65 // loop_pre_header
                  _
                $region68: #{dave2v1_forward.6} parent=65 // loop_header
                  %s1007 = sphi 0, %s1009
                  %p1008 = scmp.ge.s32.totalorder %s1007, %s1005
                  %s1012 = sphi 0, %s1025
                  %s1013 = sphi %s930, %s1028
                  %s1014 = sphi %s941, %s1029
                $region69: #{dave2v1_forward.6} parent=65 // loop_header_branch
                  %1011 = sbr.rel (%p1008) target = $region73
                $region70: #{dave2v1_forward.6} parent=65 // loop_body
                  %v1015 = vld [vmem:[%s1013] sm:%s1004]
                  %1016 = vst [vmem:[%s1014] sm:%s1004] %v1015
                  %v1017 = vld [vmem:[%s1013 + $0x4] sm:%s1004]
                  %1018 = vst [vmem:[%s1014 + $0x4] sm:%s1004] %v1017
                  %v1019 = vld [vmem:[%s1013 + $0x8] sm:%s1004]
                  %1020 = vst [vmem:[%s1014 + $0x8] sm:%s1004] %v1019
                  %v1021 = vld [vmem:[%s1013 + $0xc] sm:%s1004]
                  %1022 = vst [vmem:[%s1014 + $0xc] sm:%s1004] %v1021
                  %s1023 = sadd.s32 1, %s1012
                  %p1024 = scmp.ge.s32.totalorder %s1023, %s1005
                  %s1025 = scalar_select %p1024, 0, %s1023
                  %s1026 = smul.u32 %s1025, 16
                  %s1027 = smul.u32 %s1025, 16
                  %s1028 = scalar_lea.vmem %s930, %s1026 [#allocation2]
                  %s1029 = scalar_lea.vmem %s941, %s1027
                $region71: #{dave2v1_forward.6} parent=65 // loop_footer
                  %s1009 = sadd.s32 %s1007, 1
                $region72: #{dave2v1_forward.6} parent=65 // loop_footer_branch
                  %1006 = sbr.rel target = $region68
                $region73: #{dave2v1_forward.6} parent=65 // loop_exit
                  _
                %s1030 = sshrl.u32 %s937, 2
                %s1031 = sand.u32 %s937, 3
                %s1032 = smul.u32 %s1030, 4
                %s1033 = smul.u32 4, %s1032
                %s1034 = scalar_lea.vmem %s930, %s1033 [#allocation2]
                %s1035 = smul.u32 4, %s1032
                %s1036 = scalar_lea.vmem %s941, %s1035
                // While loop
                $region74: #{dave2v1_forward.6} parent=65 // loop_pre_header
                  _
                $region75: #{dave2v1_forward.6} parent=65 // loop_header
                  %s1038 = sphi 0, %s1040
                  %p1039 = scmp.ge.s32.totalorder %s1038, %s1031
                  %s1043 = sphi 0, %s1050
                  %s1044 = sphi %s1034, %s1053
                  %s1045 = sphi %s1036, %s1054
                $region76: #{dave2v1_forward.6} parent=65 // loop_header_branch
                  %1042 = sbr.rel (%p1039) target = $region80
                $region77: #{dave2v1_forward.6} parent=65 // loop_body
                  %v1046 = vld [vmem:[%s1044] sm:%s1004]
                  %1047 = vst [vmem:[%s1045] sm:%s1004] %v1046
                  %s1048 = sadd.s32 1, %s1043
                  %p1049 = scmp.ge.s32.totalorder %s1048, %s1031
                  %s1050 = scalar_select %p1049, 0, %s1048
                  %s1051 = smul.u32 %s1050, 4
                  %s1052 = smul.u32 %s1050, 4
                  %s1053 = scalar_lea.vmem %s1034, %s1051 [#allocation2]
                  %s1054 = scalar_lea.vmem %s1036, %s1052
                $region78: #{dave2v1_forward.6} parent=65 // loop_footer
                  %s1040 = sadd.s32 %s1038, 1
                $region79: #{dave2v1_forward.6} parent=65 // loop_footer_branch
                  %1037 = sbr.rel target = $region75
                $region80: #{dave2v1_forward.6} parent=65 // loop_exit
                  _
              $region66: #{dave2v1_forward.6} parent=43 // pred_fallthru
                _
            $region44: #{dave2v1_forward.6} parent=39 // pred_fallthru
              _
            // Predicated region
            $region45: #{dave2v1_forward.6} parent=39 // pred_check
              _
            $region46: #{dave2v1_forward.6} parent=39 // pred_check_branch
              %948 = sbr.rel (0) target = $region48
            $region47: #{dave2v1_forward.6} parent=39 // pred_region
              %s950 = ssub.s32 16, 1
              %s951 = sshrl.u32 %s937, 2
              // While loop
              $region49: #{dave2v1_forward.6} parent=47 // loop_pre_header
                _
              $region50: #{dave2v1_forward.6} parent=47 // loop_header
                %s953 = sphi 0, %s955
                %p954 = scmp.ge.s32.totalorder %s953, %s951
                %s958 = sphi 0, %s971
                %s959 = sphi %s930, %s974
                %s960 = sphi %s941, %s975
              $region51: #{dave2v1_forward.6} parent=47 // loop_header_branch
                %957 = sbr.rel (%p954) target = $region55
              $region52: #{dave2v1_forward.6} parent=47 // loop_body
                %v961 = vld [vmem:[%s959] sm:%s950]
                %962 = vst [vmem:[%s960] sm:%s950] %v961
                %v963 = vld [vmem:[%s959 + $0x4] sm:%s950]
                %964 = vst [vmem:[%s960 + $0x4] sm:%s950] %v963
                %v965 = vld [vmem:[%s959 + $0x8] sm:%s950]
                %966 = vst [vmem:[%s960 + $0x8] sm:%s950] %v965
                %v967 = vld [vmem:[%s959 + $0xc] sm:%s950]
                %968 = vst [vmem:[%s960 + $0xc] sm:%s950] %v967
                %s969 = sadd.s32 1, %s958
                %p970 = scmp.ge.s32.totalorder %s969, %s951
                %s971 = scalar_select %p970, 0, %s969
                %s972 = smul.u32 %s971, 16
                %s973 = smul.u32 %s971, 16
                %s974 = scalar_lea.vmem %s930, %s972 [#allocation2]
                %s975 = scalar_lea.vmem %s941, %s973
              $region53: #{dave2v1_forward.6} parent=47 // loop_footer
                %s955 = sadd.s32 %s953, 1
              $region54: #{dave2v1_forward.6} parent=47 // loop_footer_branch
                %952 = sbr.rel target = $region50
              $region55: #{dave2v1_forward.6} parent=47 // loop_exit
                _
              %s976 = sshrl.u32 %s937, 2
              %s977 = sand.u32 %s937, 3
              %s978 = smul.u32 %s976, 4
              %s979 = smul.u32 4, %s978
              %s980 = scalar_lea.vmem %s930, %s979 [#allocation2]
              %s981 = smul.u32 4, %s978
              %s982 = scalar_lea.vmem %s941, %s981
              // While loop
              $region56: #{dave2v1_forward.6} parent=47 // loop_pre_header
                _
              $region57: #{dave2v1_forward.6} parent=47 // loop_header
                %s984 = sphi 0, %s986
                %p985 = scmp.ge.s32.totalorder %s984, %s977
                %s989 = sphi 0, %s996
                %s990 = sphi %s980, %s999
                %s991 = sphi %s982, %s1000
              $region58: #{dave2v1_forward.6} parent=47 // loop_header_branch
                %988 = sbr.rel (%p985) target = $region62
              $region59: #{dave2v1_forward.6} parent=47 // loop_body
                %v992 = vld [vmem:[%s990] sm:%s950]
                %993 = vst [vmem:[%s991] sm:%s950] %v992
                %s994 = sadd.s32 1, %s989
                %p995 = scmp.ge.s32.totalorder %s994, %s977
                %s996 = scalar_select %p995, 0, %s994
                %s997 = smul.u32 %s996, 4
                %s998 = smul.u32 %s996, 4
                %s999 = scalar_lea.vmem %s980, %s997 [#allocation2]
                %s1000 = scalar_lea.vmem %s982, %s998
              $region60: #{dave2v1_forward.6} parent=47 // loop_footer
                %s986 = sadd.s32 %s984, 1
              $region61: #{dave2v1_forward.6} parent=47 // loop_footer_branch
                %983 = sbr.rel target = $region57
              $region62: #{dave2v1_forward.6} parent=47 // loop_exit
                _
            $region48: #{dave2v1_forward.6} parent=39 // pred_fallthru
              _
          $region40: #{dave2v1_forward.6} parent=35 // pred_fallthru
            _
          %1055 = vnop
        $region36: #{dave2v1_forward.6} parent=31 // pred_fallthru
          _
      $region32: #{dave2v1_forward.6} parent=5 // pred_fallthru
        _
      %p1056 = scmp.le.s32.totalorder 2, %s9
      // Predicated region
      $region81: #{dave2v1_forward.6} parent=5 // pred_check
        %p1057 = pneg %p1056
      $region82: #{dave2v1_forward.6} parent=5 // pred_check_branch
        %1059 = sbr.rel (%p1057) target = $region84
      $region83: #{dave2v1_forward.6} parent=5 // pred_region
        %s1060 = ssub.s32 %s9, 2
        // Predicated region
        $region85: #{dave2v1_forward.6} parent=83 // pred_check
          %p1061 = pneg %p106
        $region86: #{dave2v1_forward.6} parent=83 // pred_check_branch
          %1063 = sbr.rel (%p1061) target = $region88
        $region87: #{dave2v1_forward.6} parent=83 // pred_region
          %s1064 = sand.u32 %s91, 1
          %s1065 = sand.u32 %s91, 1
          %s1066 = smul.addr %s1065, 16
          %s1067 = scalar_lea.vmem [#allocation2], %s1066
        $region88: #{dave2v1_forward.6} parent=83 // pred_fallthru
          _
      $region84: #{dave2v1_forward.6} parent=5 // pred_fallthru
        _
    $region6: #{dave2v1_forward.6} parent=1 // loop_footer
      %s13 = sadd.s32 1, %s9
    $region7: #{dave2v1_forward.6} parent=1 // loop_footer_branch
      %8 = sbr.rel target = $region3
    $region8: #{dave2v1_forward.6} parent=1 // loop_exit
      _

// kernel: dave2v1_forward.7
$region0: #{dave2v1_forward.7}
  #allocation0 [shape = 'u32[]', space=smem, size = 0x4, offset = 0x4, fixed_abs, tag = 'smem constant byte address 0x4 - core index']
  #allocation1 [shape = 'u32[72,128]{1,0:T(1,128)}', space=vmem, size = 0x9000, scoped, tag = 'internal scratch']
  #allocation2 [shape = 'f32[1,1]{1,0:T(1,128)S(1)}', space=vmem, size = 0x200, scoped, tag = 'scoped memory for dave2v1_forward.7']
  %s0 = inlined_call_operand.vmem [shape: bf16[2,9,432], index: 0, kind: input, shape index: {}]
  %s1 = inlined_call_operand.vmem [shape: bf16[432,64], index: 1, kind: input, shape index: {}]
  %s2 = inlined_call_operand.vmem [shape: f32[1,64], index: 2, kind: input, shape index: {}]
  %s3 = inlined_call_operand.vmem [shape: bf16[9,64,64], index: 3, kind: input, shape index: {}]
  %s4 = inlined_call_operand.vmem [shape: f32[1,64], index: 4, kind: input, shape index: {}]
  %s5 = inlined_call_operand.vmem [shape: bf16[1,64,100], index: 5, kind: input, shape index: {}]
  %s6 = inlined_call_operand.vmem [shape: f32[1,100], index: 6, kind: input, shape index: {}]
  %s7 = inlined_call_operand.vmem [shape: bf16[100,50], index: 7, kind: input, shape index: {}]
  %s8 = inlined_call_operand.vmem [shape: f32[1,50], index: 8, kind: input, shape index: {}]
  %s9 = inlined_call_operand.vmem [shape: bf16[50,10], index: 9, kind: input, shape index: {}]
  %s10 = inlined_call_operand.vmem [shape: f32[1,10], index: 10, kind: input, shape index: {}]
  %s11 = inlined_call_operand.vmem [shape: bf16[10,1], index: 11, kind: input, shape index: {}]
  %s12 = inlined_call_operand.<no memory space> [shape: f32[1,1], index: 12, kind: input, shape index: {}]
  %s13 = inlined_call_operand.vmem [shape: f32[2,1], index: 13, kind: output, shape index: {}]
  %s14 = sld [smem:[#allocation0]]
  $region62: #{dave2v1_forward.7} parent=0
    _
  %s16 = ssub.s32 1, %s14
  %s17 = scalar_select 0, %s16, %s14
  %v18 = vstv %s12
  %19 = vst [vmem:[#allocation2] sm:$0x1] %v18
  // Predicated region
  $region2: #{dave2v1_forward.7} parent=0 // pred_check
    _
  $region3: #{dave2v1_forward.7} parent=0 // pred_check_branch
    %21 = sbr.rel (0) target = $region5
  $region4: #{dave2v1_forward.7} parent=0 // pred_region
    _
  $region5: #{dave2v1_forward.7} parent=0 // pred_fallthru
    _
  // Predicated region
  $region6: #{dave2v1_forward.7} parent=0 // pred_check
    _
  $region7: #{dave2v1_forward.7} parent=0 // pred_check_branch
    %23 = sbr.rel (0) target = $region9
  $region8: #{dave2v1_forward.7} parent=0 // pred_region
    _
  $region9: #{dave2v1_forward.7} parent=0 // pred_fallthru
    _
  // Predicated region
  $region10: #{dave2v1_forward.7} parent=0 // pred_check
    _
  $region11: #{dave2v1_forward.7} parent=0 // pred_check_branch
    %25 = sbr.rel (0) target = $region13
  $region12: #{dave2v1_forward.7} parent=0 // pred_region
    _
  $region13: #{dave2v1_forward.7} parent=0 // pred_fallthru
    _
  // Predicated region
  $region14: #{dave2v1_forward.7} parent=0 // pred_check
    _
  $region15: #{dave2v1_forward.7} parent=0 // pred_check_branch
    %27 = sbr.rel (0) target = $region17
  $region16: #{dave2v1_forward.7} parent=0 // pred_region
    _
  $region17: #{dave2v1_forward.7} parent=0 // pred_fallthru
    _
  // Predicated region
  $region18: #{dave2v1_forward.7} parent=0 // pred_check
    _
  $region19: #{dave2v1_forward.7} parent=0 // pred_check_branch
    %29 = sbr.rel (0) target = $region21
  $region20: #{dave2v1_forward.7} parent=0 // pred_region
    _
  $region21: #{dave2v1_forward.7} parent=0 // pred_fallthru
    _
  // Predicated region
  $region22: #{dave2v1_forward.7} parent=0 // pred_check
    _
  $region23: #{dave2v1_forward.7} parent=0 // pred_check_branch
    %31 = sbr.rel (0) target = $region25
  $region24: #{dave2v1_forward.7} parent=0 // pred_region
    _
  $region25: #{dave2v1_forward.7} parent=0 // pred_fallthru
    _
  // Predicated region
  $region26: #{dave2v1_forward.7} parent=0 // pred_check
    _
  $region27: #{dave2v1_forward.7} parent=0 // pred_check_branch
    %33 = sbr.rel (0) target = $region29
  $region28: #{dave2v1_forward.7} parent=0 // pred_region
    _
  $region29: #{dave2v1_forward.7} parent=0 // pred_fallthru
    _
  // Predicated region
  $region30: #{dave2v1_forward.7} parent=0 // pred_check
    _
  $region31: #{dave2v1_forward.7} parent=0 // pred_check_branch
    %35 = sbr.rel (0) target = $region33
  $region32: #{dave2v1_forward.7} parent=0 // pred_region
    _
  $region33: #{dave2v1_forward.7} parent=0 // pred_fallthru
    _
  // Predicated region
  $region34: #{dave2v1_forward.7} parent=0 // pred_check
    _
  $region35: #{dave2v1_forward.7} parent=0 // pred_check_branch
    %37 = sbr.rel (0) target = $region37
  $region36: #{dave2v1_forward.7} parent=0 // pred_region
    _
  $region37: #{dave2v1_forward.7} parent=0 // pred_fallthru
    _
  // Predicated region
  $region38: #{dave2v1_forward.7} parent=0 // pred_check
    _
  $region39: #{dave2v1_forward.7} parent=0 // pred_check_branch
    %39 = sbr.rel (0) target = $region41
  $region40: #{dave2v1_forward.7} parent=0 // pred_region
    _
  $region41: #{dave2v1_forward.7} parent=0 // pred_fallthru
    _
  // Predicated region
  $region42: #{dave2v1_forward.7} parent=0 // pred_check
    _
  $region43: #{dave2v1_forward.7} parent=0 // pred_check_branch
    %41 = sbr.rel (0) target = $region45
  $region44: #{dave2v1_forward.7} parent=0 // pred_region
    _
  $region45: #{dave2v1_forward.7} parent=0 // pred_fallthru
    _
  // Predicated region
  $region46: #{dave2v1_forward.7} parent=0 // pred_check
    _
  $region47: #{dave2v1_forward.7} parent=0 // pred_check_branch
    %43 = sbr.rel (0) target = $region49
  $region48: #{dave2v1_forward.7} parent=0 // pred_region
    _
  $region49: #{dave2v1_forward.7} parent=0 // pred_fallthru
    _
  // Predicated region
  $region50: #{dave2v1_forward.7} parent=0 // pred_check
    _
  $region51: #{dave2v1_forward.7} parent=0 // pred_check_branch
    %45 = sbr.rel (0) target = $region53
  $region52: #{dave2v1_forward.7} parent=0 // pred_region
    _
  $region53: #{dave2v1_forward.7} parent=0 // pred_fallthru
    _
  %v47 = vld [vmem:[%s1] sm:$0xf]
  %v48 = vld [vmem:[%s1 + $0x4] sm:$0xf]
  %v49 = vld [vmem:[%s1 + $0x8] sm:$0xf]
  %v50 = vld [vmem:[%s1 + $0xc] sm:$0xf]
  %v51 = vld [vmem:[%s1 + $0x10] sm:$0xf]
  %v52 = vld [vmem:[%s1 + $0x14] sm:$0xf]
  %v53 = vld [vmem:[%s1 + $0x18] sm:$0xf]
  %v54 = vld [vmem:[%s1 + $0x1c] sm:$0xf]
  %v55 = vld [vmem:[%s1 + $0x20] sm:$0xf]
  %v56 = vld [vmem:[%s1 + $0x24] sm:$0xf]
  %v57 = vld [vmem:[%s1 + $0x28] sm:$0xf]
  %v58 = vld [vmem:[%s1 + $0x2c] sm:$0xf]
  %v59 = vld [vmem:[%s1 + $0x30] sm:$0xf]
  %v60 = vld [vmem:[%s1 + $0x34] sm:$0xf]
  %v61 = vld [vmem:[%s1 + $0x38] sm:$0xf]
  %v62 = vld [vmem:[%s1 + $0x3c] sm:$0xf]
  %v63 = vld [vmem:[%s1 + $0x40] sm:$0xf]
  %v64 = vld [vmem:[%s1 + $0x44] sm:$0xf]
  %v65 = vld [vmem:[%s1 + $0x48] sm:$0xf]
  %v66 = vld [vmem:[%s1 + $0x4c] sm:$0xf]
  %v67 = vld [vmem:[%s1 + $0x50] sm:$0xf]
  %v68 = vld [vmem:[%s1 + $0x54] sm:$0xf]
  %v69 = vld [vmem:[%s1 + $0x58] sm:$0xf]
  %v70 = vld [vmem:[%s1 + $0x5c] sm:$0xf]
  %v71 = vld [vmem:[%s1 + $0x60] sm:$0xf]
  %v72 = vld [vmem:[%s1 + $0x64] sm:$0xf]
  %v73 = vld [vmem:[%s1 + $0x68] sm:$0xf]
  %v74 = vld [vmem:[%s1 + $0x6c] sm:$0xf]
  %v75 = vld [vmem:[%s1 + $0x70] sm:$0xf]
  %v76 = vld [vmem:[%s1 + $0x74] sm:$0xf]
  %v77 = vld [vmem:[%s1 + $0x78] sm:$0xf]
  %v78 = vld [vmem:[%s1 + $0x7c] sm:$0xf]
  %v79 = vld [vmem:[%s1 + $0x80] sm:$0xf]
  %v80 = vld [vmem:[%s1 + $0x84] sm:$0xf]
  %v81 = vld [vmem:[%s1 + $0x88] sm:$0xf]
  %v82 = vld [vmem:[%s1 + $0x8c] sm:$0xf]
  %v83 = vld [vmem:[%s1 + $0x90] sm:$0xf]
  %v84 = vld [vmem:[%s1 + $0x94] sm:$0xf]
  %v85 = vld [vmem:[%s1 + $0x98] sm:$0xf]
  %v86 = vld [vmem:[%s1 + $0x9c] sm:$0xf]
  %v87 = vld [vmem:[%s1 + $0xa0] sm:$0xf]
  %v88 = vld [vmem:[%s1 + $0xa4] sm:$0xf]
  %v89 = vld [vmem:[%s1 + $0xa8] sm:$0xf]
  %v90 = vld [vmem:[%s1 + $0xac] sm:$0xf]
  %v91 = vld [vmem:[%s1 + $0xb0] sm:$0xf]
  %v92 = vld [vmem:[%s1 + $0xb4] sm:$0xf]
  %v93 = vld [vmem:[%s1 + $0xb8] sm:$0xf]
  %v94 = vld [vmem:[%s1 + $0xbc] sm:$0xf]
  %v95 = vld [vmem:[%s1 + $0xc0] sm:$0xf]
  %v96 = vld [vmem:[%s1 + $0xc4] sm:$0xf]
  %v97 = vld [vmem:[%s1 + $0xc8] sm:$0xf]
  %v98 = vld [vmem:[%s1 + $0xcc] sm:$0xf]
  %v99 = vld [vmem:[%s1 + $0xd0] sm:$0xf]
  %v100 = vld [vmem:[%s1 + $0xd4] sm:$0xf]
  %v101 = vld [vmem:[%s2] sm:$0x1]
  %v102 = vld [vmem:[%s0] sm:$0x11]
  %v103 = vld [vmem:[%s0 + $0x8] sm:$0x11]
  %v104 = vld [vmem:[%s0 + $0x20] sm:$0x11]
  %v105 = vld [vmem:[%s0 + $0x28] sm:$0x11]
  %v107 = vperm.slane %v101, 0
  %v113 = vunpack.c.l.b16 %v102
  %v114 = vunpack.c.h.b16 %v102
  %v115 = vunpack.c.l.b16 %v103
  %v116 = vunpack.c.h.b16 %v103
  %v117 = vunpack.c.l.b16 %v104
  %v118 = vunpack.c.h.b16 %v104
  %v119 = vunpack.c.l.b16 %v105
  %v120 = vunpack.c.h.b16 %v105
  %v121 = vpack.c.b16 %v113, %v113
  %v122 = vpack.c.b16 %v114, %v114
  %v123 = vpack.c.b16 %v115, %v115
  %v124 = vpack.c.b16 %v116, %v116
  %v125 = vpack.c.b16 %v117, %v117
  %v126 = vpack.c.b16 %v118, %v118
  %v127 = vpack.c.b16 %v119, %v119
  %v128 = vpack.c.b16 %v120, %v120
  %v129 = vunpack.c.l.b16 %v121
  %v130 = vunpack.c.l.b16 %v122
  %v131 = vunpack.c.l.b16 %v123
  %v132 = vunpack.c.l.b16 %v124
  %v133 = vunpack.c.l.b16 %v125
  %v134 = vunpack.c.l.b16 %v126
  %v135 = vunpack.c.l.b16 %v127
  %v136 = vunpack.c.l.b16 %v128
  %v137 = vrot.slane %v133, 7
  %vm138 = vcmask 1041409
  %v139 = vsel %vm138, %v137, %v129
  %v140 = vrot.slane %v134, 7
  %v141 = vsel %vm138, %v140, %v130
  %v142 = vrot.slane %v135, 7
  %v143 = vsel %vm138, %v142, %v131
  %v144 = vrot.slane %v136, 7
  %v145 = vsel %vm138, %v144, %v132
  %v146 = vpack.c.b16 %v139, %v139
  %v147 = vpack.c.b16 %v141, %v141
  %v148 = vpack.c.b16 %v143, %v143
  %v149 = vpack.c.b16 %v145, %v145
  %v207 = vunpack.c.l.b16 %v47
  %v208 = vunpack.c.l.b16 %v48
  %v209 = vunpack.c.l.b16 %v49
  %v210 = vunpack.c.l.b16 %v50
  %v211 = vunpack.c.l.b16 %v51
  %v212 = vunpack.c.l.b16 %v52
  %v213 = vunpack.c.l.b16 %v53
  %v214 = vunpack.c.l.b16 %v54
  %v215 = vunpack.c.l.b16 %v55
  %v216 = vunpack.c.l.b16 %v56
  %v217 = vunpack.c.l.b16 %v57
  %v218 = vunpack.c.l.b16 %v58
  %v219 = vunpack.c.l.b16 %v59
  %v220 = vunpack.c.l.b16 %v60
  %v221 = vunpack.c.l.b16 %v61
  %v222 = vunpack.c.l.b16 %v62
  %v223 = vunpack.c.l.b16 %v63
  %v224 = vunpack.c.l.b16 %v64
  %v225 = vunpack.c.l.b16 %v65
  %v226 = vunpack.c.l.b16 %v66
  %v227 = vunpack.c.l.b16 %v67
  %v228 = vunpack.c.l.b16 %v68
  %v229 = vunpack.c.l.b16 %v69
  %v230 = vunpack.c.l.b16 %v70
  %v231 = vunpack.c.l.b16 %v71
  %v232 = vunpack.c.l.b16 %v72
  %v233 = vunpack.c.l.b16 %v73
  %v234 = vunpack.c.l.b16 %v74
  %v235 = vunpack.c.l.b16 %v75
  %v236 = vunpack.c.l.b16 %v76
  %v237 = vunpack.c.l.b16 %v77
  %v238 = vunpack.c.l.b16 %v78
  %v239 = vunpack.c.l.b16 %v79
  %v240 = vunpack.c.l.b16 %v80
  %v241 = vunpack.c.l.b16 %v81
  %v242 = vunpack.c.l.b16 %v82
  %v243 = vunpack.c.l.b16 %v83
  %v244 = vunpack.c.l.b16 %v84
  %v245 = vunpack.c.l.b16 %v85
  %v246 = vunpack.c.l.b16 %v86
  %v247 = vunpack.c.l.b16 %v87
  %v248 = vunpack.c.l.b16 %v88
  %v249 = vunpack.c.l.b16 %v89
  %v250 = vunpack.c.l.b16 %v90
  %v251 = vunpack.c.l.b16 %v91
  %v252 = vunpack.c.l.b16 %v92
  %v253 = vunpack.c.l.b16 %v93
  %v254 = vunpack.c.l.b16 %v94
  %v255 = vunpack.c.l.b16 %v95
  %v256 = vunpack.c.l.b16 %v96
  %v257 = vunpack.c.l.b16 %v97
  %v258 = vunpack.c.l.b16 %v98
  %v259 = vunpack.c.l.b16 %v99
  %v260 = vunpack.c.l.b16 %v100
  %v261 = vpack.c.b16 %v208, %v207
  %v262 = vpack.c.b16 %v210, %v209
  %v263 = vpack.c.b16 %v212, %v211
  %v264 = vpack.c.b16 %v214, %v213
  %v265 = vpack.c.b16 %v216, %v215
  %v266 = vpack.c.b16 %v218, %v217
  %v267 = vpack.c.b16 %v220, %v219
  %v268 = vpack.c.b16 %v222, %v221
  %v269 = vpack.c.b16 %v224, %v223
  %v270 = vpack.c.b16 %v226, %v225
  %v271 = vpack.c.b16 %v228, %v227
  %v272 = vpack.c.b16 %v230, %v229
  %v273 = vpack.c.b16 %v232, %v231
  %v274 = vpack.c.b16 %v234, %v233
  %v275 = vpack.c.b16 %v236, %v235
  %v276 = vpack.c.b16 %v238, %v237
  %v277 = vpack.c.b16 %v240, %v239
  %v278 = vpack.c.b16 %v242, %v241
  %v279 = vpack.c.b16 %v244, %v243
  %v280 = vpack.c.b16 %v246, %v245
  %v281 = vpack.c.b16 %v248, %v247
  %v282 = vpack.c.b16 %v250, %v249
  %v283 = vpack.c.b16 %v252, %v251
  %v284 = vpack.c.b16 %v254, %v253
  %v285 = vpack.c.b16 %v256, %v255
  %v286 = vpack.c.b16 %v258, %v257
  %v287 = vpack.c.b16 %v260, %v259
  %vm315 = vcmask 392192
  %v317 = vsel %vm315, %v149, 0
  %319 = vmatpush.bf16.msra.mxu0 %v268
  %320 = vmatpush.bf16.msra.mxu0 %v267
  %321 = vmatpush.bf16.msra.mxu0 %v266
  %322 = vmatpush.bf16.msra.mxu0 %v265
  %323 = vmatpush.bf16.msra.mxu0 %v264
  %324 = vmatpush.bf16.msra.mxu0 %v263
  %325 = vmatpush.bf16.msra.mxu0 %v262
  %326 = vmatpush.bf16.msra.mxu0 %v261
  %327 = vmatmul.bf16.gmra.mxu0 %v146
  %v328 = vpop.f32.mrf.mxu0
  %v329 = vadd.f32 %v107, %v328
  %v330 = vpop.f32.mrf.mxu0
  %331 = vdwg.mxu0
  %332 = vmatpush.bf16.msra.mxu0 %v276
  %333 = vmatpush.bf16.msra.mxu0 %v275
  %334 = vmatpush.bf16.msra.mxu0 %v274
  %335 = vmatpush.bf16.msra.mxu0 %v273
  %336 = vmatpush.bf16.msra.mxu0 %v272
  %337 = vmatpush.bf16.msra.mxu0 %v271
  %338 = vmatpush.bf16.msra.mxu0 %v270
  %339 = vmatpush.bf16.msra.mxu0 %v269
  %340 = vmatmul.bf16.gmra.mxu0 %v147
  %v341 = vpop.f32.mrf.mxu0
  %v342 = vadd.f32 %v329, %v341
  %v343 = vpop.f32.mrf.mxu0
  %344 = vdwg.mxu0
  %345 = vmatpush.bf16.msra.mxu0 %v284
  %346 = vmatpush.bf16.msra.mxu0 %v283
  %347 = vmatpush.bf16.msra.mxu0 %v282
  %348 = vmatpush.bf16.msra.mxu0 %v281
  %349 = vmatpush.bf16.msra.mxu0 %v280
  %350 = vmatpush.bf16.msra.mxu0 %v279
  %351 = vmatpush.bf16.msra.mxu0 %v278
  %352 = vmatpush.bf16.msra.mxu0 %v277
  %353 = vmatmul.bf16.gmra.mxu0 %v148
  %v354 = vpop.f32.mrf.mxu0
  %v355 = vadd.f32 %v342, %v354
  %v356 = vpop.f32.mrf.mxu0
  %357 = vdwg.mxu0
  %358 = vmatpush.bf16.msra.mxu0 0
  %359 = vmatpush.bf16.msra.mxu0 0
  %360 = vmatpush.bf16.msra.mxu0 0
  %361 = vmatpush.bf16.msra.mxu0 0
  %362 = vmatpush.bf16.msra.mxu0 0
  %363 = vmatpush.bf16.msra.mxu0 %v287
  %364 = vmatpush.bf16.msra.mxu0 %v286
  %365 = vmatpush.bf16.msra.mxu0 %v285
  %366 = vmatmul.bf16.gmra.mxu0 %v317
  %v367 = vpop.f32.mrf.mxu0
  %v368 = vadd.f32 %v355, %v367
  %v369 = vpop.f32.mrf.mxu0
  %370 = vdwg.mxu0
  %v371 = vmax.f32 %v368, 0.0
  %v372 = vpack.c.bf16 %v371, %v371
  %v373 = vrot.slane %v129, 1
  %v374 = vsel %vm138, %v133, %v373
  %v375 = vrot.slane %v130, 1
  %v376 = vsel %vm138, %v134, %v375
  %v377 = vrot.slane %v131, 1
  %v378 = vsel %vm138, %v135, %v377
  %v379 = vrot.slane %v132, 1
  %v380 = vsel %vm138, %v136, %v379
  %v381 = vpack.c.b16 %v374, %v374
  %v382 = vpack.c.b16 %v376, %v376
  %v383 = vpack.c.b16 %v378, %v378
  %v384 = vpack.c.b16 %v380, %v380
  %v389 = vsel %vm315, %v384, 0
  %391 = vmatpush.bf16.msra.mxu0 %v268
  %392 = vmatpush.bf16.msra.mxu0 %v267
  %393 = vmatpush.bf16.msra.mxu0 %v266
  %394 = vmatpush.bf16.msra.mxu0 %v265
  %395 = vmatpush.bf16.msra.mxu0 %v264
  %396 = vmatpush.bf16.msra.mxu0 %v263
  %397 = vmatpush.bf16.msra.mxu0 %v262
  %398 = vmatpush.bf16.msra.mxu0 %v261
  %399 = vmatmul.bf16.gmra.mxu0 %v381
  %v400 = vpop.f32.mrf.mxu0
  %v401 = vadd.f32 %v107, %v400
  %v402 = vpop.f32.mrf.mxu0
  %403 = vdwg.mxu0
  %404 = vmatpush.bf16.msra.mxu0 %v276
  %405 = vmatpush.bf16.msra.mxu0 %v275
  %406 = vmatpush.bf16.msra.mxu0 %v274
  %407 = vmatpush.bf16.msra.mxu0 %v273
  %408 = vmatpush.bf16.msra.mxu0 %v272
  %409 = vmatpush.bf16.msra.mxu0 %v271
  %410 = vmatpush.bf16.msra.mxu0 %v270
  %411 = vmatpush.bf16.msra.mxu0 %v269
  %412 = vmatmul.bf16.gmra.mxu0 %v382
  %v413 = vpop.f32.mrf.mxu0
  %v414 = vadd.f32 %v401, %v413
  %v415 = vpop.f32.mrf.mxu0
  %416 = vdwg.mxu0
  %417 = vmatpush.bf16.msra.mxu0 %v284
  %418 = vmatpush.bf16.msra.mxu0 %v283
  %419 = vmatpush.bf16.msra.mxu0 %v282
  %420 = vmatpush.bf16.msra.mxu0 %v281
  %421 = vmatpush.bf16.msra.mxu0 %v280
  %422 = vmatpush.bf16.msra.mxu0 %v279
  %423 = vmatpush.bf16.msra.mxu0 %v278
  %424 = vmatpush.bf16.msra.mxu0 %v277
  %425 = vmatmul.bf16.gmra.mxu0 %v383
  %v426 = vpop.f32.mrf.mxu0
  %v427 = vadd.f32 %v414, %v426
  %v428 = vpop.f32.mrf.mxu0
  %429 = vdwg.mxu0
  %430 = vmatpush.bf16.msra.mxu0 0
  %431 = vmatpush.bf16.msra.mxu0 0
  %432 = vmatpush.bf16.msra.mxu0 0
  %433 = vmatpush.bf16.msra.mxu0 0
  %434 = vmatpush.bf16.msra.mxu0 0
  %435 = vmatpush.bf16.msra.mxu0 %v287
  %436 = vmatpush.bf16.msra.mxu0 %v286
  %437 = vmatpush.bf16.msra.mxu0 %v285
  %438 = vmatmul.bf16.gmra.mxu0 %v389
  %v439 = vpop.f32.mrf.mxu0
  %v440 = vadd.f32 %v427, %v439
  %v441 = vpop.f32.mrf.mxu0
  %442 = vdwg.mxu0
  %v443 = vmax.f32 %v440, 0.0
  %v444 = vpack.c.bf16 %v443, %v443
  %v445 = vld [vmem:[%s0] sm:$0x22]
  %v446 = vld [vmem:[%s0 + $0x8] sm:$0x22]
  %v447 = vld [vmem:[%s0 + $0x20] sm:$0x22]
  %v448 = vld [vmem:[%s0 + $0x28] sm:$0x22]
  %v453 = vunpack.c.l.b16 %v445
  %v454 = vunpack.c.h.b16 %v445
  %v455 = vunpack.c.l.b16 %v446
  %v456 = vunpack.c.h.b16 %v446
  %v457 = vunpack.c.l.b16 %v447
  %v458 = vunpack.c.h.b16 %v447
  %v459 = vunpack.c.l.b16 %v448
  %v460 = vunpack.c.h.b16 %v448
  %v461 = vpack.c.b16 %v453, %v453
  %v462 = vpack.c.b16 %v454, %v454
  %v463 = vpack.c.b16 %v455, %v455
  %v464 = vpack.c.b16 %v456, %v456
  %v465 = vpack.c.b16 %v457, %v457
  %v466 = vpack.c.b16 %v458, %v458
  %v467 = vpack.c.b16 %v459, %v459
  %v468 = vpack.c.b16 %v460, %v460
  %v469 = vunpack.c.l.b16 %v461
  %v470 = vunpack.c.l.b16 %v462
  %v471 = vunpack.c.l.b16 %v463
  %v472 = vunpack.c.l.b16 %v464
  %v473 = vunpack.c.l.b16 %v465
  %v474 = vunpack.c.l.b16 %v466
  %v475 = vunpack.c.l.b16 %v467
  %v476 = vunpack.c.l.b16 %v468
  %v477 = vrot.slane %v469, 2
  %v478 = vrot.slane %v473, 1
  %v479 = vsel %vm138, %v478, %v477
  %v480 = vrot.slane %v470, 2
  %v481 = vrot.slane %v474, 1
  %v482 = vsel %vm138, %v481, %v480
  %v483 = vrot.slane %v471, 2
  %v484 = vrot.slane %v475, 1
  %v485 = vsel %vm138, %v484, %v483
  %v486 = vrot.slane %v472, 2
  %v487 = vrot.slane %v476, 1
  %v488 = vsel %vm138, %v487, %v486
  %v489 = vpack.c.b16 %v479, %v479
  %v490 = vpack.c.b16 %v482, %v482
  %v491 = vpack.c.b16 %v485, %v485
  %v492 = vpack.c.b16 %v488, %v488
  %v497 = vsel %vm315, %v492, 0
  %499 = vmatpush.bf16.msra.mxu0 %v268
  %500 = vmatpush.bf16.msra.mxu0 %v267
  %501 = vmatpush.bf16.msra.mxu0 %v266
  %502 = vmatpush.bf16.msra.mxu0 %v265
  %503 = vmatpush.bf16.msra.mxu0 %v264
  %504 = vmatpush.bf16.msra.mxu0 %v263
  %505 = vmatpush.bf16.msra.mxu0 %v262
  %506 = vmatpush.bf16.msra.mxu0 %v261
  %507 = vmatmul.bf16.gmra.mxu0 %v489
  %v508 = vpop.f32.mrf.mxu0
  %v509 = vadd.f32 %v107, %v508
  %v510 = vpop.f32.mrf.mxu0
  %511 = vdwg.mxu0
  %512 = vmatpush.bf16.msra.mxu0 %v276
  %513 = vmatpush.bf16.msra.mxu0 %v275
  %514 = vmatpush.bf16.msra.mxu0 %v274
  %515 = vmatpush.bf16.msra.mxu0 %v273
  %516 = vmatpush.bf16.msra.mxu0 %v272
  %517 = vmatpush.bf16.msra.mxu0 %v271
  %518 = vmatpush.bf16.msra.mxu0 %v270
  %519 = vmatpush.bf16.msra.mxu0 %v269
  %520 = vmatmul.bf16.gmra.mxu0 %v490
  %v521 = vpop.f32.mrf.mxu0
  %v522 = vadd.f32 %v509, %v521
  %v523 = vpop.f32.mrf.mxu0
  %524 = vdwg.mxu0
  %525 = vmatpush.bf16.msra.mxu0 %v284
  %526 = vmatpush.bf16.msra.mxu0 %v283
  %527 = vmatpush.bf16.msra.mxu0 %v282
  %528 = vmatpush.bf16.msra.mxu0 %v281
  %529 = vmatpush.bf16.msra.mxu0 %v280
  %530 = vmatpush.bf16.msra.mxu0 %v279
  %531 = vmatpush.bf16.msra.mxu0 %v278
  %532 = vmatpush.bf16.msra.mxu0 %v277
  %533 = vmatmul.bf16.gmra.mxu0 %v491
  %v534 = vpop.f32.mrf.mxu0
  %v535 = vadd.f32 %v522, %v534
  %v536 = vpop.f32.mrf.mxu0
  %537 = vdwg.mxu0
  %538 = vmatpush.bf16.msra.mxu0 0
  %539 = vmatpush.bf16.msra.mxu0 0
  %540 = vmatpush.bf16.msra.mxu0 0
  %541 = vmatpush.bf16.msra.mxu0 0
  %542 = vmatpush.bf16.msra.mxu0 0
  %543 = vmatpush.bf16.msra.mxu0 %v287
  %544 = vmatpush.bf16.msra.mxu0 %v286
  %545 = vmatpush.bf16.msra.mxu0 %v285
  %546 = vmatmul.bf16.gmra.mxu0 %v497
  %v547 = vpop.f32.mrf.mxu0
  %v548 = vadd.f32 %v535, %v547
  %v549 = vpop.f32.mrf.mxu0
  %550 = vdwg.mxu0
  %v551 = vmax.f32 %v548, 0.0
  %v552 = vpack.c.bf16 %v551, %v551
  %v553 = vrot.slane %v469, 3
  %v554 = vrot.slane %v473, 2
  %v555 = vsel %vm138, %v554, %v553
  %v556 = vrot.slane %v470, 3
  %v557 = vrot.slane %v474, 2
  %v558 = vsel %vm138, %v557, %v556
  %v559 = vrot.slane %v471, 3
  %v560 = vrot.slane %v475, 2
  %v561 = vsel %vm138, %v560, %v559
  %v562 = vrot.slane %v472, 3
  %v563 = vrot.slane %v476, 2
  %v564 = vsel %vm138, %v563, %v562
  %v565 = vpack.c.b16 %v555, %v555
  %v566 = vpack.c.b16 %v558, %v558
  %v567 = vpack.c.b16 %v561, %v561
  %v568 = vpack.c.b16 %v564, %v564
  %v573 = vsel %vm315, %v568, 0
  %575 = vmatpush.bf16.msra.mxu0 %v268
  %576 = vmatpush.bf16.msra.mxu0 %v267
  %577 = vmatpush.bf16.msra.mxu0 %v266
  %578 = vmatpush.bf16.msra.mxu0 %v265
  %579 = vmatpush.bf16.msra.mxu0 %v264
  %580 = vmatpush.bf16.msra.mxu0 %v263
  %581 = vmatpush.bf16.msra.mxu0 %v262
  %582 = vmatpush.bf16.msra.mxu0 %v261
  %583 = vmatmul.bf16.gmra.mxu0 %v565
  %v584 = vpop.f32.mrf.mxu0
  %v585 = vadd.f32 %v107, %v584
  %v586 = vpop.f32.mrf.mxu0
  %587 = vdwg.mxu0
  %588 = vmatpush.bf16.msra.mxu0 %v276
  %589 = vmatpush.bf16.msra.mxu0 %v275
  %590 = vmatpush.bf16.msra.mxu0 %v274
  %591 = vmatpush.bf16.msra.mxu0 %v273
  %592 = vmatpush.bf16.msra.mxu0 %v272
  %593 = vmatpush.bf16.msra.mxu0 %v271
  %594 = vmatpush.bf16.msra.mxu0 %v270
  %595 = vmatpush.bf16.msra.mxu0 %v269
  %596 = vmatmul.bf16.gmra.mxu0 %v566
  %v597 = vpop.f32.mrf.mxu0
  %v598 = vadd.f32 %v585, %v597
  %v599 = vpop.f32.mrf.mxu0
  %600 = vdwg.mxu0
  %601 = vmatpush.bf16.msra.mxu0 %v284
  %602 = vmatpush.bf16.msra.mxu0 %v283
  %603 = vmatpush.bf16.msra.mxu0 %v282
  %604 = vmatpush.bf16.msra.mxu0 %v281
  %605 = vmatpush.bf16.msra.mxu0 %v280
  %606 = vmatpush.bf16.msra.mxu0 %v279
  %607 = vmatpush.bf16.msra.mxu0 %v278
  %608 = vmatpush.bf16.msra.mxu0 %v277
  %609 = vmatmul.bf16.gmra.mxu0 %v567
  %v610 = vpop.f32.mrf.mxu0
  %v611 = vadd.f32 %v598, %v610
  %v612 = vpop.f32.mrf.mxu0
  %613 = vdwg.mxu0
  %614 = vmatpush.bf16.msra.mxu0 0
  %615 = vmatpush.bf16.msra.mxu0 0
  %616 = vmatpush.bf16.msra.mxu0 0
  %617 = vmatpush.bf16.msra.mxu0 0
  %618 = vmatpush.bf16.msra.mxu0 0
  %619 = vmatpush.bf16.msra.mxu0 %v287
  %620 = vmatpush.bf16.msra.mxu0 %v286
  %621 = vmatpush.bf16.msra.mxu0 %v285
  %622 = vmatmul.bf16.gmra.mxu0 %v573
  %v623 = vpop.f32.mrf.mxu0
  %v624 = vadd.f32 %v611, %v623
  %v625 = vpop.f32.mrf.mxu0
  %626 = vdwg.mxu0
  %v627 = vmax.f32 %v624, 0.0
  %v628 = vpack.c.bf16 %v627, %v627
  %v629 = vld [vmem:[%s0] sm:$0x44]
  %v630 = vld [vmem:[%s0 + $0x8] sm:$0x44]
  %v631 = vld [vmem:[%s0 + $0x20] sm:$0x44]
  %v632 = vld [vmem:[%s0 + $0x28] sm:$0x44]
  %v637 = vunpack.c.l.b16 %v629
  %v638 = vunpack.c.h.b16 %v629
  %v639 = vunpack.c.l.b16 %v630
  %v640 = vunpack.c.h.b16 %v630
  %v641 = vunpack.c.l.b16 %v631
  %v642 = vunpack.c.h.b16 %v631
  %v643 = vunpack.c.l.b16 %v632
  %v644 = vunpack.c.h.b16 %v632
  %v645 = vpack.c.b16 %v637, %v637
  %v646 = vpack.c.b16 %v638, %v638
  %v647 = vpack.c.b16 %v639, %v639
  %v648 = vpack.c.b16 %v640, %v640
  %v649 = vpack.c.b16 %v641, %v641
  %v650 = vpack.c.b16 %v642, %v642
  %v651 = vpack.c.b16 %v643, %v643
  %v652 = vpack.c.b16 %v644, %v644
  %v653 = vunpack.c.l.b16 %v645
  %v654 = vunpack.c.l.b16 %v646
  %v655 = vunpack.c.l.b16 %v647
  %v656 = vunpack.c.l.b16 %v648
  %v657 = vunpack.c.l.b16 %v649
  %v658 = vunpack.c.l.b16 %v650
  %v659 = vunpack.c.l.b16 %v651
  %v660 = vunpack.c.l.b16 %v652
  %v661 = vrot.slane %v653, 4
  %v662 = vrot.slane %v657, 3
  %v663 = vsel %vm138, %v662, %v661
  %v664 = vrot.slane %v654, 4
  %v665 = vrot.slane %v658, 3
  %v666 = vsel %vm138, %v665, %v664
  %v667 = vrot.slane %v655, 4
  %v668 = vrot.slane %v659, 3
  %v669 = vsel %vm138, %v668, %v667
  %v670 = vrot.slane %v656, 4
  %v671 = vrot.slane %v660, 3
  %v672 = vsel %vm138, %v671, %v670
  %v673 = vpack.c.b16 %v663, %v663
  %v674 = vpack.c.b16 %v666, %v666
  %v675 = vpack.c.b16 %v669, %v669
  %v676 = vpack.c.b16 %v672, %v672
  %v681 = vsel %vm315, %v676, 0
  %683 = vmatpush.bf16.msra.mxu0 %v268
  %684 = vmatpush.bf16.msra.mxu0 %v267
  %685 = vmatpush.bf16.msra.mxu0 %v266
  %686 = vmatpush.bf16.msra.mxu0 %v265
  %687 = vmatpush.bf16.msra.mxu0 %v264
  %688 = vmatpush.bf16.msra.mxu0 %v263
  %689 = vmatpush.bf16.msra.mxu0 %v262
  %690 = vmatpush.bf16.msra.mxu0 %v261
  %691 = vmatmul.bf16.gmra.mxu0 %v673
  %v692 = vpop.f32.mrf.mxu0
  %v693 = vadd.f32 %v107, %v692
  %v694 = vpop.f32.mrf.mxu0
  %695 = vdwg.mxu0
  %696 = vmatpush.bf16.msra.mxu0 %v276
  %697 = vmatpush.bf16.msra.mxu0 %v275
  %698 = vmatpush.bf16.msra.mxu0 %v274
  %699 = vmatpush.bf16.msra.mxu0 %v273
  %700 = vmatpush.bf16.msra.mxu0 %v272
  %701 = vmatpush.bf16.msra.mxu0 %v271
  %702 = vmatpush.bf16.msra.mxu0 %v270
  %703 = vmatpush.bf16.msra.mxu0 %v269
  %704 = vmatmul.bf16.gmra.mxu0 %v674
  %v705 = vpop.f32.mrf.mxu0
  %v706 = vadd.f32 %v693, %v705
  %v707 = vpop.f32.mrf.mxu0
  %708 = vdwg.mxu0
  %709 = vmatpush.bf16.msra.mxu0 %v284
  %710 = vmatpush.bf16.msra.mxu0 %v283
  %711 = vmatpush.bf16.msra.mxu0 %v282
  %712 = vmatpush.bf16.msra.mxu0 %v281
  %713 = vmatpush.bf16.msra.mxu0 %v280
  %714 = vmatpush.bf16.msra.mxu0 %v279
  %715 = vmatpush.bf16.msra.mxu0 %v278
  %716 = vmatpush.bf16.msra.mxu0 %v277
  %717 = vmatmul.bf16.gmra.mxu0 %v675
  %v718 = vpop.f32.mrf.mxu0
  %v719 = vadd.f32 %v706, %v718
  %v720 = vpop.f32.mrf.mxu0
  %721 = vdwg.mxu0
  %722 = vmatpush.bf16.msra.mxu0 0
  %723 = vmatpush.bf16.msra.mxu0 0
  %724 = vmatpush.bf16.msra.mxu0 0
  %725 = vmatpush.bf16.msra.mxu0 0
  %726 = vmatpush.bf16.msra.mxu0 0
  %727 = vmatpush.bf16.msra.mxu0 %v287
  %728 = vmatpush.bf16.msra.mxu0 %v286
  %729 = vmatpush.bf16.msra.mxu0 %v285
  %730 = vmatmul.bf16.gmra.mxu0 %v681
  %v731 = vpop.f32.mrf.mxu0
  %v732 = vadd.f32 %v719, %v731
  %v733 = vpop.f32.mrf.mxu0
  %734 = vdwg.mxu0
  %v735 = vmax.f32 %v732, 0.0
  %v736 = vpack.c.bf16 %v735, %v735
  %v737 = vrot.slane %v653, 5
  %v738 = vrot.slane %v657, 4
  %v739 = vsel %vm138, %v738, %v737
  %v740 = vrot.slane %v654, 5
  %v741 = vrot.slane %v658, 4
  %v742 = vsel %vm138, %v741, %v740
  %v743 = vrot.slane %v655, 5
  %v744 = vrot.slane %v659, 4
  %v745 = vsel %vm138, %v744, %v743
  %v746 = vrot.slane %v656, 5
  %v747 = vrot.slane %v660, 4
  %v748 = vsel %vm138, %v747, %v746
  %v749 = vpack.c.b16 %v739, %v739
  %v750 = vpack.c.b16 %v742, %v742
  %v751 = vpack.c.b16 %v745, %v745
  %v752 = vpack.c.b16 %v748, %v748
  %v757 = vsel %vm315, %v752, 0
  %759 = vmatpush.bf16.msra.mxu0 %v268
  %760 = vmatpush.bf16.msra.mxu0 %v267
  %761 = vmatpush.bf16.msra.mxu0 %v266
  %762 = vmatpush.bf16.msra.mxu0 %v265
  %763 = vmatpush.bf16.msra.mxu0 %v264
  %764 = vmatpush.bf16.msra.mxu0 %v263
  %765 = vmatpush.bf16.msra.mxu0 %v262
  %766 = vmatpush.bf16.msra.mxu0 %v261
  %767 = vmatmul.bf16.gmra.mxu0 %v749
  %v768 = vpop.f32.mrf.mxu0
  %v769 = vadd.f32 %v107, %v768
  %v770 = vpop.f32.mrf.mxu0
  %771 = vdwg.mxu0
  %772 = vmatpush.bf16.msra.mxu0 %v276
  %773 = vmatpush.bf16.msra.mxu0 %v275
  %774 = vmatpush.bf16.msra.mxu0 %v274
  %775 = vmatpush.bf16.msra.mxu0 %v273
  %776 = vmatpush.bf16.msra.mxu0 %v272
  %777 = vmatpush.bf16.msra.mxu0 %v271
  %778 = vmatpush.bf16.msra.mxu0 %v270
  %779 = vmatpush.bf16.msra.mxu0 %v269
  %780 = vmatmul.bf16.gmra.mxu0 %v750
  %v781 = vpop.f32.mrf.mxu0
  %v782 = vadd.f32 %v769, %v781
  %v783 = vpop.f32.mrf.mxu0
  %784 = vdwg.mxu0
  %785 = vmatpush.bf16.msra.mxu0 %v284
  %786 = vmatpush.bf16.msra.mxu0 %v283
  %787 = vmatpush.bf16.msra.mxu0 %v282
  %788 = vmatpush.bf16.msra.mxu0 %v281
  %789 = vmatpush.bf16.msra.mxu0 %v280
  %790 = vmatpush.bf16.msra.mxu0 %v279
  %791 = vmatpush.bf16.msra.mxu0 %v278
  %792 = vmatpush.bf16.msra.mxu0 %v277
  %793 = vmatmul.bf16.gmra.mxu0 %v751
  %v794 = vpop.f32.mrf.mxu0
  %v795 = vadd.f32 %v782, %v794
  %v796 = vpop.f32.mrf.mxu0
  %797 = vdwg.mxu0
  %798 = vmatpush.bf16.msra.mxu0 0
  %799 = vmatpush.bf16.msra.mxu0 0
  %800 = vmatpush.bf16.msra.mxu0 0
  %801 = vmatpush.bf16.msra.mxu0 0
  %802 = vmatpush.bf16.msra.mxu0 0
  %803 = vmatpush.bf16.msra.mxu0 %v287
  %804 = vmatpush.bf16.msra.mxu0 %v286
  %805 = vmatpush.bf16.msra.mxu0 %v285
  %806 = vmatmul.bf16.gmra.mxu0 %v757
  %v807 = vpop.f32.mrf.mxu0
  %v808 = vadd.f32 %v795, %v807
  %v809 = vpop.f32.mrf.mxu0
  %810 = vdwg.mxu0
  %v811 = vmax.f32 %v808, 0.0
  %v812 = vpack.c.bf16 %v811, %v811
  %v813 = vld [vmem:[%s0] sm:$0x88]
  %v814 = vld [vmem:[%s0 + $0x8] sm:$0x88]
  %v815 = vld [vmem:[%s0 + $0x20] sm:$0x88]
  %v816 = vld [vmem:[%s0 + $0x28] sm:$0x88]
  %v821 = vunpack.c.l.b16 %v813
  %v822 = vunpack.c.h.b16 %v813
  %v823 = vunpack.c.l.b16 %v814
  %v824 = vunpack.c.h.b16 %v814
  %v825 = vunpack.c.l.b16 %v815
  %v826 = vunpack.c.h.b16 %v815
  %v827 = vunpack.c.l.b16 %v816
  %v828 = vunpack.c.h.b16 %v816
  %v829 = vpack.c.b16 %v821, %v821
  %v830 = vpack.c.b16 %v822, %v822
  %v831 = vpack.c.b16 %v823, %v823
  %v832 = vpack.c.b16 %v824, %v824
  %v833 = vpack.c.b16 %v825, %v825
  %v834 = vpack.c.b16 %v826, %v826
  %v835 = vpack.c.b16 %v827, %v827
  %v836 = vpack.c.b16 %v828, %v828
  %v837 = vunpack.c.l.b16 %v829
  %v838 = vunpack.c.l.b16 %v830
  %v839 = vunpack.c.l.b16 %v831
  %v840 = vunpack.c.l.b16 %v832
  %v841 = vunpack.c.l.b16 %v833
  %v842 = vunpack.c.l.b16 %v834
  %v843 = vunpack.c.l.b16 %v835
  %v844 = vunpack.c.l.b16 %v836
  %v845 = vrot.slane %v837, 6
  %v846 = vrot.slane %v841, 5
  %v847 = vsel %vm138, %v846, %v845
  %v848 = vrot.slane %v838, 6
  %v849 = vrot.slane %v842, 5
  %v850 = vsel %vm138, %v849, %v848
  %v851 = vrot.slane %v839, 6
  %v852 = vrot.slane %v843, 5
  %v853 = vsel %vm138, %v852, %v851
  %v854 = vrot.slane %v840, 6
  %v855 = vrot.slane %v844, 5
  %v856 = vsel %vm138, %v855, %v854
  %v857 = vpack.c.b16 %v847, %v847
  %v858 = vpack.c.b16 %v850, %v850
  %v859 = vpack.c.b16 %v853, %v853
  %v860 = vpack.c.b16 %v856, %v856
  %v865 = vsel %vm315, %v860, 0
  %867 = vmatpush.bf16.msra.mxu0 %v268
  %868 = vmatpush.bf16.msra.mxu0 %v267
  %869 = vmatpush.bf16.msra.mxu0 %v266
  %870 = vmatpush.bf16.msra.mxu0 %v265
  %871 = vmatpush.bf16.msra.mxu0 %v264
  %872 = vmatpush.bf16.msra.mxu0 %v263
  %873 = vmatpush.bf16.msra.mxu0 %v262
  %874 = vmatpush.bf16.msra.mxu0 %v261
  %875 = vmatmul.bf16.gmra.mxu0 %v857
  %v876 = vpop.f32.mrf.mxu0
  %v877 = vadd.f32 %v107, %v876
  %v878 = vpop.f32.mrf.mxu0
  %879 = vdwg.mxu0
  %880 = vmatpush.bf16.msra.mxu0 %v276
  %881 = vmatpush.bf16.msra.mxu0 %v275
  %882 = vmatpush.bf16.msra.mxu0 %v274
  %883 = vmatpush.bf16.msra.mxu0 %v273
  %884 = vmatpush.bf16.msra.mxu0 %v272
  %885 = vmatpush.bf16.msra.mxu0 %v271
  %886 = vmatpush.bf16.msra.mxu0 %v270
  %887 = vmatpush.bf16.msra.mxu0 %v269
  %888 = vmatmul.bf16.gmra.mxu0 %v858
  %v889 = vpop.f32.mrf.mxu0
  %v890 = vadd.f32 %v877, %v889
  %v891 = vpop.f32.mrf.mxu0
  %892 = vdwg.mxu0
  %893 = vmatpush.bf16.msra.mxu0 %v284
  %894 = vmatpush.bf16.msra.mxu0 %v283
  %895 = vmatpush.bf16.msra.mxu0 %v282
  %896 = vmatpush.bf16.msra.mxu0 %v281
  %897 = vmatpush.bf16.msra.mxu0 %v280
  %898 = vmatpush.bf16.msra.mxu0 %v279
  %899 = vmatpush.bf16.msra.mxu0 %v278
  %900 = vmatpush.bf16.msra.mxu0 %v277
  %901 = vmatmul.bf16.gmra.mxu0 %v859
  %v902 = vpop.f32.mrf.mxu0
  %v903 = vadd.f32 %v890, %v902
  %v904 = vpop.f32.mrf.mxu0
  %905 = vdwg.mxu0
  %906 = vmatpush.bf16.msra.mxu0 0
  %907 = vmatpush.bf16.msra.mxu0 0
  %908 = vmatpush.bf16.msra.mxu0 0
  %909 = vmatpush.bf16.msra.mxu0 0
  %910 = vmatpush.bf16.msra.mxu0 0
  %911 = vmatpush.bf16.msra.mxu0 %v287
  %912 = vmatpush.bf16.msra.mxu0 %v286
  %913 = vmatpush.bf16.msra.mxu0 %v285
  %914 = vmatmul.bf16.gmra.mxu0 %v865
  %v915 = vpop.f32.mrf.mxu0
  %v916 = vadd.f32 %v903, %v915
  %v917 = vpop.f32.mrf.mxu0
  %918 = vdwg.mxu0
  %v919 = vmax.f32 %v916, 0.0
  %v920 = vpack.c.bf16 %v919, %v919
  %v921 = vrot.slane %v837, 7
  %v922 = vrot.slane %v841, 6
  %v923 = vsel %vm138, %v922, %v921
  %v924 = vrot.slane %v838, 7
  %v925 = vrot.slane %v842, 6
  %v926 = vsel %vm138, %v925, %v924
  %v927 = vrot.slane %v839, 7
  %v928 = vrot.slane %v843, 6
  %v929 = vsel %vm138, %v928, %v927
  %v930 = vrot.slane %v840, 7
  %v931 = vrot.slane %v844, 6
  %v932 = vsel %vm138, %v931, %v930
  %v933 = vpack.c.b16 %v923, %v923
  %v934 = vpack.c.b16 %v926, %v926
  %v935 = vpack.c.b16 %v929, %v929
  %v936 = vpack.c.b16 %v932, %v932
  %v941 = vsel %vm315, %v936, 0
  %943 = vmatpush.bf16.msra.mxu0 %v268
  %944 = vmatpush.bf16.msra.mxu0 %v267
  %945 = vmatpush.bf16.msra.mxu0 %v266
  %946 = vmatpush.bf16.msra.mxu0 %v265
  %947 = vmatpush.bf16.msra.mxu0 %v264
  %948 = vmatpush.bf16.msra.mxu0 %v263
  %949 = vmatpush.bf16.msra.mxu0 %v262
  %950 = vmatpush.bf16.msra.mxu0 %v261
  %951 = vmatmul.bf16.gmra.mxu0 %v933
  %v952 = vpop.f32.mrf.mxu0
  %v953 = vadd.f32 %v107, %v952
  %v954 = vpop.f32.mrf.mxu0
  %955 = vdwg.mxu0
  %956 = vmatpush.bf16.msra.mxu0 %v276
  %957 = vmatpush.bf16.msra.mxu0 %v275
  %958 = vmatpush.bf16.msra.mxu0 %v274
  %959 = vmatpush.bf16.msra.mxu0 %v273
  %960 = vmatpush.bf16.msra.mxu0 %v272
  %961 = vmatpush.bf16.msra.mxu0 %v271
  %962 = vmatpush.bf16.msra.mxu0 %v270
  %963 = vmatpush.bf16.msra.mxu0 %v269
  %964 = vmatmul.bf16.gmra.mxu0 %v934
  %v965 = vpop.f32.mrf.mxu0
  %v966 = vadd.f32 %v953, %v965
  %v967 = vpop.f32.mrf.mxu0
  %968 = vdwg.mxu0
  %969 = vmatpush.bf16.msra.mxu0 %v284
  %970 = vmatpush.bf16.msra.mxu0 %v283
  %971 = vmatpush.bf16.msra.mxu0 %v282
  %972 = vmatpush.bf16.msra.mxu0 %v281
  %973 = vmatpush.bf16.msra.mxu0 %v280
  %974 = vmatpush.bf16.msra.mxu0 %v279
  %975 = vmatpush.bf16.msra.mxu0 %v278
  %976 = vmatpush.bf16.msra.mxu0 %v277
  %977 = vmatmul.bf16.gmra.mxu0 %v935
  %v978 = vpop.f32.mrf.mxu0
  %v979 = vadd.f32 %v966, %v978
  %v980 = vpop.f32.mrf.mxu0
  %981 = vdwg.mxu0
  %982 = vmatpush.bf16.msra.mxu0 0
  %983 = vmatpush.bf16.msra.mxu0 0
  %984 = vmatpush.bf16.msra.mxu0 0
  %985 = vmatpush.bf16.msra.mxu0 0
  %986 = vmatpush.bf16.msra.mxu0 0
  %987 = vmatpush.bf16.msra.mxu0 %v287
  %988 = vmatpush.bf16.msra.mxu0 %v286
  %989 = vmatpush.bf16.msra.mxu0 %v285
  %990 = vmatmul.bf16.gmra.mxu0 %v941
  %v991 = vpop.f32.mrf.mxu0
  %v992 = vadd.f32 %v979, %v991
  %v993 = vpop.f32.mrf.mxu0
  %994 = vdwg.mxu0
  %v995 = vmax.f32 %v992, 0.0
  %v996 = vpack.c.bf16 %v995, %v995
  %v997 = vld [vmem:[%s0 + $0x10] sm:$0x11]
  %v998 = vld [vmem:[%s0 + $0x18] sm:$0x11]
  %v999 = vld [vmem:[%s0 + $0x30] sm:$0x11]
  %v1000 = vld [vmem:[%s0 + $0x38] sm:$0x11]
  %v1005 = vunpack.c.l.b16 %v997
  %v1006 = vunpack.c.h.b16 %v997
  %v1007 = vunpack.c.l.b16 %v998
  %v1008 = vunpack.c.h.b16 %v998
  %v1009 = vunpack.c.l.b16 %v999
  %v1010 = vunpack.c.h.b16 %v999
  %v1011 = vunpack.c.l.b16 %v1000
  %v1012 = vunpack.c.h.b16 %v1000
  %v1013 = vpack.c.b16 %v1005, %v1005
  %v1014 = vpack.c.b16 %v1006, %v1006
  %v1015 = vpack.c.b16 %v1007, %v1007
  %v1016 = vpack.c.b16 %v1008, %v1008
  %v1017 = vpack.c.b16 %v1009, %v1009
  %v1018 = vpack.c.b16 %v1010, %v1010
  %v1019 = vpack.c.b16 %v1011, %v1011
  %v1020 = vpack.c.b16 %v1012, %v1012
  %v1021 = vunpack.c.l.b16 %v1013
  %v1022 = vunpack.c.l.b16 %v1014
  %v1023 = vunpack.c.l.b16 %v1015
  %v1024 = vunpack.c.l.b16 %v1016
  %v1025 = vunpack.c.l.b16 %v1017
  %v1026 = vunpack.c.l.b16 %v1018
  %v1027 = vunpack.c.l.b16 %v1019
  %v1028 = vunpack.c.l.b16 %v1020
  %v1029 = vrot.slane %v1025, 7
  %v1030 = vsel %vm138, %v1029, %v1021
  %v1031 = vrot.slane %v1026, 7
  %v1032 = vsel %vm138, %v1031, %v1022
  %v1033 = vrot.slane %v1027, 7
  %v1034 = vsel %vm138, %v1033, %v1023
  %v1035 = vrot.slane %v1028, 7
  %v1036 = vsel %vm138, %v1035, %v1024
  %v1037 = vpack.c.b16 %v1030, %v1030
  %v1038 = vpack.c.b16 %v1032, %v1032
  %v1039 = vpack.c.b16 %v1034, %v1034
  %v1040 = vpack.c.b16 %v1036, %v1036
  %v1045 = vsel %vm315, %v1040, 0
  %1047 = vmatpush.bf16.msra.mxu0 %v268
  %1048 = vmatpush.bf16.msra.mxu0 %v267
  %1049 = vmatpush.bf16.msra.mxu0 %v266
  %1050 = vmatpush.bf16.msra.mxu0 %v265
  %1051 = vmatpush.bf16.msra.mxu0 %v264
  %1052 = vmatpush.bf16.msra.mxu0 %v263
  %1053 = vmatpush.bf16.msra.mxu0 %v262
  %1054 = vmatpush.bf16.msra.mxu0 %v261
  %1055 = vmatmul.bf16.gmra.mxu0 %v1037
  %v1056 = vpop.f32.mrf.mxu0
  %v1057 = vadd.f32 %v107, %v1056
  %v1058 = vpop.f32.mrf.mxu0
  %1059 = vdwg.mxu0
  %1060 = vmatpush.bf16.msra.mxu0 %v276
  %1061 = vmatpush.bf16.msra.mxu0 %v275
  %1062 = vmatpush.bf16.msra.mxu0 %v274
  %1063 = vmatpush.bf16.msra.mxu0 %v273
  %1064 = vmatpush.bf16.msra.mxu0 %v272
  %1065 = vmatpush.bf16.msra.mxu0 %v271
  %1066 = vmatpush.bf16.msra.mxu0 %v270
  %1067 = vmatpush.bf16.msra.mxu0 %v269
  %1068 = vmatmul.bf16.gmra.mxu0 %v1038
  %v1069 = vpop.f32.mrf.mxu0
  %v1070 = vadd.f32 %v1057, %v1069
  %v1071 = vpop.f32.mrf.mxu0
  %1072 = vdwg.mxu0
  %1073 = vmatpush.bf16.msra.mxu0 %v284
  %1074 = vmatpush.bf16.msra.mxu0 %v283
  %1075 = vmatpush.bf16.msra.mxu0 %v282
  %1076 = vmatpush.bf16.msra.mxu0 %v281
  %1077 = vmatpush.bf16.msra.mxu0 %v280
  %1078 = vmatpush.bf16.msra.mxu0 %v279
  %1079 = vmatpush.bf16.msra.mxu0 %v278
  %1080 = vmatpush.bf16.msra.mxu0 %v277
  %1081 = vmatmul.bf16.gmra.mxu0 %v1039
  %v1082 = vpop.f32.mrf.mxu0
  %v1083 = vadd.f32 %v1070, %v1082
  %v1084 = vpop.f32.mrf.mxu0
  %1085 = vdwg.mxu0
  %1086 = vmatpush.bf16.msra.mxu0 0
  %1087 = vmatpush.bf16.msra.mxu0 0
  %1088 = vmatpush.bf16.msra.mxu0 0
  %1089 = vmatpush.bf16.msra.mxu0 0
  %1090 = vmatpush.bf16.msra.mxu0 0
  %1091 = vmatpush.bf16.msra.mxu0 %v287
  %1092 = vmatpush.bf16.msra.mxu0 %v286
  %1093 = vmatpush.bf16.msra.mxu0 %v285
  %1094 = vmatmul.bf16.gmra.mxu0 %v1045
  %v1095 = vpop.f32.mrf.mxu0
  %v1096 = vadd.f32 %v1083, %v1095
  %v1097 = vpop.f32.mrf.mxu0
  %1098 = vdwg.mxu0
  %v1099 = vmax.f32 %v1096, 0.0
  %v1100 = vpack.c.bf16 %v1099, %v1099
  %v1101 = vld [vmem:[%s4] sm:$0x1]
  %v1102 = vld [vmem:[%s6] sm:$0x1]
  %v1103 = vld [vmem:[%s3] sm:$0xf]
  %v1104 = vld [vmem:[%s3 + $0x4] sm:$0xf]
  %v1105 = vld [vmem:[%s3 + $0x8] sm:$0xf]
  %v1106 = vld [vmem:[%s3 + $0xc] sm:$0xf]
  %v1107 = vld [vmem:[%s3 + $0x10] sm:$0xf]
  %v1108 = vld [vmem:[%s3 + $0x14] sm:$0xf]
  %v1109 = vld [vmem:[%s3 + $0x18] sm:$0xf]
  %v1110 = vld [vmem:[%s3 + $0x1c] sm:$0xf]
  %v1119 = vunpack.c.l.b16 %v1103
  %v1120 = vunpack.c.l.b16 %v1104
  %v1121 = vunpack.c.l.b16 %v1105
  %v1122 = vunpack.c.l.b16 %v1106
  %v1123 = vunpack.c.l.b16 %v1107
  %v1124 = vunpack.c.l.b16 %v1108
  %v1125 = vunpack.c.l.b16 %v1109
  %v1126 = vunpack.c.l.b16 %v1110
  %v1127 = vpack.c.b16 %v1120, %v1119
  %v1128 = vpack.c.b16 %v1122, %v1121
  %v1129 = vpack.c.b16 %v1124, %v1123
  %v1130 = vpack.c.b16 %v1126, %v1125
  %vm1135 = vcmask 523264
  %v1137 = vsel %vm1135, %v372, 0
  %1139 = vmatpush.bf16.msra.mxu0 0
  %1140 = vmatpush.bf16.msra.mxu0 0
  %1141 = vmatpush.bf16.msra.mxu0 0
  %1142 = vmatpush.bf16.msra.mxu0 0
  %1143 = vmatpush.bf16.msra.mxu0 %v1130
  %1144 = vmatpush.bf16.msra.mxu0 %v1129
  %1145 = vmatpush.bf16.msra.mxu0 %v1128
  %1146 = vmatpush.bf16.msra.mxu0 %v1127
  %1147 = vmatmul.bf16.gmra.mxu0 %v1137
  %v1148 = vpop.f32.mrf.mxu0
  %v1149 = vadd.f32 0.0, %v1148
  %v1150 = vpop.f32.mrf.mxu0
  %1151 = vdwg.mxu0
  %v1153 = vperm.slane %v1101, 0
  %v1155 = vadd.f32 %v1153, %v1149
  %s1156 = scalar_lea.vmem %s3, 32
  %v1157 = vld [vmem:[%s1156] sm:$0xf]
  %v1158 = vld [vmem:[%s1156 + $0x4] sm:$0xf]
  %v1159 = vld [vmem:[%s1156 + $0x8] sm:$0xf]
  %v1160 = vld [vmem:[%s1156 + $0xc] sm:$0xf]
  %v1161 = vld [vmem:[%s1156 + $0x10] sm:$0xf]
  %v1162 = vld [vmem:[%s1156 + $0x14] sm:$0xf]
  %v1163 = vld [vmem:[%s1156 + $0x18] sm:$0xf]
  %v1164 = vld [vmem:[%s1156 + $0x1c] sm:$0xf]
  %v1173 = vunpack.c.l.b16 %v1157
  %v1174 = vunpack.c.l.b16 %v1158
  %v1175 = vunpack.c.l.b16 %v1159
  %v1176 = vunpack.c.l.b16 %v1160
  %v1177 = vunpack.c.l.b16 %v1161
  %v1178 = vunpack.c.l.b16 %v1162
  %v1179 = vunpack.c.l.b16 %v1163
  %v1180 = vunpack.c.l.b16 %v1164
  %v1181 = vpack.c.b16 %v1174, %v1173
  %v1182 = vpack.c.b16 %v1176, %v1175
  %v1183 = vpack.c.b16 %v1178, %v1177
  %v1184 = vpack.c.b16 %v1180, %v1179
  %v1190 = vsel %vm1135, %v444, 0
  %1192 = vmatpush.bf16.msra.mxu0 0
  %1193 = vmatpush.bf16.msra.mxu0 0
  %1194 = vmatpush.bf16.msra.mxu0 0
  %1195 = vmatpush.bf16.msra.mxu0 0
  %1196 = vmatpush.bf16.msra.mxu0 %v1184
  %1197 = vmatpush.bf16.msra.mxu0 %v1183
  %1198 = vmatpush.bf16.msra.mxu0 %v1182
  %1199 = vmatpush.bf16.msra.mxu0 %v1181
  %1200 = vmatmul.bf16.gmra.mxu0 %v1190
  %v1201 = vpop.f32.mrf.mxu0
  %v1202 = vadd.f32 0.0, %v1201
  %v1203 = vpop.f32.mrf.mxu0
  %1204 = vdwg.mxu0
  %v1205 = vadd.f32 %v1155, %v1202
  %s1206 = scalar_lea.vmem %s3, 64
  %v1207 = vld [vmem:[%s1206] sm:$0xf]
  %v1208 = vld [vmem:[%s1206 + $0x4] sm:$0xf]
  %v1209 = vld [vmem:[%s1206 + $0x8] sm:$0xf]
  %v1210 = vld [vmem:[%s1206 + $0xc] sm:$0xf]
  %v1211 = vld [vmem:[%s1206 + $0x10] sm:$0xf]
  %v1212 = vld [vmem:[%s1206 + $0x14] sm:$0xf]
  %v1213 = vld [vmem:[%s1206 + $0x18] sm:$0xf]
  %v1214 = vld [vmem:[%s1206 + $0x1c] sm:$0xf]
  %v1223 = vunpack.c.l.b16 %v1207
  %v1224 = vunpack.c.l.b16 %v1208
  %v1225 = vunpack.c.l.b16 %v1209
  %v1226 = vunpack.c.l.b16 %v1210
  %v1227 = vunpack.c.l.b16 %v1211
  %v1228 = vunpack.c.l.b16 %v1212
  %v1229 = vunpack.c.l.b16 %v1213
  %v1230 = vunpack.c.l.b16 %v1214
  %v1231 = vpack.c.b16 %v1224, %v1223
  %v1232 = vpack.c.b16 %v1226, %v1225
  %v1233 = vpack.c.b16 %v1228, %v1227
  %v1234 = vpack.c.b16 %v1230, %v1229
  %v1240 = vsel %vm1135, %v552, 0
  %1242 = vmatpush.bf16.msra.mxu0 0
  %1243 = vmatpush.bf16.msra.mxu0 0
  %1244 = vmatpush.bf16.msra.mxu0 0
  %1245 = vmatpush.bf16.msra.mxu0 0
  %1246 = vmatpush.bf16.msra.mxu0 %v1234
  %1247 = vmatpush.bf16.msra.mxu0 %v1233
  %1248 = vmatpush.bf16.msra.mxu0 %v1232
  %1249 = vmatpush.bf16.msra.mxu0 %v1231
  %1250 = vmatmul.bf16.gmra.mxu0 %v1240
  %v1251 = vpop.f32.mrf.mxu0
  %v1252 = vadd.f32 0.0, %v1251
  %v1253 = vpop.f32.mrf.mxu0
  %1254 = vdwg.mxu0
  %v1255 = vadd.f32 %v1205, %v1252
  %s1256 = scalar_lea.vmem %s3, 96
  %v1257 = vld [vmem:[%s1256] sm:$0xf]
  %v1258 = vld [vmem:[%s1256 + $0x4] sm:$0xf]
  %v1259 = vld [vmem:[%s1256 + $0x8] sm:$0xf]
  %v1260 = vld [vmem:[%s1256 + $0xc] sm:$0xf]
  %v1261 = vld [vmem:[%s1256 + $0x10] sm:$0xf]
  %v1262 = vld [vmem:[%s1256 + $0x14] sm:$0xf]
  %v1263 = vld [vmem:[%s1256 + $0x18] sm:$0xf]
  %v1264 = vld [vmem:[%s1256 + $0x1c] sm:$0xf]
  %v1273 = vunpack.c.l.b16 %v1257
  %v1274 = vunpack.c.l.b16 %v1258
  %v1275 = vunpack.c.l.b16 %v1259
  %v1276 = vunpack.c.l.b16 %v1260
  %v1277 = vunpack.c.l.b16 %v1261
  %v1278 = vunpack.c.l.b16 %v1262
  %v1279 = vunpack.c.l.b16 %v1263
  %v1280 = vunpack.c.l.b16 %v1264
  %v1281 = vpack.c.b16 %v1274, %v1273
  %v1282 = vpack.c.b16 %v1276, %v1275
  %v1283 = vpack.c.b16 %v1278, %v1277
  %v1284 = vpack.c.b16 %v1280, %v1279
  %v1290 = vsel %vm1135, %v628, 0
  %1292 = vmatpush.bf16.msra.mxu0 0
  %1293 = vmatpush.bf16.msra.mxu0 0
  %1294 = vmatpush.bf16.msra.mxu0 0
  %1295 = vmatpush.bf16.msra.mxu0 0
  %1296 = vmatpush.bf16.msra.mxu0 %v1284
  %1297 = vmatpush.bf16.msra.mxu0 %v1283
  %1298 = vmatpush.bf16.msra.mxu0 %v1282
  %1299 = vmatpush.bf16.msra.mxu0 %v1281
  %1300 = vmatmul.bf16.gmra.mxu0 %v1290
  %v1301 = vpop.f32.mrf.mxu0
  %v1302 = vadd.f32 0.0, %v1301
  %v1303 = vpop.f32.mrf.mxu0
  %1304 = vdwg.mxu0
  %v1305 = vadd.f32 %v1255, %v1302
  %s1306 = scalar_lea.vmem %s3, 128
  %v1307 = vld [vmem:[%s1306] sm:$0xf]
  %v1308 = vld [vmem:[%s1306 + $0x4] sm:$0xf]
  %v1309 = vld [vmem:[%s1306 + $0x8] sm:$0xf]
  %v1310 = vld [vmem:[%s1306 + $0xc] sm:$0xf]
  %v1311 = vld [vmem:[%s1306 + $0x10] sm:$0xf]
  %v1312 = vld [vmem:[%s1306 + $0x14] sm:$0xf]
  %v1313 = vld [vmem:[%s1306 + $0x18] sm:$0xf]
  %v1314 = vld [vmem:[%s1306 + $0x1c] sm:$0xf]
  %v1323 = vunpack.c.l.b16 %v1307
  %v1324 = vunpack.c.l.b16 %v1308
  %v1325 = vunpack.c.l.b16 %v1309
  %v1326 = vunpack.c.l.b16 %v1310
  %v1327 = vunpack.c.l.b16 %v1311
  %v1328 = vunpack.c.l.b16 %v1312
  %v1329 = vunpack.c.l.b16 %v1313
  %v1330 = vunpack.c.l.b16 %v1314
  %v1331 = vpack.c.b16 %v1324, %v1323
  %v1332 = vpack.c.b16 %v1326, %v1325
  %v1333 = vpack.c.b16 %v1328, %v1327
  %v1334 = vpack.c.b16 %v1330, %v1329
  %v1340 = vsel %vm1135, %v736, 0
  %1342 = vmatpush.bf16.msra.mxu0 0
  %1343 = vmatpush.bf16.msra.mxu0 0
  %1344 = vmatpush.bf16.msra.mxu0 0
  %1345 = vmatpush.bf16.msra.mxu0 0
  %1346 = vmatpush.bf16.msra.mxu0 %v1334
  %1347 = vmatpush.bf16.msra.mxu0 %v1333
  %1348 = vmatpush.bf16.msra.mxu0 %v1332
  %1349 = vmatpush.bf16.msra.mxu0 %v1331
  %1350 = vmatmul.bf16.gmra.mxu0 %v1340
  %v1351 = vpop.f32.mrf.mxu0
  %v1352 = vadd.f32 0.0, %v1351
  %v1353 = vpop.f32.mrf.mxu0
  %1354 = vdwg.mxu0
  %v1355 = vadd.f32 %v1305, %v1352
  %s1356 = scalar_lea.vmem %s3, 160
  %v1357 = vld [vmem:[%s1356] sm:$0xf]
  %v1358 = vld [vmem:[%s1356 + $0x4] sm:$0xf]
  %v1359 = vld [vmem:[%s1356 + $0x8] sm:$0xf]
  %v1360 = vld [vmem:[%s1356 + $0xc] sm:$0xf]
  %v1361 = vld [vmem:[%s1356 + $0x10] sm:$0xf]
  %v1362 = vld [vmem:[%s1356 + $0x14] sm:$0xf]
  %v1363 = vld [vmem:[%s1356 + $0x18] sm:$0xf]
  %v1364 = vld [vmem:[%s1356 + $0x1c] sm:$0xf]
  %v1373 = vunpack.c.l.b16 %v1357
  %v1374 = vunpack.c.l.b16 %v1358
  %v1375 = vunpack.c.l.b16 %v1359
  %v1376 = vunpack.c.l.b16 %v1360
  %v1377 = vunpack.c.l.b16 %v1361
  %v1378 = vunpack.c.l.b16 %v1362
  %v1379 = vunpack.c.l.b16 %v1363
  %v1380 = vunpack.c.l.b16 %v1364
  %v1381 = vpack.c.b16 %v1374, %v1373
  %v1382 = vpack.c.b16 %v1376, %v1375
  %v1383 = vpack.c.b16 %v1378, %v1377
  %v1384 = vpack.c.b16 %v1380, %v1379
  %v1390 = vsel %vm1135, %v812, 0
  %1392 = vmatpush.bf16.msra.mxu0 0
  %1393 = vmatpush.bf16.msra.mxu0 0
  %1394 = vmatpush.bf16.msra.mxu0 0
  %1395 = vmatpush.bf16.msra.mxu0 0
  %1396 = vmatpush.bf16.msra.mxu0 %v1384
  %1397 = vmatpush.bf16.msra.mxu0 %v1383
  %1398 = vmatpush.bf16.msra.mxu0 %v1382
  %1399 = vmatpush.bf16.msra.mxu0 %v1381
  %1400 = vmatmul.bf16.gmra.mxu0 %v1390
  %v1401 = vpop.f32.mrf.mxu0
  %v1402 = vadd.f32 0.0, %v1401
  %v1403 = vpop.f32.mrf.mxu0
  %1404 = vdwg.mxu0
  %v1405 = vadd.f32 %v1355, %v1402
  %s1406 = scalar_lea.vmem %s3, 192
  %v1407 = vld [vmem:[%s1406] sm:$0xf]
  %v1408 = vld [vmem:[%s1406 + $0x4] sm:$0xf]
  %v1409 = vld [vmem:[%s1406 + $0x8] sm:$0xf]
  %v1410 = vld [vmem:[%s1406 + $0xc] sm:$0xf]
  %v1411 = vld [vmem:[%s1406 + $0x10] sm:$0xf]
  %v1412 = vld [vmem:[%s1406 + $0x14] sm:$0xf]
  %v1413 = vld [vmem:[%s1406 + $0x18] sm:$0xf]
  %v1414 = vld [vmem:[%s1406 + $0x1c] sm:$0xf]
  %v1423 = vunpack.c.l.b16 %v1407
  %v1424 = vunpack.c.l.b16 %v1408
  %v1425 = vunpack.c.l.b16 %v1409
  %v1426 = vunpack.c.l.b16 %v1410
  %v1427 = vunpack.c.l.b16 %v1411
  %v1428 = vunpack.c.l.b16 %v1412
  %v1429 = vunpack.c.l.b16 %v1413
  %v1430 = vunpack.c.l.b16 %v1414
  %v1431 = vpack.c.b16 %v1424, %v1423
  %v1432 = vpack.c.b16 %v1426, %v1425
  %v1433 = vpack.c.b16 %v1428, %v1427
  %v1434 = vpack.c.b16 %v1430, %v1429
  %v1440 = vsel %vm1135, %v920, 0
  %1442 = vmatpush.bf16.msra.mxu0 0
  %1443 = vmatpush.bf16.msra.mxu0 0
  %1444 = vmatpush.bf16.msra.mxu0 0
  %1445 = vmatpush.bf16.msra.mxu0 0
  %1446 = vmatpush.bf16.msra.mxu0 %v1434
  %1447 = vmatpush.bf16.msra.mxu0 %v1433
  %1448 = vmatpush.bf16.msra.mxu0 %v1432
  %1449 = vmatpush.bf16.msra.mxu0 %v1431
  %1450 = vmatmul.bf16.gmra.mxu0 %v1440
  %v1451 = vpop.f32.mrf.mxu0
  %v1452 = vadd.f32 0.0, %v1451
  %v1453 = vpop.f32.mrf.mxu0
  %1454 = vdwg.mxu0
  %v1455 = vadd.f32 %v1405, %v1452
  %s1456 = scalar_lea.vmem %s3, 224
  %v1457 = vld [vmem:[%s1456] sm:$0xf]
  %v1458 = vld [vmem:[%s1456 + $0x4] sm:$0xf]
  %v1459 = vld [vmem:[%s1456 + $0x8] sm:$0xf]
  %v1460 = vld [vmem:[%s1456 + $0xc] sm:$0xf]
  %v1461 = vld [vmem:[%s1456 + $0x10] sm:$0xf]
  %v1462 = vld [vmem:[%s1456 + $0x14] sm:$0xf]
  %v1463 = vld [vmem:[%s1456 + $0x18] sm:$0xf]
  %v1464 = vld [vmem:[%s1456 + $0x1c] sm:$0xf]
  %v1473 = vunpack.c.l.b16 %v1457
  %v1474 = vunpack.c.l.b16 %v1458
  %v1475 = vunpack.c.l.b16 %v1459
  %v1476 = vunpack.c.l.b16 %v1460
  %v1477 = vunpack.c.l.b16 %v1461
  %v1478 = vunpack.c.l.b16 %v1462
  %v1479 = vunpack.c.l.b16 %v1463
  %v1480 = vunpack.c.l.b16 %v1464
  %v1481 = vpack.c.b16 %v1474, %v1473
  %v1482 = vpack.c.b16 %v1476, %v1475
  %v1483 = vpack.c.b16 %v1478, %v1477
  %v1484 = vpack.c.b16 %v1480, %v1479
  %v1490 = vsel %vm1135, %v996, 0
  %1492 = vmatpush.bf16.msra.mxu0 0
  %1493 = vmatpush.bf16.msra.mxu0 0
  %1494 = vmatpush.bf16.msra.mxu0 0
  %1495 = vmatpush.bf16.msra.mxu0 0
  %1496 = vmatpush.bf16.msra.mxu0 %v1484
  %1497 = vmatpush.bf16.msra.mxu0 %v1483
  %1498 = vmatpush.bf16.msra.mxu0 %v1482
  %1499 = vmatpush.bf16.msra.mxu0 %v1481
  %1500 = vmatmul.bf16.gmra.mxu0 %v1490
  %v1501 = vpop.f32.mrf.mxu0
  %v1502 = vadd.f32 0.0, %v1501
  %v1503 = vpop.f32.mrf.mxu0
  %1504 = vdwg.mxu0
  %v1505 = vadd.f32 %v1455, %v1502
  %s1506 = scalar_lea.vmem %s3, 256
  %v1507 = vld [vmem:[%s1506] sm:$0xf]
  %v1508 = vld [vmem:[%s1506 + $0x4] sm:$0xf]
  %v1509 = vld [vmem:[%s1506 + $0x8] sm:$0xf]
  %v1510 = vld [vmem:[%s1506 + $0xc] sm:$0xf]
  %v1511 = vld [vmem:[%s1506 + $0x10] sm:$0xf]
  %v1512 = vld [vmem:[%s1506 + $0x14] sm:$0xf]
  %v1513 = vld [vmem:[%s1506 + $0x18] sm:$0xf]
  %v1514 = vld [vmem:[%s1506 + $0x1c] sm:$0xf]
  %v1523 = vunpack.c.l.b16 %v1507
  %v1524 = vunpack.c.l.b16 %v1508
  %v1525 = vunpack.c.l.b16 %v1509
  %v1526 = vunpack.c.l.b16 %v1510
  %v1527 = vunpack.c.l.b16 %v1511
  %v1528 = vunpack.c.l.b16 %v1512
  %v1529 = vunpack.c.l.b16 %v1513
  %v1530 = vunpack.c.l.b16 %v1514
  %v1531 = vpack.c.b16 %v1524, %v1523
  %v1532 = vpack.c.b16 %v1526, %v1525
  %v1533 = vpack.c.b16 %v1528, %v1527
  %v1534 = vpack.c.b16 %v1530, %v1529
  %v1540 = vsel %vm1135, %v1100, 0
  %1542 = vmatpush.bf16.msra.mxu0 0
  %1543 = vmatpush.bf16.msra.mxu0 0
  %1544 = vmatpush.bf16.msra.mxu0 0
  %1545 = vmatpush.bf16.msra.mxu0 0
  %1546 = vmatpush.bf16.msra.mxu0 %v1534
  %1547 = vmatpush.bf16.msra.mxu0 %v1533
  %1548 = vmatpush.bf16.msra.mxu0 %v1532
  %1549 = vmatpush.bf16.msra.mxu0 %v1531
  %1550 = vmatmul.bf16.gmra.mxu0 %v1540
  %v1551 = vpop.f32.mrf.mxu0
  %v1552 = vadd.f32 0.0, %v1551
  %v1553 = vpop.f32.mrf.mxu0
  %1554 = vdwg.mxu0
  %v1555 = vadd.f32 %v1505, %v1552
  %v1556 = vmax.f32 %v1555, 0.0
  %v1557 = vpack.c.bf16 %v1556, %v1556
  %v1558 = vld [vmem:[%s5] sm:$0xf]
  %v1559 = vld [vmem:[%s5 + $0x4] sm:$0xf]
  %v1560 = vld [vmem:[%s5 + $0x8] sm:$0xf]
  %v1561 = vld [vmem:[%s5 + $0xc] sm:$0xf]
  %v1562 = vld [vmem:[%s5 + $0x10] sm:$0xf]
  %v1563 = vld [vmem:[%s5 + $0x14] sm:$0xf]
  %v1564 = vld [vmem:[%s5 + $0x18] sm:$0xf]
  %v1565 = vld [vmem:[%s5 + $0x1c] sm:$0xf]
  %v1574 = vunpack.c.l.b16 %v1558
  %v1575 = vunpack.c.l.b16 %v1559
  %v1576 = vunpack.c.l.b16 %v1560
  %v1577 = vunpack.c.l.b16 %v1561
  %v1578 = vunpack.c.l.b16 %v1562
  %v1579 = vunpack.c.l.b16 %v1563
  %v1580 = vunpack.c.l.b16 %v1564
  %v1581 = vunpack.c.l.b16 %v1565
  %v1582 = vpack.c.b16 %v1575, %v1574
  %v1583 = vpack.c.b16 %v1577, %v1576
  %v1584 = vpack.c.b16 %v1579, %v1578
  %v1585 = vpack.c.b16 %v1581, %v1580
  %v1591 = vsel %vm1135, %v1557, 0
  %1593 = vmatpush.bf16.msra.mxu0 0
  %1594 = vmatpush.bf16.msra.mxu0 0
  %1595 = vmatpush.bf16.msra.mxu0 0
  %1596 = vmatpush.bf16.msra.mxu0 0
  %1597 = vmatpush.bf16.msra.mxu0 %v1585
  %1598 = vmatpush.bf16.msra.mxu0 %v1584
  %1599 = vmatpush.bf16.msra.mxu0 %v1583
  %1600 = vmatpush.bf16.msra.mxu0 %v1582
  %1601 = vmatmul.bf16.gmra.mxu0 %v1591
  %v1602 = vpop.f32.mrf.mxu0
  %v1603 = vadd.f32 0.0, %v1602
  %v1604 = vpop.f32.mrf.mxu0
  %1605 = vdwg.mxu0
  %v1607 = vperm.slane %v1102, 0
  %v1609 = vadd.f32 %v1607, %v1603
  %v1610 = vmax.f32 %v1609, 0.0
  %v1611 = vpack.c.bf16 %v1610, %v1610
  %v1612 = vld [vmem:[%s7] sm:$0xf]
  %v1613 = vld [vmem:[%s7 + $0x4] sm:$0xf]
  %v1614 = vld [vmem:[%s7 + $0x8] sm:$0xf]
  %v1615 = vld [vmem:[%s7 + $0xc] sm:$0xf]
  %v1616 = vld [vmem:[%s7 + $0x10] sm:$0xf]
  %v1617 = vld [vmem:[%s7 + $0x14] sm:$0xf]
  %v1618 = vld [vmem:[%s7 + $0x18] sm:$0xf]
  %v1619 = vld [vmem:[%s7 + $0x1c] sm:$0xf]
  %v1620 = vld [vmem:[%s7 + $0x20] sm:$0xf]
  %v1621 = vld [vmem:[%s7 + $0x24] sm:$0xf]
  %v1622 = vld [vmem:[%s7 + $0x28] sm:$0xf]
  %v1623 = vld [vmem:[%s7 + $0x2c] sm:$0xf]
  %v1624 = vld [vmem:[%s7 + $0x30] sm:$0x3]
  %v1625 = vld [vmem:[%s8] sm:$0x1]
  %v1627 = vperm.slane %v1625, 0
  %v1642 = vunpack.c.l.b16 %v1612
  %v1643 = vunpack.c.l.b16 %v1613
  %v1644 = vunpack.c.l.b16 %v1614
  %v1645 = vunpack.c.l.b16 %v1615
  %v1646 = vunpack.c.l.b16 %v1616
  %v1647 = vunpack.c.l.b16 %v1617
  %v1648 = vunpack.c.l.b16 %v1618
  %v1649 = vunpack.c.l.b16 %v1619
  %v1650 = vunpack.c.l.b16 %v1620
  %v1651 = vunpack.c.l.b16 %v1621
  %v1652 = vunpack.c.l.b16 %v1622
  %v1653 = vunpack.c.l.b16 %v1623
  %v1654 = vunpack.c.l.b16 %v1624
  %v1655 = vpack.c.b16 %v1643, %v1642
  %v1656 = vpack.c.b16 %v1645, %v1644
  %v1657 = vpack.c.b16 %v1647, %v1646
  %v1658 = vpack.c.b16 %v1649, %v1648
  %v1659 = vpack.c.b16 %v1651, %v1650
  %v1660 = vpack.c.b16 %v1653, %v1652
  %v1661 = vpack.c.b16 %v1654, %v1654
  %vm1668 = vcmask 818176
  %v1670 = vsel %vm1668, %v1611, 0
  %vm1672 = vcmask 1041408
  %v1674 = vsel %vm1672, %v1661, 0
  %1676 = vmatpush.bf16.msra.mxu0 0
  %1677 = vmatpush.bf16.msra.mxu0 %v1674
  %1678 = vmatpush.bf16.msra.mxu0 %v1660
  %1679 = vmatpush.bf16.msra.mxu0 %v1659
  %1680 = vmatpush.bf16.msra.mxu0 %v1658
  %1681 = vmatpush.bf16.msra.mxu0 %v1657
  %1682 = vmatpush.bf16.msra.mxu0 %v1656
  %1683 = vmatpush.bf16.msra.mxu0 %v1655
  %1684 = vmatmul.bf16.gmra.mxu0 %v1670
  %v1685 = vpop.f32.mrf.mxu0
  %v1686 = vadd.f32 %v1627, %v1685
  %v1687 = vpop.f32.mrf.mxu0
  %1688 = vdwg.mxu0
  %v1689 = vmax.f32 %v1686, 0.0
  %v1690 = vpack.c.bf16 %v1689, %v1689
  %v1691 = vld [vmem:[%s9] sm:$0xf]
  %v1692 = vld [vmem:[%s9 + $0x4] sm:$0xf]
  %v1693 = vld [vmem:[%s9 + $0x8] sm:$0xf]
  %v1694 = vld [vmem:[%s9 + $0xc] sm:$0xf]
  %v1695 = vld [vmem:[%s9 + $0x10] sm:$0xf]
  %v1696 = vld [vmem:[%s9 + $0x14] sm:$0xf]
  %v1697 = vld [vmem:[%s9 + $0x18] sm:$0x1]
  %v1698 = vld [vmem:[%s10] sm:$0x1]
  %v1700 = vperm.slane %v1698, 0
  %v1709 = vunpack.c.l.b16 %v1691
  %v1710 = vunpack.c.l.b16 %v1692
  %v1711 = vunpack.c.l.b16 %v1693
  %v1712 = vunpack.c.l.b16 %v1694
  %v1713 = vunpack.c.l.b16 %v1695
  %v1714 = vunpack.c.l.b16 %v1696
  %v1715 = vunpack.c.l.b16 %v1697
  %v1716 = vpack.c.b16 %v1710, %v1709
  %v1717 = vpack.c.b16 %v1712, %v1711
  %v1718 = vpack.c.b16 %v1714, %v1713
  %v1719 = vpack.c.b16 %v1715, %v1715
  %vm1723 = vcmask 408576
  %v1725 = vsel %vm1723, %v1690, 0
  %vm1727 = vcmask 1040384
  %v1729 = vsel %vm1727, %v1719, 0
  %1731 = vmatpush.bf16.msra.mxu0 0
  %1732 = vmatpush.bf16.msra.mxu0 0
  %1733 = vmatpush.bf16.msra.mxu0 0
  %1734 = vmatpush.bf16.msra.mxu0 0
  %1735 = vmatpush.bf16.msra.mxu0 %v1729
  %1736 = vmatpush.bf16.msra.mxu0 %v1718
  %1737 = vmatpush.bf16.msra.mxu0 %v1717
  %1738 = vmatpush.bf16.msra.mxu0 %v1716
  %1739 = vmatmul.bf16.gmra.mxu0 %v1725
  %v1740 = vpop.f32.mrf.mxu0
  %v1741 = vadd.f32 %v1700, %v1740
  %v1742 = vpop.f32.mrf.mxu0
  %1743 = vdwg.mxu0
  %v1744 = vmax.f32 %v1741, 0.0
  %v1745 = vpack.c.bf16 %v1744, %v1744
  %v1746 = vld [vmem:[%s11] sm:$0xf]
  %v1747 = vld [vmem:[%s11 + $0x4] sm:$0x1]
  %v1748 = vld [vmem:[#allocation2] sm:$0x1]
  %v1750 = vperm.slane %v1748, 0
  %v1754 = vunpack.c.l.b16 %v1746
  %v1755 = vunpack.c.l.b16 %v1747
  %v1756 = vpack.c.b16 %v1755, %v1754
  %vm1757 = vcmask 80896
  %v1759 = vsel %vm1757, %v1745, 0
  %vm1761 = vcmask 1044480
  %v1763 = vsel %vm1761, %v1756, 0
  %1765 = vmatpush.bf16.msra.mxu0 0
  %1766 = vmatpush.bf16.msra.mxu0 0
  %1767 = vmatpush.bf16.msra.mxu0 0
  %1768 = vmatpush.bf16.msra.mxu0 0
  %1769 = vmatpush.bf16.msra.mxu0 0
  %1770 = vmatpush.bf16.msra.mxu0 0
  %1771 = vmatpush.bf16.msra.mxu0 0
  %1772 = vmatpush.bf16.msra.mxu0 %v1763
  %1773 = vmatmul.bf16.gmra.mxu0 %v1759
  %v1774 = vpop.f32.mrf.mxu0
  %v1775 = vadd.f32 %v1750, %v1774
  %v1776 = vpop.f32.mrf.mxu0
  %1777 = vdwg.mxu0
  %v1778 = vtanh.pop %v1775
  %vm1779 = vcmask 1024
  %1780 = vst.msk [vmem:[%s13] sm:$0x3] %vm1779, %v1778
  // Predicated region
  $region54: #{dave2v1_forward.7} parent=0 // pred_check
    _
  $region55: #{dave2v1_forward.7} parent=0 // pred_check_branch
    %1782 = sbr.rel (0) target = $region57
  $region56: #{dave2v1_forward.7} parent=0 // pred_region
    _
  $region57: #{dave2v1_forward.7} parent=0 // pred_fallthru
    _
  // Predicated region
  $region58: #{dave2v1_forward.7} parent=0 // pred_check
    _
  $region59: #{dave2v1_forward.7} parent=0 // pred_check_branch
    %1784 = sbr.rel (0) target = $region61
  $region60: #{dave2v1_forward.7} parent=0 // pred_region
    _
  $region61: #{dave2v1_forward.7} parent=0 // pred_fallthru
    _

</llo_original>
